<compile_context>
chip_gen: v7x
topology: tpu7x:2x2x1
jax: 0.10.0
libtpu: 0.0.40
codegen_flags: <defaults>
</compile_context>

<pallas_src>
import functools

import jax
import jax.numpy as jnp
from jax import lax
from jax.experimental import pallas as pl
from jax.experimental.pallas import tpu as pltpu


def _round_up(x, m):
    return ((x + m - 1) // m) * m


def _ppeg_kernel(x_ref, w_ref, b_ref, o_ref, xpad_ref, *, H, W, strip):
    # x_ref:    (H, W, Ct)        unpadded feature tile (native dtype)
    # w_ref:    (7, 7, Ct)        combined depthwise weight (7x7+5x5+3x3+id), f32
    # b_ref:    (1, 1, Ct)        combined bias (b7 + b5 + b3), f32
    # o_ref:    (H, W, Ct)
    # xpad_ref: (H+6, Wp, Ct)     f32 scratch; interior at (row 3, col 8)
    Hp, Wp, Cb = xpad_ref.shape
    f32 = jnp.float32

    # ---- zero ONLY the thin halo bands (interior is fully overwritten) ----
    xpad_ref[0:3, :, :] = jnp.zeros((3, Wp, Cb), f32)                # top rows
    xpad_ref[H + 3:H + 6, :, :] = jnp.zeros((3, Wp, Cb), f32)        # bottom rows
    xpad_ref[3:3 + H, 0:8, :] = jnp.zeros((H, 8, Cb), f32)           # left cols (aligned)
    xpad_ref[3:3 + H, 8 + W:16 + W, :] = jnp.zeros((H, 8, Cb), f32)  # right cols

    # ---- interior at sublane offset 8 (aligned store); cast to f32 once ---
    xpad_ref[3:3 + H, 8:8 + W, :] = x_ref[...].astype(f32)

    bias = b_ref[...]                                   # (1, 1, Cb), already f32

    # ---- strip-blocked 49-tap accumulation, in registers per strip --------
    # output(y, x, c) = bias(c) + sum_{dy,dx} w(dy,dx,c) * xpad(y+dy, x+dx+5, c)
    for h0 in range(0, H, strip):
        hs = min(strip, H - h0)
        acc = jnp.broadcast_to(bias, (hs, W, Cb))       # seed with bias
        for dx in range(7):
            # one sublane-shifted slab per dx per strip; dy taps below are
            # free leading-dim slices of this value
            col = xpad_ref[h0:h0 + hs + 6, 5 + dx:5 + dx + W, :]
            for dy in range(7):
                acc = acc + col[dy:dy + hs] * w_ref[dy, dx, :]
        o_ref[h0:h0 + hs, :, :] = acc.astype(o_ref.dtype)


def ppeg_conv_pallas(feat, w_comb, bias, *, c_block=128):
    """Depthwise 7x7 'same' conv with the combined (identity-folded) weight.

    feat:   (B, H, W, Cp)  with Cp % c_block == 0, c_block a multiple of 128
    w_comb: (7, 7, Cp)     float32
    bias:   (1, 1, Cp)     float32
    returns (B, H, W, Cp)
    """
    B, H, W, Cp = feat.shape
    assert Cp % c_block == 0 and c_block % 128 == 0
    n_c = Cp // c_block

    # Scratch width: interior at col 8 (sublane aligned), 3-wide zero halo on
    # each side lives inside [5,8) and [8+W,16+W).
    Wp = _round_up(W, 8) + 16

    # Strip height so the f32 accumulator is ~<=16 vregs (ceil(W/8) per row).
    wv = -(-W // 8)
    strip = max(1, min(H, max(1, 16 // wv)))

    itemsize = jnp.dtype(feat.dtype).itemsize
    vmem_bytes = (2 * H * W * c_block * itemsize          # input (double-buffered)
                  + 2 * H * W * c_block * itemsize        # output (double-buffered)
                  + 2 * (49 + 1) * c_block * 4            # weight + bias
                  + (H + 6) * Wp * c_block * 4)           # f32 scratch (single)
    vmem_limit = int(min(100 * 2 ** 20, max(32 * 2 ** 20, int(vmem_bytes * 1.5))))

    kernel = functools.partial(_ppeg_kernel, H=H, W=W, strip=strip)
    return pl.pallas_call(
        kernel,
        out_shape=jax.ShapeDtypeStruct((B, H, W, Cp), feat.dtype),
        grid_spec=pltpu.PrefetchScalarGridSpec(
            num_scalar_prefetch=0,
            grid=(B, n_c),
            in_specs=[
                pl.BlockSpec((None, H, W, c_block), lambda b, c: (b, 0, 0, c)),
                pl.BlockSpec((7, 7, c_block), lambda b, c: (0, 0, c)),
                pl.BlockSpec((1, 1, c_block), lambda b, c: (0, 0, c)),
            ],
            out_specs=pl.BlockSpec((None, H, W, c_block),
                                   lambda b, c: (b, 0, 0, c)),
            scratch_shapes=[pltpu.VMEM((H + 6, Wp, c_block), jnp.float32)],
        ),
        compiler_params=pltpu.CompilerParams(
            dimension_semantics=("parallel", "parallel"),
            vmem_limit_bytes=vmem_limit),
    )(feat, w_comb, bias)


def ppeg_forward(x, H, W, params, *, c_block=128):
    """PPEG.forward semantics.

    x: (B, 1 + H*W, C)  (PyTorch token layout: cls token first)
    returns (B, 1 + H*W, C)
    """
    B, N, C = x.shape
    assert N == 1 + H * W
    cls_token = x[:, :1, :]                       # (B, 1, C)
    feat = x[:, 1:, :].reshape(B, H, W, C)        # NHWC view of the NCHW transpose

    # Fold the three depthwise kernels + the residual into one 7x7 weight.
    # (weights stored as (kh, kw, C); a PyTorch checkpoint (C,1,kh,kw) would
    #  need a transpose first)
    w_comb = params["w7"].astype(jnp.float32)
    w_comb = w_comb.at[1:6, 1:6, :].add(params["w5"].astype(jnp.float32))
    w_comb = w_comb.at[2:5, 2:5, :].add(params["w3"].astype(jnp.float32))
    w_comb = w_comb.at[3, 3, :].add(1.0)                      # identity / residual
    bias = (params["b7"] + params["b5"] + params["b3"]).astype(jnp.float32)

    # Lane-dense channel padding (last dim -> multiple of 128).
    Cp = ((C + c_block - 1) // c_block) * c_block
    if Cp != C:
        pad = Cp - C
        feat = jnp.pad(feat, ((0, 0), (0, 0), (0, 0), (0, pad)))
        w_comb = jnp.pad(w_comb, ((0, 0), (0, 0), (0, pad)))
        bias = jnp.pad(bias, ((0, pad),))
    bias = bias.reshape(1, 1, Cp)

    y = ppeg_conv_pallas(feat, w_comb, bias, c_block=c_block)  # (B, H, W, Cp)
    y = y[..., :C].reshape(B, H * W, C)
    return jnp.concatenate([cls_token, y], axis=1)


def init_ppeg_params(key, dim, dtype=jnp.float32):
    k1, k2, k3, k4, k5, k6 = jax.random.split(key, 6)
    w7 = (jax.random.normal(k1, (7, 7, dim), dtype) * 0.05).astype(dtype)
    w5 = (jax.random.normal(k2, (5, 5, dim), dtype) * 0.05).astype(dtype)
    w3 = (jax.random.normal(k3, (3, 3, dim), dtype) * 0.05).astype(dtype)
    b7 = (jax.random.normal(k4, (dim,), dtype) * 0.05).astype(dtype)
    b5 = (jax.random.normal(k5, (dim,), dtype) * 0.05).astype(dtype)
    b3 = (jax.random.normal(k6, (dim,), dtype) * 0.05).astype(dtype)
    return {"w7": w7, "w5": w5, "w3": w3, "b7": b7, "b5": b5, "b3": b3}


def _reference_forward(x, H, W, params):
    """Pure-JAX reference using lax.conv_general_dilated (separate depthwise convs)."""
    B, N, C = x.shape
    cls_token = x[:, :1, :]
    feat = x[:, 1:, :].reshape(B, H, W, C)
    dn = ("NHWC", "HWIO", "NHWC")

    def dwconv(inp, w, b, pad):
        k = w.reshape(w.shape[0], w.shape[1], 1, C)  # HWIO, I=1, groups=C
        out = lax.conv_general_dilated(inp, k, (1, 1), [(pad, pad), (pad, pad)],
                                       dimension_numbers=dn,
                                       feature_group_count=C)
        return out + b

    y = (dwconv(feat, params["w7"], params["b7"], 3) + feat
         + dwconv(feat, params["w5"], params["b5"], 2)
         + dwconv(feat, params["w3"], params["b3"], 1))
    return jnp.concatenate([cls_token, y.reshape(B, H * W, C)], axis=1)


if __name__ == "__main__":
    key = jax.random.PRNGKey(0)

    # Case 1: small channel count (exercises channel padding to 128 lanes).
    B, C, H, W = 2, 8, 16, 16
    N = 1 + H * W
    kx, kp, key = jax.random.split(key, 3)
    x = jax.random.normal(kx, (B, N, C), jnp.float32)
    params = init_ppeg_params(kp, C)
    out = jax.block_until_ready(ppeg_forward(x, H, W, params))
    assert out.shape == (B, N, C), out.shape
    ref = jax.block_until_ready(_reference_forward(x, H, W, params))
    assert jnp.allclose(out, ref, atol=1e-4, rtol=1e-4), \
        float(jnp.max(jnp.abs(out - ref)))

    # Case 2: C multiple of 128 (exercises the channel grid axis, nC = 2).
    B2, C2, H2, W2 = 1, 256, 8, 8
    N2 = 1 + H2 * W2
    kx2, kp2 = jax.random.split(key)
    x2 = jax.random.normal(kx2, (B2, N2, C2), jnp.float32)
    params2 = init_ppeg_params(kp2, C2)
    out2 = jax.block_until_ready(ppeg_forward(x2, H2, W2, params2))
    ref2 = jax.block_until_ready(_reference_forward(x2, H2, W2, params2))
    assert jnp.allclose(out2, ref2, atol=1e-4, rtol=1e-4), \
        float(jnp.max(jnp.abs(out2 - ref2)))

    print("KERNEL_OK")
</pallas_src>

<mosaic_0001>
module attributes {stable_mosaic.version = 11 : i64} {
  func.func @_ppeg_kernel(%arg0: i32, %arg1: i32, %arg2: memref<1x16x16x128xf32, #tpu.memory_space<vmem>>, %arg3: memref<7x7x128xf32, #tpu.memory_space<vmem>>, %arg4: memref<1x1x128xf32, #tpu.memory_space<vmem>>, %arg5: memref<1x16x16x128xf32, #tpu.memory_space<vmem>>, %arg6: memref<22x32x128xf32, #tpu.memory_space<vmem>>) attributes {dimension_semantics = [#tpu.dimension_semantics<parallel>, #tpu.dimension_semantics<parallel>], iteration_bounds = array<i64: 2, 1>, scalar_prefetch = 0 : i64, scratch_operands = 1 : i64, tpu.core_type = #tpu.core_type<tc>, window_params = [{transform_indices = @transform_0, window_bounds = array<i64: 1, 16, 16, 128>}, {transform_indices = @transform_1, window_bounds = array<i64: 7, 7, 128>}, {transform_indices = @transform_2, window_bounds = array<i64: 1, 1, 128>}, {transform_indices = @transform_3, window_bounds = array<i64: 1, 16, 16, 128>}]} {
    %cst = arith.constant 0.000000e+00 : f32
    %0 = vector.broadcast %cst : f32 to vector<3x32x128xf32>
    %c0 = arith.constant 0 : index
    %c0_0 = arith.constant 0 : index
    %c0_1 = arith.constant 0 : index
    %1 = vector.load %arg6[%c0, %c0_0, %c0_1] : memref<22x32x128xf32, #tpu.memory_space<vmem>>, vector<3x32x128xf32>
    tpu.vector_store %arg6[%c0, %c0_0, %c0_1], %0 {strides = array<i32>} : memref<22x32x128xf32, #tpu.memory_space<vmem>>, vector<3x32x128xf32>,
    %cst_2 = arith.constant 0.000000e+00 : f32
    %2 = vector.broadcast %cst_2 : f32 to vector<3x32x128xf32>
    %c19 = arith.constant 19 : index
    %c0_3 = arith.constant 0 : index
    %c0_4 = arith.constant 0 : index
    %3 = vector.load %arg6[%c19, %c0_3, %c0_4] : memref<22x32x128xf32, #tpu.memory_space<vmem>>, vector<3x32x128xf32>
    tpu.vector_store %arg6[%c19, %c0_3, %c0_4], %2 {strides = array<i32>} : memref<22x32x128xf32, #tpu.memory_space<vmem>>, vector<3x32x128xf32>,
    %cst_5 = arith.constant 0.000000e+00 : f32
    %4 = vector.broadcast %cst_5 : f32 to vector<16x8x128xf32>
    %c3 = arith.constant 3 : index
    %c0_6 = arith.constant 0 : index
    %c0_7 = arith.constant 0 : index
    %5 = vector.load %arg6[%c3, %c0_6, %c0_7] : memref<22x32x128xf32, #tpu.memory_space<vmem>>, vector<16x8x128xf32>
    tpu.vector_store %arg6[%c3, %c0_6, %c0_7], %4 {strides = array<i32>} : memref<22x32x128xf32, #tpu.memory_space<vmem>>, vector<16x8x128xf32>,
    %cst_8 = arith.constant 0.000000e+00 : f32
    %6 = vector.broadcast %cst_8 : f32 to vector<16x8x128xf32>
    %c3_9 = arith.constant 3 : index
    %c24 = arith.constant 24 : index
    %c0_10 = arith.constant 0 : index
    %7 = vector.load %arg6[%c3_9, %c24, %c0_10] : memref<22x32x128xf32, #tpu.memory_space<vmem>>, vector<16x8x128xf32>
    tpu.vector_store %arg6[%c3_9, %c24, %c0_10], %6 {strides = array<i32>} : memref<22x32x128xf32, #tpu.memory_space<vmem>>, vector<16x8x128xf32>,
    %c0_11 = arith.constant 0 : index
    %c0_12 = arith.constant 0 : index
    %c0_13 = arith.constant 0 : index
    %c0_14 = arith.constant 0 : index
    %8 = vector.load %arg2[%c0_11, %c0_12, %c0_13, %c0_14] : memref<1x16x16x128xf32, #tpu.memory_space<vmem>>, vector<1x16x16x128xf32>
    %9 = vector.shape_cast %8 : vector<1x16x16x128xf32> to vector<16x16x128xf32>
    %c3_15 = arith.constant 3 : index
    %c8 = arith.constant 8 : index
    %c0_16 = arith.constant 0 : index
    %10 = vector.load %arg6[%c3_15, %c8, %c0_16] : memref<22x32x128xf32, #tpu.memory_space<vmem>>, vector<16x16x128xf32>
    tpu.vector_store %arg6[%c3_15, %c8, %c0_16], %9 {strides = array<i32>} : memref<22x32x128xf32, #tpu.memory_space<vmem>>, vector<16x16x128xf32>,
    %c0_17 = arith.constant 0 : index
    %c0_18 = arith.constant 0 : index
    %c0_19 = arith.constant 0 : index
    %11 = vector.load %arg4[%c0_17, %c0_18, %c0_19] : memref<1x1x128xf32, #tpu.memory_space<vmem>>, vector<1x1x128xf32>
    %12 = vector.shape_cast %11 : vector<1x1x128xf32> to vector<1x1x128xf32>
    %13 = vector.broadcast %12 : vector<1x1x128xf32> to vector<8x16x128xf32>
    %c0_20 = arith.constant 0 : index
    %c5 = arith.constant 5 : index
    %c0_21 = arith.constant 0 : index
    %14 = vector.load %arg6[%c0_20, %c5, %c0_21] : memref<22x32x128xf32, #tpu.memory_space<vmem>>, vector<14x16x128xf32>
    %15 = vector.extract_strided_slice %14 {offsets = [0, 0, 0], sizes = [8, 16, 128], strides = [1, 1, 1]} : vector<14x16x128xf32> to vector<8x16x128xf32>
    %c0_22 = arith.constant 0 : index
    %c0_23 = arith.constant 0 : index
    %c0_24 = arith.constant 0 : index
    %16 = vector.load %arg3[%c0_22, %c0_23, %c0_24] : memref<7x7x128xf32, #tpu.memory_space<vmem>>, vector<1x1x128xf32>
    %17 = vector.shape_cast %16 : vector<1x1x128xf32> to vector<128xf32>
    %18 = vector.shape_cast %17 : vector<128xf32> to vector<1x1x128xf32>
    %19 = vector.broadcast %18 : vector<1x1x128xf32> to vector<8x16x128xf32>
    %20 = arith.mulf %15, %19 : vector<8x16x128xf32>
    %21 = arith.addf %13, %20 : vector<8x16x128xf32>
    %22 = vector.extract_strided_slice %14 {offsets = [1, 0, 0], sizes = [8, 16, 128], strides = [1, 1, 1]} : vector<14x16x128xf32> to vector<8x16x128xf32>
    %c1 = arith.constant 1 : index
    %c0_25 = arith.constant 0 : index
    %c0_26 = arith.constant 0 : index
    %23 = vector.load %arg3[%c1, %c0_25, %c0_26] : memref<7x7x128xf32, #tpu.memory_space<vmem>>, vector<1x1x128xf32>
    %24 = vector.shape_cast %23 : vector<1x1x128xf32> to vector<128xf32>
    %25 = vector.shape_cast %24 : vector<128xf32> to vector<1x1x128xf32>
    %26 = vector.broadcast %25 : vector<1x1x128xf32> to vector<8x16x128xf32>
    %27 = arith.mulf %22, %26 : vector<8x16x128xf32>
    %28 = arith.addf %21, %27 : vector<8x16x128xf32>
    %29 = vector.extract_strided_slice %14 {offsets = [2, 0, 0], sizes = [8, 16, 128], strides = [1, 1, 1]} : vector<14x16x128xf32> to vector<8x16x128xf32>
    %c2 = arith.constant 2 : index
    %c0_27 = arith.constant 0 : index
    %c0_28 = arith.constant 0 : index
    %30 = vector.load %arg3[%c2, %c0_27, %c0_28] : memref<7x7x128xf32, #tpu.memory_space<vmem>>, vector<1x1x128xf32>
    %31 = vector.shape_cast %30 : vector<1x1x128xf32> to vector<128xf32>
    %32 = vector.shape_cast %31 : vector<128xf32> to vector<1x1x128xf32>
    %33 = vector.broadcast %32 : vector<1x1x128xf32> to vector<8x16x128xf32>
    %34 = arith.mulf %29, %33 : vector<8x16x128xf32>
    %35 = arith.addf %28, %34 : vector<8x16x128xf32>
    %36 = vector.extract_strided_slice %14 {offsets = [3, 0, 0], sizes = [8, 16, 128], strides = [1, 1, 1]} : vector<14x16x128xf32> to vector<8x16x128xf32>
    %c3_29 = arith.constant 3 : index
    %c0_30 = arith.constant 0 : index
    %c0_31 = arith.constant 0 : index
    %37 = vector.load %arg3[%c3_29, %c0_30, %c0_31] : memref<7x7x128xf32, #tpu.memory_space<vmem>>, vector<1x1x128xf32>
    %38 = vector.shape_cast %37 : vector<1x1x128xf32> to vector<128xf32>
    %39 = vector.shape_cast %38 : vector<128xf32> to vector<1x1x128xf32>
    %40 = vector.broadcast %39 : vector<1x1x128xf32> to vector<8x16x128xf32>
    %41 = arith.mulf %36, %40 : vector<8x16x128xf32>
    %42 = arith.addf %35, %41 : vector<8x16x128xf32>
    %43 = vector.extract_strided_slice %14 {offsets = [4, 0, 0], sizes = [8, 16, 128], strides = [1, 1, 1]} : vector<14x16x128xf32> to vector<8x16x128xf32>
    %c4 = arith.constant 4 : index
    %c0_32 = arith.constant 0 : index
    %c0_33 = arith.constant 0 : index
    %44 = vector.load %arg3[%c4, %c0_32, %c0_33] : memref<7x7x128xf32, #tpu.memory_space<vmem>>, vector<1x1x128xf32>
    %45 = vector.shape_cast %44 : vector<1x1x128xf32> to vector<128xf32>
    %46 = vector.shape_cast %45 : vector<128xf32> to vector<1x1x128xf32>
    %47 = vector.broadcast %46 : vector<1x1x128xf32> to vector<8x16x128xf32>
    %48 = arith.mulf %43, %47 : vector<8x16x128xf32>
    %49 = arith.addf %42, %48 : vector<8x16x128xf32>
    %50 = vector.extract_strided_slice %14 {offsets = [5, 0, 0], sizes = [8, 16, 128], strides = [1, 1, 1]} : vector<14x16x128xf32> to vector<8x16x128xf32>
    %c5_34 = arith.constant 5 : index
    %c0_35 = arith.constant 0 : index
    %c0_36 = arith.constant 0 : index
    %51 = vector.load %arg3[%c5_34, %c0_35, %c0_36] : memref<7x7x128xf32, #tpu.memory_space<vmem>>, vector<1x1x128xf32>
    %52 = vector.shape_cast %51 : vector<1x1x128xf32> to vector<128xf32>
    %53 = vector.shape_cast %52 : vector<128xf32> to vector<1x1x128xf32>
    %54 = vector.broadcast %53 : vector<1x1x128xf32> to vector<8x16x128xf32>
    %55 = arith.mulf %50, %54 : vector<8x16x128xf32>
    %56 = arith.addf %49, %55 : vector<8x16x128xf32>
    %57 = vector.extract_strided_slice %14 {offsets = [6, 0, 0], sizes = [8, 16, 128], strides = [1, 1, 1]} : vector<14x16x128xf32> to vector<8x16x128xf32>
    %c6 = arith.constant 6 : index
    %c0_37 = arith.constant 0 : index
    %c0_38 = arith.constant 0 : index
    %58 = vector.load %arg3[%c6, %c0_37, %c0_38] : memref<7x7x128xf32, #tpu.memory_space<vmem>>, vector<1x1x128xf32>
    %59 = vector.shape_cast %58 : vector<1x1x128xf32> to vector<128xf32>
    %60 = vector.shape_cast %59 : vector<128xf32> to vector<1x1x128xf32>
    %61 = vector.broadcast %60 : vector<1x1x128xf32> to vector<8x16x128xf32>
    %62 = arith.mulf %57, %61 : vector<8x16x128xf32>
    %63 = arith.addf %56, %62 : vector<8x16x128xf32>
    %c0_39 = arith.constant 0 : index
    %c6_40 = arith.constant 6 : index
    %c0_41 = arith.constant 0 : index
    %64 = vector.load %arg6[%c0_39, %c6_40, %c0_41] : memref<22x32x128xf32, #tpu.memory_space<vmem>>, vector<14x16x128xf32>
    %65 = vector.extract_strided_slice %64 {offsets = [0, 0, 0], sizes = [8, 16, 128], strides = [1, 1, 1]} : vector<14x16x128xf32> to vector<8x16x128xf32>
    %c0_42 = arith.constant 0 : index
    %c1_43 = arith.constant 1 : index
    %c0_44 = arith.constant 0 : index
    %66 = vector.load %arg3[%c0_42, %c1_43, %c0_44] : memref<7x7x128xf32, #tpu.memory_space<vmem>>, vector<1x1x128xf32>
    %67 = vector.shape_cast %66 : vector<1x1x128xf32> to vector<128xf32>
    %68 = vector.shape_cast %67 : vector<128xf32> to vector<1x1x128xf32>
    %69 = vector.broadcast %68 : vector<1x1x128xf32> to vector<8x16x128xf32>
    %70 = arith.mulf %65, %69 : vector<8x16x128xf32>
    %71 = arith.addf %63, %70 : vector<8x16x128xf32>
    %72 = vector.extract_strided_slice %64 {offsets = [1, 0, 0], sizes = [8, 16, 128], strides = [1, 1, 1]} : vector<14x16x128xf32> to vector<8x16x128xf32>
    %c1_45 = arith.constant 1 : index
    %c1_46 = arith.constant 1 : index
    %c0_47 = arith.constant 0 : index
    %73 = vector.load %arg3[%c1_45, %c1_46, %c0_47] : memref<7x7x128xf32, #tpu.memory_space<vmem>>, vector<1x1x128xf32>
    %74 = vector.shape_cast %73 : vector<1x1x128xf32> to vector<128xf32>
    %75 = vector.shape_cast %74 : vector<128xf32> to vector<1x1x128xf32>
    %76 = vector.broadcast %75 : vector<1x1x128xf32> to vector<8x16x128xf32>
    %77 = arith.mulf %72, %76 : vector<8x16x128xf32>
    %78 = arith.addf %71, %77 : vector<8x16x128xf32>
    %79 = vector.extract_strided_slice %64 {offsets = [2, 0, 0], sizes = [8, 16, 128], strides = [1, 1, 1]} : vector<14x16x128xf32> to vector<8x16x128xf32>
    %c2_48 = arith.constant 2 : index
    %c1_49 = arith.constant 1 : index
    %c0_50 = arith.constant 0 : index
    %80 = vector.load %arg3[%c2_48, %c1_49, %c0_50] : memref<7x7x128xf32, #tpu.memory_space<vmem>>, vector<1x1x128xf32>
    %81 = vector.shape_cast %80 : vector<1x1x128xf32> to vector<128xf32>
    %82 = vector.shape_cast %81 : vector<128xf32> to vector<1x1x128xf32>
    %83 = vector.broadcast %82 : vector<1x1x128xf32> to vector<8x16x128xf32>
    %84 = arith.mulf %79, %83 : vector<8x16x128xf32>
    %85 = arith.addf %78, %84 : vector<8x16x128xf32>
    %86 = vector.extract_strided_slice %64 {offsets = [3, 0, 0], sizes = [8, 16, 128], strides = [1, 1, 1]} : vector<14x16x128xf32> to vector<8x16x128xf32>
    %c3_51 = arith.constant 3 : index
    %c1_52 = arith.constant 1 : index
    %c0_53 = arith.constant 0 : index
    %87 = vector.load %arg3[%c3_51, %c1_52, %c0_53] : memref<7x7x128xf32, #tpu.memory_space<vmem>>, vector<1x1x128xf32>
    %88 = vector.shape_cast %87 : vector<1x1x128xf32> to vector<128xf32>
    %89 = vector.shape_cast %88 : vector<128xf32> to vector<1x1x128xf32>
    %90 = vector.broadcast %89 : vector<1x1x128xf32> to vector<8x16x128xf32>
    %91 = arith.mulf %86, %90 : vector<8x16x128xf32>
    %92 = arith.addf %85, %91 : vector<8x16x128xf32>
    %93 = vector.extract_strided_slice %64 {offsets = [4, 0, 0], sizes = [8, 16, 128], strides = [1, 1, 1]} : vector<14x16x128xf32> to vector<8x16x128xf32>
    %c4_54 = arith.constant 4 : index
    %c1_55 = arith.constant 1 : index
    %c0_56 = arith.constant 0 : index
    %94 = vector.load %arg3[%c4_54, %c1_55, %c0_56] : memref<7x7x128xf32, #tpu.memory_space<vmem>>, vector<1x1x128xf32>
    %95 = vector.shape_cast %94 : vector<1x1x128xf32> to vector<128xf32>
    %96 = vector.shape_cast %95 : vector<128xf32> to vector<1x1x128xf32>
    %97 = vector.broadcast %96 : vector<1x1x128xf32> to vector<8x16x128xf32>
    %98 = arith.mulf %93, %97 : vector<8x16x128xf32>
    %99 = arith.addf %92, %98 : vector<8x16x128xf32>
    %100 = vector.extract_strided_slice %64 {offsets = [5, 0, 0], sizes = [8, 16, 128], strides = [1, 1, 1]} : vector<14x16x128xf32> to vector<8x16x128xf32>
    %c5_57 = arith.constant 5 : index
    %c1_58 = arith.constant 1 : index
    %c0_59 = arith.constant 0 : index
    %101 = vector.load %arg3[%c5_57, %c1_58, %c0_59] : memref<7x7x128xf32, #tpu.memory_space<vmem>>, vector<1x1x128xf32>
    %102 = vector.shape_cast %101 : vector<1x1x128xf32> to vector<128xf32>
    %103 = vector.shape_cast %102 : vector<128xf32> to vector<1x1x128xf32>
    %104 = vector.broadcast %103 : vector<1x1x128xf32> to vector<8x16x128xf32>
    %105 = arith.mulf %100, %104 : vector<8x16x128xf32>
    %106 = arith.addf %99, %105 : vector<8x16x128xf32>
    %107 = vector.extract_strided_slice %64 {offsets = [6, 0, 0], sizes = [8, 16, 128], strides = [1, 1, 1]} : vector<14x16x128xf32> to vector<8x16x128xf32>
    %c6_60 = arith.constant 6 : index
    %c1_61 = arith.constant 1 : index
    %c0_62 = arith.constant 0 : index
    %108 = vector.load %arg3[%c6_60, %c1_61, %c0_62] : memref<7x7x128xf32, #tpu.memory_space<vmem>>, vector<1x1x128xf32>
    %109 = vector.shape_cast %108 : vector<1x1x128xf32> to vector<128xf32>
    %110 = vector.shape_cast %109 : vector<128xf32> to vector<1x1x128xf32>
    %111 = vector.broadcast %110 : vector<1x1x128xf32> to vector<8x16x128xf32>
    %112 = arith.mulf %107, %111 : vector<8x16x128xf32>
    %113 = arith.addf %106, %112 : vector<8x16x128xf32>
    %c0_63 = arith.constant 0 : index
    %c7 = arith.constant 7 : index
    %c0_64 = arith.constant 0 : index
    %114 = vector.load %arg6[%c0_63, %c7, %c0_64] : memref<22x32x128xf32, #tpu.memory_space<vmem>>, vector<14x16x128xf32>
    %115 = vector.extract_strided_slice %114 {offsets = [0, 0, 0], sizes = [8, 16, 128], strides = [1, 1, 1]} : vector<14x16x128xf32> to vector<8x16x128xf32>
    %c0_65 = arith.constant 0 : index
    %c2_66 = arith.constant 2 : index
    %c0_67 = arith.constant 0 : index
    %116 = vector.load %arg3[%c0_65, %c2_66, %c0_67] : memref<7x7x128xf32, #tpu.memory_space<vmem>>, vector<1x1x128xf32>
    %117 = vector.shape_cast %116 : vector<1x1x128xf32> to vector<128xf32>
    %118 = vector.shape_cast %117 : vector<128xf32> to vector<1x1x128xf32>
    %119 = vector.broadcast %118 : vector<1x1x128xf32> to vector<8x16x128xf32>
    %120 = arith.mulf %115, %119 : vector<8x16x128xf32>
    %121 = arith.addf %113, %120 : vector<8x16x128xf32>
    %122 = vector.extract_strided_slice %114 {offsets = [1, 0, 0], sizes = [8, 16, 128], strides = [1, 1, 1]} : vector<14x16x128xf32> to vector<8x16x128xf32>
    %c1_68 = arith.constant 1 : index
    %c2_69 = arith.constant 2 : index
    %c0_70 = arith.constant 0 : index
    %123 = vector.load %arg3[%c1_68, %c2_69, %c0_70] : memref<7x7x128xf32, #tpu.memory_space<vmem>>, vector<1x1x128xf32>
    %124 = vector.shape_cast %123 : vector<1x1x128xf32> to vector<128xf32>
    %125 = vector.shape_cast %124 : vector<128xf32> to vector<1x1x128xf32>
    %126 = vector.broadcast %125 : vector<1x1x128xf32> to vector<8x16x128xf32>
    %127 = arith.mulf %122, %126 : vector<8x16x128xf32>
    %128 = arith.addf %121, %127 : vector<8x16x128xf32>
    %129 = vector.extract_strided_slice %114 {offsets = [2, 0, 0], sizes = [8, 16, 128], strides = [1, 1, 1]} : vector<14x16x128xf32> to vector<8x16x128xf32>
    %c2_71 = arith.constant 2 : index
    %c2_72 = arith.constant 2 : index
    %c0_73 = arith.constant 0 : index
    %130 = vector.load %arg3[%c2_71, %c2_72, %c0_73] : memref<7x7x128xf32, #tpu.memory_space<vmem>>, vector<1x1x128xf32>
    %131 = vector.shape_cast %130 : vector<1x1x128xf32> to vector<128xf32>
    %132 = vector.shape_cast %131 : vector<128xf32> to vector<1x1x128xf32>
    %133 = vector.broadcast %132 : vector<1x1x128xf32> to vector<8x16x128xf32>
    %134 = arith.mulf %129, %133 : vector<8x16x128xf32>
    %135 = arith.addf %128, %134 : vector<8x16x128xf32>
    %136 = vector.extract_strided_slice %114 {offsets = [3, 0, 0], sizes = [8, 16, 128], strides = [1, 1, 1]} : vector<14x16x128xf32> to vector<8x16x128xf32>
    %c3_74 = arith.constant 3 : index
    %c2_75 = arith.constant 2 : index
    %c0_76 = arith.constant 0 : index
    %137 = vector.load %arg3[%c3_74, %c2_75, %c0_76] : memref<7x7x128xf32, #tpu.memory_space<vmem>>, vector<1x1x128xf32>
    %138 = vector.shape_cast %137 : vector<1x1x128xf32> to vector<128xf32>
    %139 = vector.shape_cast %138 : vector<128xf32> to vector<1x1x128xf32>
    %140 = vector.broadcast %139 : vector<1x1x128xf32> to vector<8x16x128xf32>
    %141 = arith.mulf %136, %140 : vector<8x16x128xf32>
    %142 = arith.addf %135, %141 : vector<8x16x128xf32>
    %143 = vector.extract_strided_slice %114 {offsets = [4, 0, 0], sizes = [8, 16, 128], strides = [1, 1, 1]} : vector<14x16x128xf32> to vector<8x16x128xf32>
    %c4_77 = arith.constant 4 : index
    %c2_78 = arith.constant 2 : index
    %c0_79 = arith.constant 0 : index
    %144 = vector.load %arg3[%c4_77, %c2_78, %c0_79] : memref<7x7x128xf32, #tpu.memory_space<vmem>>, vector<1x1x128xf32>
    %145 = vector.shape_cast %144 : vector<1x1x128xf32> to vector<128xf32>
    %146 = vector.shape_cast %145 : vector<128xf32> to vector<1x1x128xf32>
    %147 = vector.broadcast %146 : vector<1x1x128xf32> to vector<8x16x128xf32>
    %148 = arith.mulf %143, %147 : vector<8x16x128xf32>
    %149 = arith.addf %142, %148 : vector<8x16x128xf32>
    %150 = vector.extract_strided_slice %114 {offsets = [5, 0, 0], sizes = [8, 16, 128], strides = [1, 1, 1]} : vector<14x16x128xf32> to vector<8x16x128xf32>
    %c5_80 = arith.constant 5 : index
    %c2_81 = arith.constant 2 : index
    %c0_82 = arith.constant 0 : index
    %151 = vector.load %arg3[%c5_80, %c2_81, %c0_82] : memref<7x7x128xf32, #tpu.memory_space<vmem>>, vector<1x1x128xf32>
    %152 = vector.shape_cast %151 : vector<1x1x128xf32> to vector<128xf32>
    %153 = vector.shape_cast %152 : vector<128xf32> to vector<1x1x128xf32>
    %154 = vector.broadcast %153 : vector<1x1x128xf32> to vector<8x16x128xf32>
    %155 = arith.mulf %150, %154 : vector<8x16x128xf32>
    %156 = arith.addf %149, %155 : vector<8x16x128xf32>
    %157 = vector.extract_strided_slice %114 {offsets = [6, 0, 0], sizes = [8, 16, 128], strides = [1, 1, 1]} : vector<14x16x128xf32> to vector<8x16x128xf32>
    %c6_83 = arith.constant 6 : index
    %c2_84 = arith.constant 2 : index
    %c0_85 = arith.constant 0 : index
    %158 = vector.load %arg3[%c6_83, %c2_84, %c0_85] : memref<7x7x128xf32, #tpu.memory_space<vmem>>, vector<1x1x128xf32>
    %159 = vector.shape_cast %158 : vector<1x1x128xf32> to vector<128xf32>
    %160 = vector.shape_cast %159 : vector<128xf32> to vector<1x1x128xf32>
    %161 = vector.broadcast %160 : vector<1x1x128xf32> to vector<8x16x128xf32>
    %162 = arith.mulf %157, %161 : vector<8x16x128xf32>
    %163 = arith.addf %156, %162 : vector<8x16x128xf32>
    %c0_86 = arith.constant 0 : index
    %c8_87 = arith.constant 8 : index
    %c0_88 = arith.constant 0 : index
    %164 = vector.load %arg6[%c0_86, %c8_87, %c0_88] : memref<22x32x128xf32, #tpu.memory_space<vmem>>, vector<14x16x128xf32>
    %165 = vector.extract_strided_slice %164 {offsets = [0, 0, 0], sizes = [8, 16, 128], strides = [1, 1, 1]} : vector<14x16x128xf32> to vector<8x16x128xf32>
    %c0_89 = arith.constant 0 : index
    %c3_90 = arith.constant 3 : index
    %c0_91 = arith.constant 0 : index
    %166 = vector.load %arg3[%c0_89, %c3_90, %c0_91] : memref<7x7x128xf32, #tpu.memory_space<vmem>>, vector<1x1x128xf32>
    %167 = vector.shape_cast %166 : vector<1x1x128xf32> to vector<128xf32>
    %168 = vector.shape_cast %167 : vector<128xf32> to vector<1x1x128xf32>
    %169 = vector.broadcast %168 : vector<1x1x128xf32> to vector<8x16x128xf32>
    %170 = arith.mulf %165, %169 : vector<8x16x128xf32>
    %171 = arith.addf %163, %170 : vector<8x16x128xf32>
    %172 = vector.extract_strided_slice %164 {offsets = [1, 0, 0], sizes = [8, 16, 128], strides = [1, 1, 1]} : vector<14x16x128xf32> to vector<8x16x128xf32>
    %c1_92 = arith.constant 1 : index
    %c3_93 = arith.constant 3 : index
    %c0_94 = arith.constant 0 : index
    %173 = vector.load %arg3[%c1_92, %c3_93, %c0_94] : memref<7x7x128xf32, #tpu.memory_space<vmem>>, vector<1x1x128xf32>
    %174 = vector.shape_cast %173 : vector<1x1x128xf32> to vector<128xf32>
    %175 = vector.shape_cast %174 : vector<128xf32> to vector<1x1x128xf32>
    %176 = vector.broadcast %175 : vector<1x1x128xf32> to vector<8x16x128xf32>
    %177 = arith.mulf %172, %176 : vector<8x16x128xf32>
    %178 = arith.addf %171, %177 : vector<8x16x128xf32>
    %179 = vector.extract_strided_slice %164 {offsets = [2, 0, 0], sizes = [8, 16, 128], strides = [1, 1, 1]} : vector<14x16x128xf32> to vector<8x16x128xf32>
    %c2_95 = arith.constant 2 : index
    %c3_96 = arith.constant 3 : index
    %c0_97 = arith.constant 0 : index
    %180 = vector.load %arg3[%c2_95, %c3_96, %c0_97] : memref<7x7x128xf32, #tpu.memory_space<vmem>>, vector<1x1x128xf32>
    %181 = vector.shape_cast %180 : vector<1x1x128xf32> to vector<128xf32>
    %182 = vector.shape_cast %181 : vector<128xf32> to vector<1x1x128xf32>
    %183 = vector.broadcast %182 : vector<1x1x128xf32> to vector<8x16x128xf32>
    %184 = arith.mulf %179, %183 : vector<8x16x128xf32>
    %185 = arith.addf %178, %184 : vector<8x16x128xf32>
    %186 = vector.extract_strided_slice %164 {offsets = [3, 0, 0], sizes = [8, 16, 128], strides = [1, 1, 1]} : vector<14x16x128xf32> to vector<8x16x128xf32>
    %c3_98 = arith.constant 3 : index
    %c3_99 = arith.constant 3 : index
    %c0_100 = arith.constant 0 : index
    %187 = vector.load %arg3[%c3_98, %c3_99, %c0_100] : memref<7x7x128xf32, #tpu.memory_space<vmem>>, vector<1x1x128xf32>
    %188 = vector.shape_cast %187 : vector<1x1x128xf32> to vector<128xf32>
    %189 = vector.shape_cast %188 : vector<128xf32> to vector<1x1x128xf32>
    %190 = vector.broadcast %189 : vector<1x1x128xf32> to vector<8x16x128xf32>
    %191 = arith.mulf %186, %190 : vector<8x16x128xf32>
    %192 = arith.addf %185, %191 : vector<8x16x128xf32>
    %193 = vector.extract_strided_slice %164 {offsets = [4, 0, 0], sizes = [8, 16, 128], strides = [1, 1, 1]} : vector<14x16x128xf32> to vector<8x16x128xf32>
    %c4_101 = arith.constant 4 : index
    %c3_102 = arith.constant 3 : index
    %c0_103 = arith.constant 0 : index
    %194 = vector.load %arg3[%c4_101, %c3_102, %c0_103] : memref<7x7x128xf32, #tpu.memory_space<vmem>>, vector<1x1x128xf32>
    %195 = vector.shape_cast %194 : vector<1x1x128xf32> to vector<128xf32>
    %196 = vector.shape_cast %195 : vector<128xf32> to vector<1x1x128xf32>
    %197 = vector.broadcast %196 : vector<1x1x128xf32> to vector<8x16x128xf32>
    %198 = arith.mulf %193, %197 : vector<8x16x128xf32>
    %199 = arith.addf %192, %198 : vector<8x16x128xf32>
    %200 = vector.extract_strided_slice %164 {offsets = [5, 0, 0], sizes = [8, 16, 128], strides = [1, 1, 1]} : vector<14x16x128xf32> to vector<8x16x128xf32>
    %c5_104 = arith.constant 5 : index
    %c3_105 = arith.constant 3 : index
    %c0_106 = arith.constant 0 : index
    %201 = vector.load %arg3[%c5_104, %c3_105, %c0_106] : memref<7x7x128xf32, #tpu.memory_space<vmem>>, vector<1x1x128xf32>
    %202 = vector.shape_cast %201 : vector<1x1x128xf32> to vector<128xf32>
    %203 = vector.shape_cast %202 : vector<128xf32> to vector<1x1x128xf32>
    %204 = vector.broadcast %203 : vector<1x1x128xf32> to vector<8x16x128xf32>
    %205 = arith.mulf %200, %204 : vector<8x16x128xf32>
    %206 = arith.addf %199, %205 : vector<8x16x128xf32>
    %207 = vector.extract_strided_slice %164 {offsets = [6, 0, 0], sizes = [8, 16, 128], strides = [1, 1, 1]} : vector<14x16x128xf32> to vector<8x16x128xf32>
    %c6_107 = arith.constant 6 : index
    %c3_108 = arith.constant 3 : index
    %c0_109 = arith.constant 0 : index
    %208 = vector.load %arg3[%c6_107, %c3_108, %c0_109] : memref<7x7x128xf32, #tpu.memory_space<vmem>>, vector<1x1x128xf32>
    %209 = vector.shape_cast %208 : vector<1x1x128xf32> to vector<128xf32>
    %210 = vector.shape_cast %209 : vector<128xf32> to vector<1x1x128xf32>
    %211 = vector.broadcast %210 : vector<1x1x128xf32> to vector<8x16x128xf32>
    %212 = arith.mulf %207, %211 : vector<8x16x128xf32>
    %213 = arith.addf %206, %212 : vector<8x16x128xf32>
    %c0_110 = arith.constant 0 : index
    %c9 = arith.constant 9 : index
    %c0_111 = arith.constant 0 : index
    %214 = vector.load %arg6[%c0_110, %c9, %c0_111] : memref<22x32x128xf32, #tpu.memory_space<vmem>>, vector<14x16x128xf32>
    %215 = vector.extract_strided_slice %214 {offsets = [0, 0, 0], sizes = [8, 16, 128], strides = [1, 1, 1]} : vector<14x16x128xf32> to vector<8x16x128xf32>
    %c0_112 = arith.constant 0 : index
    %c4_113 = arith.constant 4 : index
    %c0_114 = arith.constant 0 : index
    %216 = vector.load %arg3[%c0_112, %c4_113, %c0_114] : memref<7x7x128xf32, #tpu.memory_space<vmem>>, vector<1x1x128xf32>
    %217 = vector.shape_cast %216 : vector<1x1x128xf32> to vector<128xf32>
    %218 = vector.shape_cast %217 : vector<128xf32> to vector<1x1x128xf32>
    %219 = vector.broadcast %218 : vector<1x1x128xf32> to vector<8x16x128xf32>
    %220 = arith.mulf %215, %219 : vector<8x16x128xf32>
    %221 = arith.addf %213, %220 : vector<8x16x128xf32>
    %222 = vector.extract_strided_slice %214 {offsets = [1, 0, 0], sizes = [8, 16, 128], strides = [1, 1, 1]} : vector<14x16x128xf32> to vector<8x16x128xf32>
    %c1_115 = arith.constant 1 : index
    %c4_116 = arith.constant 4 : index
    %c0_117 = arith.constant 0 : index
    %223 = vector.load %arg3[%c1_115, %c4_116, %c0_117] : memref<7x7x128xf32, #tpu.memory_space<vmem>>, vector<1x1x128xf32>
    %224 = vector.shape_cast %223 : vector<1x1x128xf32> to vector<128xf32>
    %225 = vector.shape_cast %224 : vector<128xf32> to vector<1x1x128xf32>
    %226 = vector.broadcast %225 : vector<1x1x128xf32> to vector<8x16x128xf32>
    %227 = arith.mulf %222, %226 : vector<8x16x128xf32>
    %228 = arith.addf %221, %227 : vector<8x16x128xf32>
    %229 = vector.extract_strided_slice %214 {offsets = [2, 0, 0], sizes = [8, 16, 128], strides = [1, 1, 1]} : vector<14x16x128xf32> to vector<8x16x128xf32>
    %c2_118 = arith.constant 2 : index
    %c4_119 = arith.constant 4 : index
    %c0_120 = arith.constant 0 : index
    %230 = vector.load %arg3[%c2_118, %c4_119, %c0_120] : memref<7x7x128xf32, #tpu.memory_space<vmem>>, vector<1x1x128xf32>
    %231 = vector.shape_cast %230 : vector<1x1x128xf32> to vector<128xf32>
    %232 = vector.shape_cast %231 : vector<128xf32> to vector<1x1x128xf32>
    %233 = vector.broadcast %232 : vector<1x1x128xf32> to vector<8x16x128xf32>
    %234 = arith.mulf %229, %233 : vector<8x16x128xf32>
    %235 = arith.addf %228, %234 : vector<8x16x128xf32>
    %236 = vector.extract_strided_slice %214 {offsets = [3, 0, 0], sizes = [8, 16, 128], strides = [1, 1, 1]} : vector<14x16x128xf32> to vector<8x16x128xf32>
    %c3_121 = arith.constant 3 : index
    %c4_122 = arith.constant 4 : index
    %c0_123 = arith.constant 0 : index
    %237 = vector.load %arg3[%c3_121, %c4_122, %c0_123] : memref<7x7x128xf32, #tpu.memory_space<vmem>>, vector<1x1x128xf32>
    %238 = vector.shape_cast %237 : vector<1x1x128xf32> to vector<128xf32>
    %239 = vector.shape_cast %238 : vector<128xf32> to vector<1x1x128xf32>
    %240 = vector.broadcast %239 : vector<1x1x128xf32> to vector<8x16x128xf32>
    %241 = arith.mulf %236, %240 : vector<8x16x128xf32>
    %242 = arith.addf %235, %241 : vector<8x16x128xf32>
    %243 = vector.extract_strided_slice %214 {offsets = [4, 0, 0], sizes = [8, 16, 128], strides = [1, 1, 1]} : vector<14x16x128xf32> to vector<8x16x128xf32>
    %c4_124 = arith.constant 4 : index
    %c4_125 = arith.constant 4 : index
    %c0_126 = arith.constant 0 : index
    %244 = vector.load %arg3[%c4_124, %c4_125, %c0_126] : memref<7x7x128xf32, #tpu.memory_space<vmem>>, vector<1x1x128xf32>
    %245 = vector.shape_cast %244 : vector<1x1x128xf32> to vector<128xf32>
    %246 = vector.shape_cast %245 : vector<128xf32> to vector<1x1x128xf32>
    %247 = vector.broadcast %246 : vector<1x1x128xf32> to vector<8x16x128xf32>
    %248 = arith.mulf %243, %247 : vector<8x16x128xf32>
    %249 = arith.addf %242, %248 : vector<8x16x128xf32>
    %250 = vector.extract_strided_slice %214 {offsets = [5, 0, 0], sizes = [8, 16, 128], strides = [1, 1, 1]} : vector<14x16x128xf32> to vector<8x16x128xf32>
    %c5_127 = arith.constant 5 : index
    %c4_128 = arith.constant 4 : index
    %c0_129 = arith.constant 0 : index
    %251 = vector.load %arg3[%c5_127, %c4_128, %c0_129] : memref<7x7x128xf32, #tpu.memory_space<vmem>>, vector<1x1x128xf32>
    %252 = vector.shape_cast %251 : vector<1x1x128xf32> to vector<128xf32>
    %253 = vector.shape_cast %252 : vector<128xf32> to vector<1x1x128xf32>
    %254 = vector.broadcast %253 : vector<1x1x128xf32> to vector<8x16x128xf32>
    %255 = arith.mulf %250, %254 : vector<8x16x128xf32>
    %256 = arith.addf %249, %255 : vector<8x16x128xf32>
    %257 = vector.extract_strided_slice %214 {offsets = [6, 0, 0], sizes = [8, 16, 128], strides = [1, 1, 1]} : vector<14x16x128xf32> to vector<8x16x128xf32>
    %c6_130 = arith.constant 6 : index
    %c4_131 = arith.constant 4 : index
    %c0_132 = arith.constant 0 : index
    %258 = vector.load %arg3[%c6_130, %c4_131, %c0_132] : memref<7x7x128xf32, #tpu.memory_space<vmem>>, vector<1x1x128xf32>
    %259 = vector.shape_cast %258 : vector<1x1x128xf32> to vector<128xf32>
    %260 = vector.shape_cast %259 : vector<128xf32> to vector<1x1x128xf32>
    %261 = vector.broadcast %260 : vector<1x1x128xf32> to vector<8x16x128xf32>
    %262 = arith.mulf %257, %261 : vector<8x16x128xf32>
    %263 = arith.addf %256, %262 : vector<8x16x128xf32>
    %c0_133 = arith.constant 0 : index
    %c10 = arith.constant 10 : index
    %c0_134 = arith.constant 0 : index
    %264 = vector.load %arg6[%c0_133, %c10, %c0_134] : memref<22x32x128xf32, #tpu.memory_space<vmem>>, vector<14x16x128xf32>
    %265 = vector.extract_strided_slice %264 {offsets = [0, 0, 0], sizes = [8, 16, 128], strides = [1, 1, 1]} : vector<14x16x128xf32> to vector<8x16x128xf32>
    %c0_135 = arith.constant 0 : index
    %c5_136 = arith.constant 5 : index
    %c0_137 = arith.constant 0 : index
    %266 = vector.load %arg3[%c0_135, %c5_136, %c0_137] : memref<7x7x128xf32, #tpu.memory_space<vmem>>, vector<1x1x128xf32>
    %267 = vector.shape_cast %266 : vector<1x1x128xf32> to vector<128xf32>
    %268 = vector.shape_cast %267 : vector<128xf32> to vector<1x1x128xf32>
    %269 = vector.broadcast %268 : vector<1x1x128xf32> to vector<8x16x128xf32>
    %270 = arith.mulf %265, %269 : vector<8x16x128xf32>
    %271 = arith.addf %263, %270 : vector<8x16x128xf32>
    %272 = vector.extract_strided_slice %264 {offsets = [1, 0, 0], sizes = [8, 16, 128], strides = [1, 1, 1]} : vector<14x16x128xf32> to vector<8x16x128xf32>
    %c1_138 = arith.constant 1 : index
    %c5_139 = arith.constant 5 : index
    %c0_140 = arith.constant 0 : index
    %273 = vector.load %arg3[%c1_138, %c5_139, %c0_140] : memref<7x7x128xf32, #tpu.memory_space<vmem>>, vector<1x1x128xf32>
    %274 = vector.shape_cast %273 : vector<1x1x128xf32> to vector<128xf32>
    %275 = vector.shape_cast %274 : vector<128xf32> to vector<1x1x128xf32>
    %276 = vector.broadcast %275 : vector<1x1x128xf32> to vector<8x16x128xf32>
    %277 = arith.mulf %272, %276 : vector<8x16x128xf32>
    %278 = arith.addf %271, %277 : vector<8x16x128xf32>
    %279 = vector.extract_strided_slice %264 {offsets = [2, 0, 0], sizes = [8, 16, 128], strides = [1, 1, 1]} : vector<14x16x128xf32> to vector<8x16x128xf32>
    %c2_141 = arith.constant 2 : index
    %c5_142 = arith.constant 5 : index
    %c0_143 = arith.constant 0 : index
    %280 = vector.load %arg3[%c2_141, %c5_142, %c0_143] : memref<7x7x128xf32, #tpu.memory_space<vmem>>, vector<1x1x128xf32>
    %281 = vector.shape_cast %280 : vector<1x1x128xf32> to vector<128xf32>
    %282 = vector.shape_cast %281 : vector<128xf32> to vector<1x1x128xf32>
    %283 = vector.broadcast %282 : vector<1x1x128xf32> to vector<8x16x128xf32>
    %284 = arith.mulf %279, %283 : vector<8x16x128xf32>
    %285 = arith.addf %278, %284 : vector<8x16x128xf32>
    %286 = vector.extract_strided_slice %264 {offsets = [3, 0, 0], sizes = [8, 16, 128], strides = [1, 1, 1]} : vector<14x16x128xf32> to vector<8x16x128xf32>
    %c3_144 = arith.constant 3 : index
    %c5_145 = arith.constant 5 : index
    %c0_146 = arith.constant 0 : index
    %287 = vector.load %arg3[%c3_144, %c5_145, %c0_146] : memref<7x7x128xf32, #tpu.memory_space<vmem>>, vector<1x1x128xf32>
    %288 = vector.shape_cast %287 : vector<1x1x128xf32> to vector<128xf32>
    %289 = vector.shape_cast %288 : vector<128xf32> to vector<1x1x128xf32>
    %290 = vector.broadcast %289 : vector<1x1x128xf32> to vector<8x16x128xf32>
    %291 = arith.mulf %286, %290 : vector<8x16x128xf32>
    %292 = arith.addf %285, %291 : vector<8x16x128xf32>
    %293 = vector.extract_strided_slice %264 {offsets = [4, 0, 0], sizes = [8, 16, 128], strides = [1, 1, 1]} : vector<14x16x128xf32> to vector<8x16x128xf32>
    %c4_147 = arith.constant 4 : index
    %c5_148 = arith.constant 5 : index
    %c0_149 = arith.constant 0 : index
    %294 = vector.load %arg3[%c4_147, %c5_148, %c0_149] : memref<7x7x128xf32, #tpu.memory_space<vmem>>, vector<1x1x128xf32>
    %295 = vector.shape_cast %294 : vector<1x1x128xf32> to vector<128xf32>
    %296 = vector.shape_cast %295 : vector<128xf32> to vector<1x1x128xf32>
    %297 = vector.broadcast %296 : vector<1x1x128xf32> to vector<8x16x128xf32>
    %298 = arith.mulf %293, %297 : vector<8x16x128xf32>
    %299 = arith.addf %292, %298 : vector<8x16x128xf32>
    %300 = vector.extract_strided_slice %264 {offsets = [5, 0, 0], sizes = [8, 16, 128], strides = [1, 1, 1]} : vector<14x16x128xf32> to vector<8x16x128xf32>
    %c5_150 = arith.constant 5 : index
    %c5_151 = arith.constant 5 : index
    %c0_152 = arith.constant 0 : index
    %301 = vector.load %arg3[%c5_150, %c5_151, %c0_152] : memref<7x7x128xf32, #tpu.memory_space<vmem>>, vector<1x1x128xf32>
    %302 = vector.shape_cast %301 : vector<1x1x128xf32> to vector<128xf32>
    %303 = vector.shape_cast %302 : vector<128xf32> to vector<1x1x128xf32>
    %304 = vector.broadcast %303 : vector<1x1x128xf32> to vector<8x16x128xf32>
    %305 = arith.mulf %300, %304 : vector<8x16x128xf32>
    %306 = arith.addf %299, %305 : vector<8x16x128xf32>
    %307 = vector.extract_strided_slice %264 {offsets = [6, 0, 0], sizes = [8, 16, 128], strides = [1, 1, 1]} : vector<14x16x128xf32> to vector<8x16x128xf32>
    %c6_153 = arith.constant 6 : index
    %c5_154 = arith.constant 5 : index
    %c0_155 = arith.constant 0 : index
    %308 = vector.load %arg3[%c6_153, %c5_154, %c0_155] : memref<7x7x128xf32, #tpu.memory_space<vmem>>, vector<1x1x128xf32>
    %309 = vector.shape_cast %308 : vector<1x1x128xf32> to vector<128xf32>
    %310 = vector.shape_cast %309 : vector<128xf32> to vector<1x1x128xf32>
    %311 = vector.broadcast %310 : vector<1x1x128xf32> to vector<8x16x128xf32>
    %312 = arith.mulf %307, %311 : vector<8x16x128xf32>
    %313 = arith.addf %306, %312 : vector<8x16x128xf32>
    %c0_156 = arith.constant 0 : index
    %c11 = arith.constant 11 : index
    %c0_157 = arith.constant 0 : index
    %314 = vector.load %arg6[%c0_156, %c11, %c0_157] : memref<22x32x128xf32, #tpu.memory_space<vmem>>, vector<14x16x128xf32>
    %315 = vector.extract_strided_slice %314 {offsets = [0, 0, 0], sizes = [8, 16, 128], strides = [1, 1, 1]} : vector<14x16x128xf32> to vector<8x16x128xf32>
    %c0_158 = arith.constant 0 : index
    %c6_159 = arith.constant 6 : index
    %c0_160 = arith.constant 0 : index
    %316 = vector.load %arg3[%c0_158, %c6_159, %c0_160] : memref<7x7x128xf32, #tpu.memory_space<vmem>>, vector<1x1x128xf32>
    %317 = vector.shape_cast %316 : vector<1x1x128xf32> to vector<128xf32>
    %318 = vector.shape_cast %317 : vector<128xf32> to vector<1x1x128xf32>
    %319 = vector.broadcast %318 : vector<1x1x128xf32> to vector<8x16x128xf32>
    %320 = arith.mulf %315, %319 : vector<8x16x128xf32>
    %321 = arith.addf %313, %320 : vector<8x16x128xf32>
    %322 = vector.extract_strided_slice %314 {offsets = [1, 0, 0], sizes = [8, 16, 128], strides = [1, 1, 1]} : vector<14x16x128xf32> to vector<8x16x128xf32>
    %c1_161 = arith.constant 1 : index
    %c6_162 = arith.constant 6 : index
    %c0_163 = arith.constant 0 : index
    %323 = vector.load %arg3[%c1_161, %c6_162, %c0_163] : memref<7x7x128xf32, #tpu.memory_space<vmem>>, vector<1x1x128xf32>
    %324 = vector.shape_cast %323 : vector<1x1x128xf32> to vector<128xf32>
    %325 = vector.shape_cast %324 : vector<128xf32> to vector<1x1x128xf32>
    %326 = vector.broadcast %325 : vector<1x1x128xf32> to vector<8x16x128xf32>
    %327 = arith.mulf %322, %326 : vector<8x16x128xf32>
    %328 = arith.addf %321, %327 : vector<8x16x128xf32>
    %329 = vector.extract_strided_slice %314 {offsets = [2, 0, 0], sizes = [8, 16, 128], strides = [1, 1, 1]} : vector<14x16x128xf32> to vector<8x16x128xf32>
    %c2_164 = arith.constant 2 : index
    %c6_165 = arith.constant 6 : index
    %c0_166 = arith.constant 0 : index
    %330 = vector.load %arg3[%c2_164, %c6_165, %c0_166] : memref<7x7x128xf32, #tpu.memory_space<vmem>>, vector<1x1x128xf32>
    %331 = vector.shape_cast %330 : vector<1x1x128xf32> to vector<128xf32>
    %332 = vector.shape_cast %331 : vector<128xf32> to vector<1x1x128xf32>
    %333 = vector.broadcast %332 : vector<1x1x128xf32> to vector<8x16x128xf32>
    %334 = arith.mulf %329, %333 : vector<8x16x128xf32>
    %335 = arith.addf %328, %334 : vector<8x16x128xf32>
    %336 = vector.extract_strided_slice %314 {offsets = [3, 0, 0], sizes = [8, 16, 128], strides = [1, 1, 1]} : vector<14x16x128xf32> to vector<8x16x128xf32>
    %c3_167 = arith.constant 3 : index
    %c6_168 = arith.constant 6 : index
    %c0_169 = arith.constant 0 : index
    %337 = vector.load %arg3[%c3_167, %c6_168, %c0_169] : memref<7x7x128xf32, #tpu.memory_space<vmem>>, vector<1x1x128xf32>
    %338 = vector.shape_cast %337 : vector<1x1x128xf32> to vector<128xf32>
    %339 = vector.shape_cast %338 : vector<128xf32> to vector<1x1x128xf32>
    %340 = vector.broadcast %339 : vector<1x1x128xf32> to vector<8x16x128xf32>
    %341 = arith.mulf %336, %340 : vector<8x16x128xf32>
    %342 = arith.addf %335, %341 : vector<8x16x128xf32>
    %343 = vector.extract_strided_slice %314 {offsets = [4, 0, 0], sizes = [8, 16, 128], strides = [1, 1, 1]} : vector<14x16x128xf32> to vector<8x16x128xf32>
    %c4_170 = arith.constant 4 : index
    %c6_171 = arith.constant 6 : index
    %c0_172 = arith.constant 0 : index
    %344 = vector.load %arg3[%c4_170, %c6_171, %c0_172] : memref<7x7x128xf32, #tpu.memory_space<vmem>>, vector<1x1x128xf32>
    %345 = vector.shape_cast %344 : vector<1x1x128xf32> to vector<128xf32>
    %346 = vector.shape_cast %345 : vector<128xf32> to vector<1x1x128xf32>
    %347 = vector.broadcast %346 : vector<1x1x128xf32> to vector<8x16x128xf32>
    %348 = arith.mulf %343, %347 : vector<8x16x128xf32>
    %349 = arith.addf %342, %348 : vector<8x16x128xf32>
    %350 = vector.extract_strided_slice %314 {offsets = [5, 0, 0], sizes = [8, 16, 128], strides = [1, 1, 1]} : vector<14x16x128xf32> to vector<8x16x128xf32>
    %c5_173 = arith.constant 5 : index
    %c6_174 = arith.constant 6 : index
    %c0_175 = arith.constant 0 : index
    %351 = vector.load %arg3[%c5_173, %c6_174, %c0_175] : memref<7x7x128xf32, #tpu.memory_space<vmem>>, vector<1x1x128xf32>
    %352 = vector.shape_cast %351 : vector<1x1x128xf32> to vector<128xf32>
    %353 = vector.shape_cast %352 : vector<128xf32> to vector<1x1x128xf32>
    %354 = vector.broadcast %353 : vector<1x1x128xf32> to vector<8x16x128xf32>
    %355 = arith.mulf %350, %354 : vector<8x16x128xf32>
    %356 = arith.addf %349, %355 : vector<8x16x128xf32>
    %357 = vector.extract_strided_slice %314 {offsets = [6, 0, 0], sizes = [8, 16, 128], strides = [1, 1, 1]} : vector<14x16x128xf32> to vector<8x16x128xf32>
    %c6_176 = arith.constant 6 : index
    %c6_177 = arith.constant 6 : index
    %c0_178 = arith.constant 0 : index
    %358 = vector.load %arg3[%c6_176, %c6_177, %c0_178] : memref<7x7x128xf32, #tpu.memory_space<vmem>>, vector<1x1x128xf32>
    %359 = vector.shape_cast %358 : vector<1x1x128xf32> to vector<128xf32>
    %360 = vector.shape_cast %359 : vector<128xf32> to vector<1x1x128xf32>
    %361 = vector.broadcast %360 : vector<1x1x128xf32> to vector<8x16x128xf32>
    %362 = arith.mulf %357, %361 : vector<8x16x128xf32>
    %363 = arith.addf %356, %362 : vector<8x16x128xf32>
    %c0_179 = arith.constant 0 : index
    %c0_180 = arith.constant 0 : index
    %c0_181 = arith.constant 0 : index
    %c0_182 = arith.constant 0 : index
    %364 = vector.load %arg5[%c0_179, %c0_180, %c0_181, %c0_182] : memref<1x16x16x128xf32, #tpu.memory_space<vmem>>, vector<1x8x16x128xf32>
    %365 = vector.shape_cast %364 : vector<1x8x16x128xf32> to vector<8x16x128xf32>
    %366 = vector.shape_cast %363 : vector<8x16x128xf32> to vector<1x8x16x128xf32>
    tpu.vector_store %arg5[%c0_179, %c0_180, %c0_181, %c0_182], %366 {strides = array<i32>} : memref<1x16x16x128xf32, #tpu.memory_space<vmem>>, vector<1x8x16x128xf32>,
    %367 = vector.shape_cast %11 : vector<1x1x128xf32> to vector<1x1x128xf32>
    %368 = vector.broadcast %367 : vector<1x1x128xf32> to vector<8x16x128xf32>
    %c8_183 = arith.constant 8 : index
    %c5_184 = arith.constant 5 : index
    %c0_185 = arith.constant 0 : index
    %369 = vector.load %arg6[%c8_183, %c5_184, %c0_185] : memref<22x32x128xf32, #tpu.memory_space<vmem>>, vector<14x16x128xf32>
    %370 = vector.extract_strided_slice %369 {offsets = [0, 0, 0], sizes = [8, 16, 128], strides = [1, 1, 1]} : vector<14x16x128xf32> to vector<8x16x128xf32>
    %c0_186 = arith.constant 0 : index
    %c0_187 = arith.constant 0 : index
    %c0_188 = arith.constant 0 : index
    %371 = vector.load %arg3[%c0_186, %c0_187, %c0_188] : memref<7x7x128xf32, #tpu.memory_space<vmem>>, vector<1x1x128xf32>
    %372 = vector.shape_cast %371 : vector<1x1x128xf32> to vector<128xf32>
    %373 = vector.shape_cast %372 : vector<128xf32> to vector<1x1x128xf32>
    %374 = vector.broadcast %373 : vector<1x1x128xf32> to vector<8x16x128xf32>
    %375 = arith.mulf %370, %374 : vector<8x16x128xf32>
    %376 = arith.addf %368, %375 : vector<8x16x128xf32>
    %377 = vector.extract_strided_slice %369 {offsets = [1, 0, 0], sizes = [8, 16, 128], strides = [1, 1, 1]} : vector<14x16x128xf32> to vector<8x16x128xf32>
    %c1_189 = arith.constant 1 : index
    %c0_190 = arith.constant 0 : index
    %c0_191 = arith.constant 0 : index
    %378 = vector.load %arg3[%c1_189, %c0_190, %c0_191] : memref<7x7x128xf32, #tpu.memory_space<vmem>>, vector<1x1x128xf32>
    %379 = vector.shape_cast %378 : vector<1x1x128xf32> to vector<128xf32>
    %380 = vector.shape_cast %379 : vector<128xf32> to vector<1x1x128xf32>
    %381 = vector.broadcast %380 : vector<1x1x128xf32> to vector<8x16x128xf32>
    %382 = arith.mulf %377, %381 : vector<8x16x128xf32>
    %383 = arith.addf %376, %382 : vector<8x16x128xf32>
    %384 = vector.extract_strided_slice %369 {offsets = [2, 0, 0], sizes = [8, 16, 128], strides = [1, 1, 1]} : vector<14x16x128xf32> to vector<8x16x128xf32>
    %c2_192 = arith.constant 2 : index
    %c0_193 = arith.constant 0 : index
    %c0_194 = arith.constant 0 : index
    %385 = vector.load %arg3[%c2_192, %c0_193, %c0_194] : memref<7x7x128xf32, #tpu.memory_space<vmem>>, vector<1x1x128xf32>
    %386 = vector.shape_cast %385 : vector<1x1x128xf32> to vector<128xf32>
    %387 = vector.shape_cast %386 : vector<128xf32> to vector<1x1x128xf32>
    %388 = vector.broadcast %387 : vector<1x1x128xf32> to vector<8x16x128xf32>
    %389 = arith.mulf %384, %388 : vector<8x16x128xf32>
    %390 = arith.addf %383, %389 : vector<8x16x128xf32>
    %391 = vector.extract_strided_slice %369 {offsets = [3, 0, 0], sizes = [8, 16, 128], strides = [1, 1, 1]} : vector<14x16x128xf32> to vector<8x16x128xf32>
    %c3_195 = arith.constant 3 : index
    %c0_196 = arith.constant 0 : index
    %c0_197 = arith.constant 0 : index
    %392 = vector.load %arg3[%c3_195, %c0_196, %c0_197] : memref<7x7x128xf32, #tpu.memory_space<vmem>>, vector<1x1x128xf32>
    %393 = vector.shape_cast %392 : vector<1x1x128xf32> to vector<128xf32>
    %394 = vector.shape_cast %393 : vector<128xf32> to vector<1x1x128xf32>
    %395 = vector.broadcast %394 : vector<1x1x128xf32> to vector<8x16x128xf32>
    %396 = arith.mulf %391, %395 : vector<8x16x128xf32>
    %397 = arith.addf %390, %396 : vector<8x16x128xf32>
    %398 = vector.extract_strided_slice %369 {offsets = [4, 0, 0], sizes = [8, 16, 128], strides = [1, 1, 1]} : vector<14x16x128xf32> to vector<8x16x128xf32>
    %c4_198 = arith.constant 4 : index
    %c0_199 = arith.constant 0 : index
    %c0_200 = arith.constant 0 : index
    %399 = vector.load %arg3[%c4_198, %c0_199, %c0_200] : memref<7x7x128xf32, #tpu.memory_space<vmem>>, vector<1x1x128xf32>
    %400 = vector.shape_cast %399 : vector<1x1x128xf32> to vector<128xf32>
    %401 = vector.shape_cast %400 : vector<128xf32> to vector<1x1x128xf32>
    %402 = vector.broadcast %401 : vector<1x1x128xf32> to vector<8x16x128xf32>
    %403 = arith.mulf %398, %402 : vector<8x16x128xf32>
    %404 = arith.addf %397, %403 : vector<8x16x128xf32>
    %405 = vector.extract_strided_slice %369 {offsets = [5, 0, 0], sizes = [8, 16, 128], strides = [1, 1, 1]} : vector<14x16x128xf32> to vector<8x16x128xf32>
    %c5_201 = arith.constant 5 : index
    %c0_202 = arith.constant 0 : index
    %c0_203 = arith.constant 0 : index
    %406 = vector.load %arg3[%c5_201, %c0_202, %c0_203] : memref<7x7x128xf32, #tpu.memory_space<vmem>>, vector<1x1x128xf32>
    %407 = vector.shape_cast %406 : vector<1x1x128xf32> to vector<128xf32>
    %408 = vector.shape_cast %407 : vector<128xf32> to vector<1x1x128xf32>
    %409 = vector.broadcast %408 : vector<1x1x128xf32> to vector<8x16x128xf32>
    %410 = arith.mulf %405, %409 : vector<8x16x128xf32>
    %411 = arith.addf %404, %410 : vector<8x16x128xf32>
    %412 = vector.extract_strided_slice %369 {offsets = [6, 0, 0], sizes = [8, 16, 128], strides = [1, 1, 1]} : vector<14x16x128xf32> to vector<8x16x128xf32>
    %c6_204 = arith.constant 6 : index
    %c0_205 = arith.constant 0 : index
    %c0_206 = arith.constant 0 : index
    %413 = vector.load %arg3[%c6_204, %c0_205, %c0_206] : memref<7x7x128xf32, #tpu.memory_space<vmem>>, vector<1x1x128xf32>
    %414 = vector.shape_cast %413 : vector<1x1x128xf32> to vector<128xf32>
    %415 = vector.shape_cast %414 : vector<128xf32> to vector<1x1x128xf32>
    %416 = vector.broadcast %415 : vector<1x1x128xf32> to vector<8x16x128xf32>
    %417 = arith.mulf %412, %416 : vector<8x16x128xf32>
    %418 = arith.addf %411, %417 : vector<8x16x128xf32>
    %c8_207 = arith.constant 8 : index
    %c6_208 = arith.constant 6 : index
    %c0_209 = arith.constant 0 : index
    %419 = vector.load %arg6[%c8_207, %c6_208, %c0_209] : memref<22x32x128xf32, #tpu.memory_space<vmem>>, vector<14x16x128xf32>
    %420 = vector.extract_strided_slice %419 {offsets = [0, 0, 0], sizes = [8, 16, 128], strides = [1, 1, 1]} : vector<14x16x128xf32> to vector<8x16x128xf32>
    %c0_210 = arith.constant 0 : index
    %c1_211 = arith.constant 1 : index
    %c0_212 = arith.constant 0 : index
    %421 = vector.load %arg3[%c0_210, %c1_211, %c0_212] : memref<7x7x128xf32, #tpu.memory_space<vmem>>, vector<1x1x128xf32>
    %422 = vector.shape_cast %421 : vector<1x1x128xf32> to vector<128xf32>
    %423 = vector.shape_cast %422 : vector<128xf32> to vector<1x1x128xf32>
    %424 = vector.broadcast %423 : vector<1x1x128xf32> to vector<8x16x128xf32>
    %425 = arith.mulf %420, %424 : vector<8x16x128xf32>
    %426 = arith.addf %418, %425 : vector<8x16x128xf32>
    %427 = vector.extract_strided_slice %419 {offsets = [1, 0, 0], sizes = [8, 16, 128], strides = [1, 1, 1]} : vector<14x16x128xf32> to vector<8x16x128xf32>
    %c1_213 = arith.constant 1 : index
    %c1_214 = arith.constant 1 : index
    %c0_215 = arith.constant 0 : index
    %428 = vector.load %arg3[%c1_213, %c1_214, %c0_215] : memref<7x7x128xf32, #tpu.memory_space<vmem>>, vector<1x1x128xf32>
    %429 = vector.shape_cast %428 : vector<1x1x128xf32> to vector<128xf32>
    %430 = vector.shape_cast %429 : vector<128xf32> to vector<1x1x128xf32>
    %431 = vector.broadcast %430 : vector<1x1x128xf32> to vector<8x16x128xf32>
    %432 = arith.mulf %427, %431 : vector<8x16x128xf32>
    %433 = arith.addf %426, %432 : vector<8x16x128xf32>
    %434 = vector.extract_strided_slice %419 {offsets = [2, 0, 0], sizes = [8, 16, 128], strides = [1, 1, 1]} : vector<14x16x128xf32> to vector<8x16x128xf32>
    %c2_216 = arith.constant 2 : index
    %c1_217 = arith.constant 1 : index
    %c0_218 = arith.constant 0 : index
    %435 = vector.load %arg3[%c2_216, %c1_217, %c0_218] : memref<7x7x128xf32, #tpu.memory_space<vmem>>, vector<1x1x128xf32>
    %436 = vector.shape_cast %435 : vector<1x1x128xf32> to vector<128xf32>
    %437 = vector.shape_cast %436 : vector<128xf32> to vector<1x1x128xf32>
    %438 = vector.broadcast %437 : vector<1x1x128xf32> to vector<8x16x128xf32>
    %439 = arith.mulf %434, %438 : vector<8x16x128xf32>
    %440 = arith.addf %433, %439 : vector<8x16x128xf32>
    %441 = vector.extract_strided_slice %419 {offsets = [3, 0, 0], sizes = [8, 16, 128], strides = [1, 1, 1]} : vector<14x16x128xf32> to vector<8x16x128xf32>
    %c3_219 = arith.constant 3 : index
    %c1_220 = arith.constant 1 : index
    %c0_221 = arith.constant 0 : index
    %442 = vector.load %arg3[%c3_219, %c1_220, %c0_221] : memref<7x7x128xf32, #tpu.memory_space<vmem>>, vector<1x1x128xf32>
    %443 = vector.shape_cast %442 : vector<1x1x128xf32> to vector<128xf32>
    %444 = vector.shape_cast %443 : vector<128xf32> to vector<1x1x128xf32>
    %445 = vector.broadcast %444 : vector<1x1x128xf32> to vector<8x16x128xf32>
    %446 = arith.mulf %441, %445 : vector<8x16x128xf32>
    %447 = arith.addf %440, %446 : vector<8x16x128xf32>
    %448 = vector.extract_strided_slice %419 {offsets = [4, 0, 0], sizes = [8, 16, 128], strides = [1, 1, 1]} : vector<14x16x128xf32> to vector<8x16x128xf32>
    %c4_222 = arith.constant 4 : index
    %c1_223 = arith.constant 1 : index
    %c0_224 = arith.constant 0 : index
    %449 = vector.load %arg3[%c4_222, %c1_223, %c0_224] : memref<7x7x128xf32, #tpu.memory_space<vmem>>, vector<1x1x128xf32>
    %450 = vector.shape_cast %449 : vector<1x1x128xf32> to vector<128xf32>
    %451 = vector.shape_cast %450 : vector<128xf32> to vector<1x1x128xf32>
    %452 = vector.broadcast %451 : vector<1x1x128xf32> to vector<8x16x128xf32>
    %453 = arith.mulf %448, %452 : vector<8x16x128xf32>
    %454 = arith.addf %447, %453 : vector<8x16x128xf32>
    %455 = vector.extract_strided_slice %419 {offsets = [5, 0, 0], sizes = [8, 16, 128], strides = [1, 1, 1]} : vector<14x16x128xf32> to vector<8x16x128xf32>
    %c5_225 = arith.constant 5 : index
    %c1_226 = arith.constant 1 : index
    %c0_227 = arith.constant 0 : index
    %456 = vector.load %arg3[%c5_225, %c1_226, %c0_227] : memref<7x7x128xf32, #tpu.memory_space<vmem>>, vector<1x1x128xf32>
    %457 = vector.shape_cast %456 : vector<1x1x128xf32> to vector<128xf32>
    %458 = vector.shape_cast %457 : vector<128xf32> to vector<1x1x128xf32>
    %459 = vector.broadcast %458 : vector<1x1x128xf32> to vector<8x16x128xf32>
    %460 = arith.mulf %455, %459 : vector<8x16x128xf32>
    %461 = arith.addf %454, %460 : vector<8x16x128xf32>
    %462 = vector.extract_strided_slice %419 {offsets = [6, 0, 0], sizes = [8, 16, 128], strides = [1, 1, 1]} : vector<14x16x128xf32> to vector<8x16x128xf32>
    %c6_228 = arith.constant 6 : index
    %c1_229 = arith.constant 1 : index
    %c0_230 = arith.constant 0 : index
    %463 = vector.load %arg3[%c6_228, %c1_229, %c0_230] : memref<7x7x128xf32, #tpu.memory_space<vmem>>, vector<1x1x128xf32>
    %464 = vector.shape_cast %463 : vector<1x1x128xf32> to vector<128xf32>
    %465 = vector.shape_cast %464 : vector<128xf32> to vector<1x1x128xf32>
    %466 = vector.broadcast %465 : vector<1x1x128xf32> to vector<8x16x128xf32>
    %467 = arith.mulf %462, %466 : vector<8x16x128xf32>
    %468 = arith.addf %461, %467 : vector<8x16x128xf32>
    %c8_231 = arith.constant 8 : index
    %c7_232 = arith.constant 7 : index
    %c0_233 = arith.constant 0 : index
    %469 = vector.load %arg6[%c8_231, %c7_232, %c0_233] : memref<22x32x128xf32, #tpu.memory_space<vmem>>, vector<14x16x128xf32>
    %470 = vector.extract_strided_slice %469 {offsets = [0, 0, 0], sizes = [8, 16, 128], strides = [1, 1, 1]} : vector<14x16x128xf32> to vector<8x16x128xf32>
    %c0_234 = arith.constant 0 : index
    %c2_235 = arith.constant 2 : index
    %c0_236 = arith.constant 0 : index
    %471 = vector.load %arg3[%c0_234, %c2_235, %c0_236] : memref<7x7x128xf32, #tpu.memory_space<vmem>>, vector<1x1x128xf32>
    %472 = vector.shape_cast %471 : vector<1x1x128xf32> to vector<128xf32>
    %473 = vector.shape_cast %472 : vector<128xf32> to vector<1x1x128xf32>
    %474 = vector.broadcast %473 : vector<1x1x128xf32> to vector<8x16x128xf32>
    %475 = arith.mulf %470, %474 : vector<8x16x128xf32>
    %476 = arith.addf %468, %475 : vector<8x16x128xf32>
    %477 = vector.extract_strided_slice %469 {offsets = [1, 0, 0], sizes = [8, 16, 128], strides = [1, 1, 1]} : vector<14x16x128xf32> to vector<8x16x128xf32>
    %c1_237 = arith.constant 1 : index
    %c2_238 = arith.constant 2 : index
    %c0_239 = arith.constant 0 : index
    %478 = vector.load %arg3[%c1_237, %c2_238, %c0_239] : memref<7x7x128xf32, #tpu.memory_space<vmem>>, vector<1x1x128xf32>
    %479 = vector.shape_cast %478 : vector<1x1x128xf32> to vector<128xf32>
    %480 = vector.shape_cast %479 : vector<128xf32> to vector<1x1x128xf32>
    %481 = vector.broadcast %480 : vector<1x1x128xf32> to vector<8x16x128xf32>
    %482 = arith.mulf %477, %481 : vector<8x16x128xf32>
    %483 = arith.addf %476, %482 : vector<8x16x128xf32>
    %484 = vector.extract_strided_slice %469 {offsets = [2, 0, 0], sizes = [8, 16, 128], strides = [1, 1, 1]} : vector<14x16x128xf32> to vector<8x16x128xf32>
    %c2_240 = arith.constant 2 : index
    %c2_241 = arith.constant 2 : index
    %c0_242 = arith.constant 0 : index
    %485 = vector.load %arg3[%c2_240, %c2_241, %c0_242] : memref<7x7x128xf32, #tpu.memory_space<vmem>>, vector<1x1x128xf32>
    %486 = vector.shape_cast %485 : vector<1x1x128xf32> to vector<128xf32>
    %487 = vector.shape_cast %486 : vector<128xf32> to vector<1x1x128xf32>
    %488 = vector.broadcast %487 : vector<1x1x128xf32> to vector<8x16x128xf32>
    %489 = arith.mulf %484, %488 : vector<8x16x128xf32>
    %490 = arith.addf %483, %489 : vector<8x16x128xf32>
    %491 = vector.extract_strided_slice %469 {offsets = [3, 0, 0], sizes = [8, 16, 128], strides = [1, 1, 1]} : vector<14x16x128xf32> to vector<8x16x128xf32>
    %c3_243 = arith.constant 3 : index
    %c2_244 = arith.constant 2 : index
    %c0_245 = arith.constant 0 : index
    %492 = vector.load %arg3[%c3_243, %c2_244, %c0_245] : memref<7x7x128xf32, #tpu.memory_space<vmem>>, vector<1x1x128xf32>
    %493 = vector.shape_cast %492 : vector<1x1x128xf32> to vector<128xf32>
    %494 = vector.shape_cast %493 : vector<128xf32> to vector<1x1x128xf32>
    %495 = vector.broadcast %494 : vector<1x1x128xf32> to vector<8x16x128xf32>
    %496 = arith.mulf %491, %495 : vector<8x16x128xf32>
    %497 = arith.addf %490, %496 : vector<8x16x128xf32>
    %498 = vector.extract_strided_slice %469 {offsets = [4, 0, 0], sizes = [8, 16, 128], strides = [1, 1, 1]} : vector<14x16x128xf32> to vector<8x16x128xf32>
    %c4_246 = arith.constant 4 : index
    %c2_247 = arith.constant 2 : index
    %c0_248 = arith.constant 0 : index
    %499 = vector.load %arg3[%c4_246, %c2_247, %c0_248] : memref<7x7x128xf32, #tpu.memory_space<vmem>>, vector<1x1x128xf32>
    %500 = vector.shape_cast %499 : vector<1x1x128xf32> to vector<128xf32>
    %501 = vector.shape_cast %500 : vector<128xf32> to vector<1x1x128xf32>
    %502 = vector.broadcast %501 : vector<1x1x128xf32> to vector<8x16x128xf32>
    %503 = arith.mulf %498, %502 : vector<8x16x128xf32>
    %504 = arith.addf %497, %503 : vector<8x16x128xf32>
    %505 = vector.extract_strided_slice %469 {offsets = [5, 0, 0], sizes = [8, 16, 128], strides = [1, 1, 1]} : vector<14x16x128xf32> to vector<8x16x128xf32>
    %c5_249 = arith.constant 5 : index
    %c2_250 = arith.constant 2 : index
    %c0_251 = arith.constant 0 : index
    %506 = vector.load %arg3[%c5_249, %c2_250, %c0_251] : memref<7x7x128xf32, #tpu.memory_space<vmem>>, vector<1x1x128xf32>
    %507 = vector.shape_cast %506 : vector<1x1x128xf32> to vector<128xf32>
    %508 = vector.shape_cast %507 : vector<128xf32> to vector<1x1x128xf32>
    %509 = vector.broadcast %508 : vector<1x1x128xf32> to vector<8x16x128xf32>
    %510 = arith.mulf %505, %509 : vector<8x16x128xf32>
    %511 = arith.addf %504, %510 : vector<8x16x128xf32>
    %512 = vector.extract_strided_slice %469 {offsets = [6, 0, 0], sizes = [8, 16, 128], strides = [1, 1, 1]} : vector<14x16x128xf32> to vector<8x16x128xf32>
    %c6_252 = arith.constant 6 : index
    %c2_253 = arith.constant 2 : index
    %c0_254 = arith.constant 0 : index
    %513 = vector.load %arg3[%c6_252, %c2_253, %c0_254] : memref<7x7x128xf32, #tpu.memory_space<vmem>>, vector<1x1x128xf32>
    %514 = vector.shape_cast %513 : vector<1x1x128xf32> to vector<128xf32>
    %515 = vector.shape_cast %514 : vector<128xf32> to vector<1x1x128xf32>
    %516 = vector.broadcast %515 : vector<1x1x128xf32> to vector<8x16x128xf32>
    %517 = arith.mulf %512, %516 : vector<8x16x128xf32>
    %518 = arith.addf %511, %517 : vector<8x16x128xf32>
    %c8_255 = arith.constant 8 : index
    %c8_256 = arith.constant 8 : index
    %c0_257 = arith.constant 0 : index
    %519 = vector.load %arg6[%c8_255, %c8_256, %c0_257] : memref<22x32x128xf32, #tpu.memory_space<vmem>>, vector<14x16x128xf32>
    %520 = vector.extract_strided_slice %519 {offsets = [0, 0, 0], sizes = [8, 16, 128], strides = [1, 1, 1]} : vector<14x16x128xf32> to vector<8x16x128xf32>
    %c0_258 = arith.constant 0 : index
    %c3_259 = arith.constant 3 : index
    %c0_260 = arith.constant 0 : index
    %521 = vector.load %arg3[%c0_258, %c3_259, %c0_260] : memref<7x7x128xf32, #tpu.memory_space<vmem>>, vector<1x1x128xf32>
    %522 = vector.shape_cast %521 : vector<1x1x128xf32> to vector<128xf32>
    %523 = vector.shape_cast %522 : vector<128xf32> to vector<1x1x128xf32>
    %524 = vector.broadcast %523 : vector<1x1x128xf32> to vector<8x16x128xf32>
    %525 = arith.mulf %520, %524 : vector<8x16x128xf32>
    %526 = arith.addf %518, %525 : vector<8x16x128xf32>
    %527 = vector.extract_strided_slice %519 {offsets = [1, 0, 0], sizes = [8, 16, 128], strides = [1, 1, 1]} : vector<14x16x128xf32> to vector<8x16x128xf32>
    %c1_261 = arith.constant 1 : index
    %c3_262 = arith.constant 3 : index
    %c0_263 = arith.constant 0 : index
    %528 = vector.load %arg3[%c1_261, %c3_262, %c0_263] : memref<7x7x128xf32, #tpu.memory_space<vmem>>, vector<1x1x128xf32>
    %529 = vector.shape_cast %528 : vector<1x1x128xf32> to vector<128xf32>
    %530 = vector.shape_cast %529 : vector<128xf32> to vector<1x1x128xf32>
    %531 = vector.broadcast %530 : vector<1x1x128xf32> to vector<8x16x128xf32>
    %532 = arith.mulf %527, %531 : vector<8x16x128xf32>
    %533 = arith.addf %526, %532 : vector<8x16x128xf32>
    %534 = vector.extract_strided_slice %519 {offsets = [2, 0, 0], sizes = [8, 16, 128], strides = [1, 1, 1]} : vector<14x16x128xf32> to vector<8x16x128xf32>
    %c2_264 = arith.constant 2 : index
    %c3_265 = arith.constant 3 : index
    %c0_266 = arith.constant 0 : index
    %535 = vector.load %arg3[%c2_264, %c3_265, %c0_266] : memref<7x7x128xf32, #tpu.memory_space<vmem>>, vector<1x1x128xf32>
    %536 = vector.shape_cast %535 : vector<1x1x128xf32> to vector<128xf32>
    %537 = vector.shape_cast %536 : vector<128xf32> to vector<1x1x128xf32>
    %538 = vector.broadcast %537 : vector<1x1x128xf32> to vector<8x16x128xf32>
    %539 = arith.mulf %534, %538 : vector<8x16x128xf32>
    %540 = arith.addf %533, %539 : vector<8x16x128xf32>
    %541 = vector.extract_strided_slice %519 {offsets = [3, 0, 0], sizes = [8, 16, 128], strides = [1, 1, 1]} : vector<14x16x128xf32> to vector<8x16x128xf32>
    %c3_267 = arith.constant 3 : index
    %c3_268 = arith.constant 3 : index
    %c0_269 = arith.constant 0 : index
    %542 = vector.load %arg3[%c3_267, %c3_268, %c0_269] : memref<7x7x128xf32, #tpu.memory_space<vmem>>, vector<1x1x128xf32>
    %543 = vector.shape_cast %542 : vector<1x1x128xf32> to vector<128xf32>
    %544 = vector.shape_cast %543 : vector<128xf32> to vector<1x1x128xf32>
    %545 = vector.broadcast %544 : vector<1x1x128xf32> to vector<8x16x128xf32>
    %546 = arith.mulf %541, %545 : vector<8x16x128xf32>
    %547 = arith.addf %540, %546 : vector<8x16x128xf32>
    %548 = vector.extract_strided_slice %519 {offsets = [4, 0, 0], sizes = [8, 16, 128], strides = [1, 1, 1]} : vector<14x16x128xf32> to vector<8x16x128xf32>
    %c4_270 = arith.constant 4 : index
    %c3_271 = arith.constant 3 : index
    %c0_272 = arith.constant 0 : index
    %549 = vector.load %arg3[%c4_270, %c3_271, %c0_272] : memref<7x7x128xf32, #tpu.memory_space<vmem>>, vector<1x1x128xf32>
    %550 = vector.shape_cast %549 : vector<1x1x128xf32> to vector<128xf32>
    %551 = vector.shape_cast %550 : vector<128xf32> to vector<1x1x128xf32>
    %552 = vector.broadcast %551 : vector<1x1x128xf32> to vector<8x16x128xf32>
    %553 = arith.mulf %548, %552 : vector<8x16x128xf32>
    %554 = arith.addf %547, %553 : vector<8x16x128xf32>
    %555 = vector.extract_strided_slice %519 {offsets = [5, 0, 0], sizes = [8, 16, 128], strides = [1, 1, 1]} : vector<14x16x128xf32> to vector<8x16x128xf32>
    %c5_273 = arith.constant 5 : index
    %c3_274 = arith.constant 3 : index
    %c0_275 = arith.constant 0 : index
    %556 = vector.load %arg3[%c5_273, %c3_274, %c0_275] : memref<7x7x128xf32, #tpu.memory_space<vmem>>, vector<1x1x128xf32>
    %557 = vector.shape_cast %556 : vector<1x1x128xf32> to vector<128xf32>
    %558 = vector.shape_cast %557 : vector<128xf32> to vector<1x1x128xf32>
    %559 = vector.broadcast %558 : vector<1x1x128xf32> to vector<8x16x128xf32>
    %560 = arith.mulf %555, %559 : vector<8x16x128xf32>
    %561 = arith.addf %554, %560 : vector<8x16x128xf32>
    %562 = vector.extract_strided_slice %519 {offsets = [6, 0, 0], sizes = [8, 16, 128], strides = [1, 1, 1]} : vector<14x16x128xf32> to vector<8x16x128xf32>
    %c6_276 = arith.constant 6 : index
    %c3_277 = arith.constant 3 : index
    %c0_278 = arith.constant 0 : index
    %563 = vector.load %arg3[%c6_276, %c3_277, %c0_278] : memref<7x7x128xf32, #tpu.memory_space<vmem>>, vector<1x1x128xf32>
    %564 = vector.shape_cast %563 : vector<1x1x128xf32> to vector<128xf32>
    %565 = vector.shape_cast %564 : vector<128xf32> to vector<1x1x128xf32>
    %566 = vector.broadcast %565 : vector<1x1x128xf32> to vector<8x16x128xf32>
    %567 = arith.mulf %562, %566 : vector<8x16x128xf32>
    %568 = arith.addf %561, %567 : vector<8x16x128xf32>
    %c8_279 = arith.constant 8 : index
    %c9_280 = arith.constant 9 : index
    %c0_281 = arith.constant 0 : index
    %569 = vector.load %arg6[%c8_279, %c9_280, %c0_281] : memref<22x32x128xf32, #tpu.memory_space<vmem>>, vector<14x16x128xf32>
    %570 = vector.extract_strided_slice %569 {offsets = [0, 0, 0], sizes = [8, 16, 128], strides = [1, 1, 1]} : vector<14x16x128xf32> to vector<8x16x128xf32>
    %c0_282 = arith.constant 0 : index
    %c4_283 = arith.constant 4 : index
    %c0_284 = arith.constant 0 : index
    %571 = vector.load %arg3[%c0_282, %c4_283, %c0_284] : memref<7x7x128xf32, #tpu.memory_space<vmem>>, vector<1x1x128xf32>
    %572 = vector.shape_cast %571 : vector<1x1x128xf32> to vector<128xf32>
    %573 = vector.shape_cast %572 : vector<128xf32> to vector<1x1x128xf32>
    %574 = vector.broadcast %573 : vector<1x1x128xf32> to vector<8x16x128xf32>
    %575 = arith.mulf %570, %574 : vector<8x16x128xf32>
    %576 = arith.addf %568, %575 : vector<8x16x128xf32>
    %577 = vector.extract_strided_slice %569 {offsets = [1, 0, 0], sizes = [8, 16, 128], strides = [1, 1, 1]} : vector<14x16x128xf32> to vector<8x16x128xf32>
    %c1_285 = arith.constant 1 : index
    %c4_286 = arith.constant 4 : index
    %c0_287 = arith.constant 0 : index
    %578 = vector.load %arg3[%c1_285, %c4_286, %c0_287] : memref<7x7x128xf32, #tpu.memory_space<vmem>>, vector<1x1x128xf32>
    %579 = vector.shape_cast %578 : vector<1x1x128xf32> to vector<128xf32>
    %580 = vector.shape_cast %579 : vector<128xf32> to vector<1x1x128xf32>
    %581 = vector.broadcast %580 : vector<1x1x128xf32> to vector<8x16x128xf32>
    %582 = arith.mulf %577, %581 : vector<8x16x128xf32>
    %583 = arith.addf %576, %582 : vector<8x16x128xf32>
    %584 = vector.extract_strided_slice %569 {offsets = [2, 0, 0], sizes = [8, 16, 128], strides = [1, 1, 1]} : vector<14x16x128xf32> to vector<8x16x128xf32>
    %c2_288 = arith.constant 2 : index
    %c4_289 = arith.constant 4 : index
    %c0_290 = arith.constant 0 : index
    %585 = vector.load %arg3[%c2_288, %c4_289, %c0_290] : memref<7x7x128xf32, #tpu.memory_space<vmem>>, vector<1x1x128xf32>
    %586 = vector.shape_cast %585 : vector<1x1x128xf32> to vector<128xf32>
    %587 = vector.shape_cast %586 : vector<128xf32> to vector<1x1x128xf32>
    %588 = vector.broadcast %587 : vector<1x1x128xf32> to vector<8x16x128xf32>
    %589 = arith.mulf %584, %588 : vector<8x16x128xf32>
    %590 = arith.addf %583, %589 : vector<8x16x128xf32>
    %591 = vector.extract_strided_slice %569 {offsets = [3, 0, 0], sizes = [8, 16, 128], strides = [1, 1, 1]} : vector<14x16x128xf32> to vector<8x16x128xf32>
    %c3_291 = arith.constant 3 : index
    %c4_292 = arith.constant 4 : index
    %c0_293 = arith.constant 0 : index
    %592 = vector.load %arg3[%c3_291, %c4_292, %c0_293] : memref<7x7x128xf32, #tpu.memory_space<vmem>>, vector<1x1x128xf32>
    %593 = vector.shape_cast %592 : vector<1x1x128xf32> to vector<128xf32>
    %594 = vector.shape_cast %593 : vector<128xf32> to vector<1x1x128xf32>
    %595 = vector.broadcast %594 : vector<1x1x128xf32> to vector<8x16x128xf32>
    %596 = arith.mulf %591, %595 : vector<8x16x128xf32>
    %597 = arith.addf %590, %596 : vector<8x16x128xf32>
    %598 = vector.extract_strided_slice %569 {offsets = [4, 0, 0], sizes = [8, 16, 128], strides = [1, 1, 1]} : vector<14x16x128xf32> to vector<8x16x128xf32>
    %c4_294 = arith.constant 4 : index
    %c4_295 = arith.constant 4 : index
    %c0_296 = arith.constant 0 : index
    %599 = vector.load %arg3[%c4_294, %c4_295, %c0_296] : memref<7x7x128xf32, #tpu.memory_space<vmem>>, vector<1x1x128xf32>
    %600 = vector.shape_cast %599 : vector<1x1x128xf32> to vector<128xf32>
    %601 = vector.shape_cast %600 : vector<128xf32> to vector<1x1x128xf32>
    %602 = vector.broadcast %601 : vector<1x1x128xf32> to vector<8x16x128xf32>
    %603 = arith.mulf %598, %602 : vector<8x16x128xf32>
    %604 = arith.addf %597, %603 : vector<8x16x128xf32>
    %605 = vector.extract_strided_slice %569 {offsets = [5, 0, 0], sizes = [8, 16, 128], strides = [1, 1, 1]} : vector<14x16x128xf32> to vector<8x16x128xf32>
    %c5_297 = arith.constant 5 : index
    %c4_298 = arith.constant 4 : index
    %c0_299 = arith.constant 0 : index
    %606 = vector.load %arg3[%c5_297, %c4_298, %c0_299] : memref<7x7x128xf32, #tpu.memory_space<vmem>>, vector<1x1x128xf32>
    %607 = vector.shape_cast %606 : vector<1x1x128xf32> to vector<128xf32>
    %608 = vector.shape_cast %607 : vector<128xf32> to vector<1x1x128xf32>
    %609 = vector.broadcast %608 : vector<1x1x128xf32> to vector<8x16x128xf32>
    %610 = arith.mulf %605, %609 : vector<8x16x128xf32>
    %611 = arith.addf %604, %610 : vector<8x16x128xf32>
    %612 = vector.extract_strided_slice %569 {offsets = [6, 0, 0], sizes = [8, 16, 128], strides = [1, 1, 1]} : vector<14x16x128xf32> to vector<8x16x128xf32>
    %c6_300 = arith.constant 6 : index
    %c4_301 = arith.constant 4 : index
    %c0_302 = arith.constant 0 : index
    %613 = vector.load %arg3[%c6_300, %c4_301, %c0_302] : memref<7x7x128xf32, #tpu.memory_space<vmem>>, vector<1x1x128xf32>
    %614 = vector.shape_cast %613 : vector<1x1x128xf32> to vector<128xf32>
    %615 = vector.shape_cast %614 : vector<128xf32> to vector<1x1x128xf32>
    %616 = vector.broadcast %615 : vector<1x1x128xf32> to vector<8x16x128xf32>
    %617 = arith.mulf %612, %616 : vector<8x16x128xf32>
    %618 = arith.addf %611, %617 : vector<8x16x128xf32>
    %c8_303 = arith.constant 8 : index
    %c10_304 = arith.constant 10 : index
    %c0_305 = arith.constant 0 : index
    %619 = vector.load %arg6[%c8_303, %c10_304, %c0_305] : memref<22x32x128xf32, #tpu.memory_space<vmem>>, vector<14x16x128xf32>
    %620 = vector.extract_strided_slice %619 {offsets = [0, 0, 0], sizes = [8, 16, 128], strides = [1, 1, 1]} : vector<14x16x128xf32> to vector<8x16x128xf32>
    %c0_306 = arith.constant 0 : index
    %c5_307 = arith.constant 5 : index
    %c0_308 = arith.constant 0 : index
    %621 = vector.load %arg3[%c0_306, %c5_307, %c0_308] : memref<7x7x128xf32, #tpu.memory_space<vmem>>, vector<1x1x128xf32>
    %622 = vector.shape_cast %621 : vector<1x1x128xf32> to vector<128xf32>
    %623 = vector.shape_cast %622 : vector<128xf32> to vector<1x1x128xf32>
    %624 = vector.broadcast %623 : vector<1x1x128xf32> to vector<8x16x128xf32>
    %625 = arith.mulf %620, %624 : vector<8x16x128xf32>
    %626 = arith.addf %618, %625 : vector<8x16x128xf32>
    %627 = vector.extract_strided_slice %619 {offsets = [1, 0, 0], sizes = [8, 16, 128], strides = [1, 1, 1]} : vector<14x16x128xf32> to vector<8x16x128xf32>
    %c1_309 = arith.constant 1 : index
    %c5_310 = arith.constant 5 : index
    %c0_311 = arith.constant 0 : index
    %628 = vector.load %arg3[%c1_309, %c5_310, %c0_311] : memref<7x7x128xf32, #tpu.memory_space<vmem>>, vector<1x1x128xf32>
    %629 = vector.shape_cast %628 : vector<1x1x128xf32> to vector<128xf32>
    %630 = vector.shape_cast %629 : vector<128xf32> to vector<1x1x128xf32>
    %631 = vector.broadcast %630 : vector<1x1x128xf32> to vector<8x16x128xf32>
    %632 = arith.mulf %627, %631 : vector<8x16x128xf32>
    %633 = arith.addf %626, %632 : vector<8x16x128xf32>
    %634 = vector.extract_strided_slice %619 {offsets = [2, 0, 0], sizes = [8, 16, 128], strides = [1, 1, 1]} : vector<14x16x128xf32> to vector<8x16x128xf32>
    %c2_312 = arith.constant 2 : index
    %c5_313 = arith.constant 5 : index
    %c0_314 = arith.constant 0 : index
    %635 = vector.load %arg3[%c2_312, %c5_313, %c0_314] : memref<7x7x128xf32, #tpu.memory_space<vmem>>, vector<1x1x128xf32>
    %636 = vector.shape_cast %635 : vector<1x1x128xf32> to vector<128xf32>
    %637 = vector.shape_cast %636 : vector<128xf32> to vector<1x1x128xf32>
    %638 = vector.broadcast %637 : vector<1x1x128xf32> to vector<8x16x128xf32>
    %639 = arith.mulf %634, %638 : vector<8x16x128xf32>
    %640 = arith.addf %633, %639 : vector<8x16x128xf32>
    %641 = vector.extract_strided_slice %619 {offsets = [3, 0, 0], sizes = [8, 16, 128], strides = [1, 1, 1]} : vector<14x16x128xf32> to vector<8x16x128xf32>
    %c3_315 = arith.constant 3 : index
    %c5_316 = arith.constant 5 : index
    %c0_317 = arith.constant 0 : index
    %642 = vector.load %arg3[%c3_315, %c5_316, %c0_317] : memref<7x7x128xf32, #tpu.memory_space<vmem>>, vector<1x1x128xf32>
    %643 = vector.shape_cast %642 : vector<1x1x128xf32> to vector<128xf32>
    %644 = vector.shape_cast %643 : vector<128xf32> to vector<1x1x128xf32>
    %645 = vector.broadcast %644 : vector<1x1x128xf32> to vector<8x16x128xf32>
    %646 = arith.mulf %641, %645 : vector<8x16x128xf32>
    %647 = arith.addf %640, %646 : vector<8x16x128xf32>
    %648 = vector.extract_strided_slice %619 {offsets = [4, 0, 0], sizes = [8, 16, 128], strides = [1, 1, 1]} : vector<14x16x128xf32> to vector<8x16x128xf32>
    %c4_318 = arith.constant 4 : index
    %c5_319 = arith.constant 5 : index
    %c0_320 = arith.constant 0 : index
    %649 = vector.load %arg3[%c4_318, %c5_319, %c0_320] : memref<7x7x128xf32, #tpu.memory_space<vmem>>, vector<1x1x128xf32>
    %650 = vector.shape_cast %649 : vector<1x1x128xf32> to vector<128xf32>
    %651 = vector.shape_cast %650 : vector<128xf32> to vector<1x1x128xf32>
    %652 = vector.broadcast %651 : vector<1x1x128xf32> to vector<8x16x128xf32>
    %653 = arith.mulf %648, %652 : vector<8x16x128xf32>
    %654 = arith.addf %647, %653 : vector<8x16x128xf32>
    %655 = vector.extract_strided_slice %619 {offsets = [5, 0, 0], sizes = [8, 16, 128], strides = [1, 1, 1]} : vector<14x16x128xf32> to vector<8x16x128xf32>
    %c5_321 = arith.constant 5 : index
    %c5_322 = arith.constant 5 : index
    %c0_323 = arith.constant 0 : index
    %656 = vector.load %arg3[%c5_321, %c5_322, %c0_323] : memref<7x7x128xf32, #tpu.memory_space<vmem>>, vector<1x1x128xf32>
    %657 = vector.shape_cast %656 : vector<1x1x128xf32> to vector<128xf32>
    %658 = vector.shape_cast %657 : vector<128xf32> to vector<1x1x128xf32>
    %659 = vector.broadcast %658 : vector<1x1x128xf32> to vector<8x16x128xf32>
    %660 = arith.mulf %655, %659 : vector<8x16x128xf32>
    %661 = arith.addf %654, %660 : vector<8x16x128xf32>
    %662 = vector.extract_strided_slice %619 {offsets = [6, 0, 0], sizes = [8, 16, 128], strides = [1, 1, 1]} : vector<14x16x128xf32> to vector<8x16x128xf32>
    %c6_324 = arith.constant 6 : index
    %c5_325 = arith.constant 5 : index
    %c0_326 = arith.constant 0 : index
    %663 = vector.load %arg3[%c6_324, %c5_325, %c0_326] : memref<7x7x128xf32, #tpu.memory_space<vmem>>, vector<1x1x128xf32>
    %664 = vector.shape_cast %663 : vector<1x1x128xf32> to vector<128xf32>
    %665 = vector.shape_cast %664 : vector<128xf32> to vector<1x1x128xf32>
    %666 = vector.broadcast %665 : vector<1x1x128xf32> to vector<8x16x128xf32>
    %667 = arith.mulf %662, %666 : vector<8x16x128xf32>
    %668 = arith.addf %661, %667 : vector<8x16x128xf32>
    %c8_327 = arith.constant 8 : index
    %c11_328 = arith.constant 11 : index
    %c0_329 = arith.constant 0 : index
    %669 = vector.load %arg6[%c8_327, %c11_328, %c0_329] : memref<22x32x128xf32, #tpu.memory_space<vmem>>, vector<14x16x128xf32>
    %670 = vector.extract_strided_slice %669 {offsets = [0, 0, 0], sizes = [8, 16, 128], strides = [1, 1, 1]} : vector<14x16x128xf32> to vector<8x16x128xf32>
    %c0_330 = arith.constant 0 : index
    %c6_331 = arith.constant 6 : index
    %c0_332 = arith.constant 0 : index
    %671 = vector.load %arg3[%c0_330, %c6_331, %c0_332] : memref<7x7x128xf32, #tpu.memory_space<vmem>>, vector<1x1x128xf32>
    %672 = vector.shape_cast %671 : vector<1x1x128xf32> to vector<128xf32>
    %673 = vector.shape_cast %672 : vector<128xf32> to vector<1x1x128xf32>
    %674 = vector.broadcast %673 : vector<1x1x128xf32> to vector<8x16x128xf32>
    %675 = arith.mulf %670, %674 : vector<8x16x128xf32>
    %676 = arith.addf %668, %675 : vector<8x16x128xf32>
    %677 = vector.extract_strided_slice %669 {offsets = [1, 0, 0], sizes = [8, 16, 128], strides = [1, 1, 1]} : vector<14x16x128xf32> to vector<8x16x128xf32>
    %c1_333 = arith.constant 1 : index
    %c6_334 = arith.constant 6 : index
    %c0_335 = arith.constant 0 : index
    %678 = vector.load %arg3[%c1_333, %c6_334, %c0_335] : memref<7x7x128xf32, #tpu.memory_space<vmem>>, vector<1x1x128xf32>
    %679 = vector.shape_cast %678 : vector<1x1x128xf32> to vector<128xf32>
    %680 = vector.shape_cast %679 : vector<128xf32> to vector<1x1x128xf32>
    %681 = vector.broadcast %680 : vector<1x1x128xf32> to vector<8x16x128xf32>
    %682 = arith.mulf %677, %681 : vector<8x16x128xf32>
    %683 = arith.addf %676, %682 : vector<8x16x128xf32>
    %684 = vector.extract_strided_slice %669 {offsets = [2, 0, 0], sizes = [8, 16, 128], strides = [1, 1, 1]} : vector<14x16x128xf32> to vector<8x16x128xf32>
    %c2_336 = arith.constant 2 : index
    %c6_337 = arith.constant 6 : index
    %c0_338 = arith.constant 0 : index
    %685 = vector.load %arg3[%c2_336, %c6_337, %c0_338] : memref<7x7x128xf32, #tpu.memory_space<vmem>>, vector<1x1x128xf32>
    %686 = vector.shape_cast %685 : vector<1x1x128xf32> to vector<128xf32>
    %687 = vector.shape_cast %686 : vector<128xf32> to vector<1x1x128xf32>
    %688 = vector.broadcast %687 : vector<1x1x128xf32> to vector<8x16x128xf32>
    %689 = arith.mulf %684, %688 : vector<8x16x128xf32>
    %690 = arith.addf %683, %689 : vector<8x16x128xf32>
    %691 = vector.extract_strided_slice %669 {offsets = [3, 0, 0], sizes = [8, 16, 128], strides = [1, 1, 1]} : vector<14x16x128xf32> to vector<8x16x128xf32>
    %c3_339 = arith.constant 3 : index
    %c6_340 = arith.constant 6 : index
    %c0_341 = arith.constant 0 : index
    %692 = vector.load %arg3[%c3_339, %c6_340, %c0_341] : memref<7x7x128xf32, #tpu.memory_space<vmem>>, vector<1x1x128xf32>
    %693 = vector.shape_cast %692 : vector<1x1x128xf32> to vector<128xf32>
    %694 = vector.shape_cast %693 : vector<128xf32> to vector<1x1x128xf32>
    %695 = vector.broadcast %694 : vector<1x1x128xf32> to vector<8x16x128xf32>
    %696 = arith.mulf %691, %695 : vector<8x16x128xf32>
    %697 = arith.addf %690, %696 : vector<8x16x128xf32>
    %698 = vector.extract_strided_slice %669 {offsets = [4, 0, 0], sizes = [8, 16, 128], strides = [1, 1, 1]} : vector<14x16x128xf32> to vector<8x16x128xf32>
    %c4_342 = arith.constant 4 : index
    %c6_343 = arith.constant 6 : index
    %c0_344 = arith.constant 0 : index
    %699 = vector.load %arg3[%c4_342, %c6_343, %c0_344] : memref<7x7x128xf32, #tpu.memory_space<vmem>>, vector<1x1x128xf32>
    %700 = vector.shape_cast %699 : vector<1x1x128xf32> to vector<128xf32>
    %701 = vector.shape_cast %700 : vector<128xf32> to vector<1x1x128xf32>
    %702 = vector.broadcast %701 : vector<1x1x128xf32> to vector<8x16x128xf32>
    %703 = arith.mulf %698, %702 : vector<8x16x128xf32>
    %704 = arith.addf %697, %703 : vector<8x16x128xf32>
    %705 = vector.extract_strided_slice %669 {offsets = [5, 0, 0], sizes = [8, 16, 128], strides = [1, 1, 1]} : vector<14x16x128xf32> to vector<8x16x128xf32>
    %c5_345 = arith.constant 5 : index
    %c6_346 = arith.constant 6 : index
    %c0_347 = arith.constant 0 : index
    %706 = vector.load %arg3[%c5_345, %c6_346, %c0_347] : memref<7x7x128xf32, #tpu.memory_space<vmem>>, vector<1x1x128xf32>
    %707 = vector.shape_cast %706 : vector<1x1x128xf32> to vector<128xf32>
    %708 = vector.shape_cast %707 : vector<128xf32> to vector<1x1x128xf32>
    %709 = vector.broadcast %708 : vector<1x1x128xf32> to vector<8x16x128xf32>
    %710 = arith.mulf %705, %709 : vector<8x16x128xf32>
    %711 = arith.addf %704, %710 : vector<8x16x128xf32>
    %712 = vector.extract_strided_slice %669 {offsets = [6, 0, 0], sizes = [8, 16, 128], strides = [1, 1, 1]} : vector<14x16x128xf32> to vector<8x16x128xf32>
    %c6_348 = arith.constant 6 : index
    %c6_349 = arith.constant 6 : index
    %c0_350 = arith.constant 0 : index
    %713 = vector.load %arg3[%c6_348, %c6_349, %c0_350] : memref<7x7x128xf32, #tpu.memory_space<vmem>>, vector<1x1x128xf32>
    %714 = vector.shape_cast %713 : vector<1x1x128xf32> to vector<128xf32>
    %715 = vector.shape_cast %714 : vector<128xf32> to vector<1x1x128xf32>
    %716 = vector.broadcast %715 : vector<1x1x128xf32> to vector<8x16x128xf32>
    %717 = arith.mulf %712, %716 : vector<8x16x128xf32>
    %718 = arith.addf %711, %717 : vector<8x16x128xf32>
    %c0_351 = arith.constant 0 : index
    %c8_352 = arith.constant 8 : index
    %c0_353 = arith.constant 0 : index
    %c0_354 = arith.constant 0 : index
    %719 = vector.load %arg5[%c0_351, %c8_352, %c0_353, %c0_354] : memref<1x16x16x128xf32, #tpu.memory_space<vmem>>, vector<1x8x16x128xf32>
    %720 = vector.shape_cast %719 : vector<1x8x16x128xf32> to vector<8x16x128xf32>
    %721 = vector.shape_cast %718 : vector<8x16x128xf32> to vector<1x8x16x128xf32>
    tpu.vector_store %arg5[%c0_351, %c8_352, %c0_353, %c0_354], %721 {strides = array<i32>} : memref<1x16x16x128xf32, #tpu.memory_space<vmem>>, vector<1x8x16x128xf32>,
    return
  }
  func.func @transform_0(%arg0: i32, %arg1: i32) -> (i32, i32, i32, i32) {
    %c0_i32 = arith.constant 0 : i32
    %c0_i32_0 = arith.constant 0 : i32
    %c0_i32_1 = arith.constant 0 : i32
    return %arg0, %c0_i32, %c0_i32_0, %arg1 : i32, i32, i32, i32
  }
  func.func @transform_1(%arg0: i32, %arg1: i32) -> (i32, i32, i32) {
    %c0_i32 = arith.constant 0 : i32
    %c0_i32_0 = arith.constant 0 : i32
    %c0_i32_1 = arith.constant 0 : i32
    return %c0_i32, %c0_i32_0, %arg1 : i32, i32, i32
  }
  func.func @transform_2(%arg0: i32, %arg1: i32) -> (i32, i32, i32) {
    %c0_i32 = arith.constant 0 : i32
    %c0_i32_0 = arith.constant 0 : i32
    %c0_i32_1 = arith.constant 0 : i32
    return %c0_i32, %c0_i32_0, %arg1 : i32, i32, i32
  }
  func.func @transform_3(%arg0: i32, %arg1: i32) -> (i32, i32, i32, i32) {
    %c0_i32 = arith.constant 0 : i32
    %c0_i32_0 = arith.constant 0 : i32
    %c0_i32_1 = arith.constant 0 : i32
    return %arg0, %c0_i32, %c0_i32_0, %arg1 : i32, i32, i32, i32
  }
}

</mosaic_0001>

<llo_original>
// kernel: tpu_custom_call.1
$region0: #{tpu_custom_call.1}
  #allocation0 [shape = 'u32[]', space=smem, size = 0x4, offset = 0x4, fixed_abs, tag = 'smem constant byte address 0x4 - core index']
  #allocation1 [shape = 'u32[144,128]{1,0:T(1,128)}', space=vmem, size = 0x12000, scoped, tag = 'internal scratch']
  #allocation2 [shape = 'f32[22,32,128]{2,1,0:T(8,128)}', space=vmem, size = 0x58000, scoped, tag = 'scratch operand']
  %s0 = inlined_call_operand.hbm [shape: f32[2,16,16,128], index: 0, kind: input, shape index: {}]
  %s1 = inlined_call_operand.hbm [shape: f32[7,7,128], index: 1, kind: input, shape index: {}]
  %s2 = inlined_call_operand.vmem [shape: f32[1,1,128], index: 2, kind: input, shape index: {}]
  %s3 = inlined_call_operand.hbm [shape: f32[2,16,16,128], index: 3, kind: output, shape index: {}]
  %s4 = sld [smem:[#allocation0]]
  $region53: #{tpu_custom_call.1} parent=0
    _
  %s6 = ssub.s32 1, %s4
  %s7 = scalar_select 0, %s6, %s4
  $region1: #{tpu_custom_call.1} parent=0
    #allocation3 [shape = 'u8[262144]{0}', space=vmem, size = 0x40000, scoped, tag = 'input window, operand 0']
    #allocation4 [shape = 's32[2]{0}', space=sflag, size = 0x8, scoped, tag = 'scoped memory for tpu_custom_call.1']
    #allocation5 [shape = 's32[2]{0}', space=sflag, size = 0x8, scoped, tag = 'scoped memory for tpu_custom_call.1']
    #allocation6 [shape = 'u8[28672]{0}', space=vmem, size = 0x7000, scoped, tag = 'input window, operand 1, single buffered']
    #allocation7 [shape = 's32[1]{0}', space=sflag, size = 0x4, scoped, tag = 'scoped memory for tpu_custom_call.1']
    #allocation8 [shape = 'u8[262144]{0}', space=vmem, size = 0x40000, scoped, tag = 'output window, operand 0']
    %8 = vsyncpa [#allocation4], 0
    %s9 = scalar_lea.sflag [#allocation4], 1
    %10 = vsyncpa %s9, 0
    %11 = vsyncpa [#allocation7], 0
    %12 = vsyncpa [#allocation5], 0
    %s13 = scalar_lea.sflag [#allocation5], 1
    %14 = vsyncpa %s13, 0
    loop: start=0, step=1, limit=4
    $region2: #{tpu_custom_call.1} parent=1 // loop_pre_header
      _
    $region3: #{tpu_custom_call.1} parent=1 // loop_header
      %s16 = sphi 0, %s20
      %p17 = scmp.ge.s32.totalorder %s16, 4
      %s23 = sphi 0, %s35
      %s24 = sphi 0, %s31
      %s25 = sphi 0, %s23
      %s26 = sphi 0, %s24
      %s27 = sphi 0, %s25
      %s28 = sphi 0, %s26
      %s40 = sphi 0, %s42
      %s43 = sphi 0, %s40
      %s44 = sphi 0, %s43
      %s60 = sphi 0, %s44
      %s66 = sphi 0, %s68
      %s69 = sphi 0, %s66
      %s70 = sphi 0, %s69
      %s86 = sphi 0, %s70
      %s92 = sphi 0, %s94
      %s95 = sphi 0, %s92
      %s96 = sphi 0, %s95
      %s112 = sphi 0, %s96
      %s120 = sphi 0, %s122
      %s123 = sphi 0, %s120
      %s124 = sphi 0, %s123
      %s140 = sphi 0, %s124
    $region4: #{tpu_custom_call.1} parent=1 // loop_header_branch
      %19 = sbr.rel (%p17) target = $region8
    $region5: #{tpu_custom_call.1} parent=1 // loop_body
      %s21 = ssub.s32 %s16, 1
      %s22 = ssub.s32 %s16, 2
      %s29 = sadd.s32 1, %s24
      %p30 = scmp.ge.s32.totalorder %s29, 1
      %s31 = scalar_select %p30, 0, %s29
      %s32 = sadd.s32 1, %s23
      %s33 = scalar_select %p30, %s32, %s23
      %p34 = scmp.ge.s32.totalorder %s33, 2
      %s35 = scalar_select %p34, 0, %s33
      %s36 = ssub.s32 %s23, %s35
      %s37 = ssub.s32 %s24, %s31
      %s38 = sor.u32 %s36, %s37
      %p39 = scmp.eq.s32.totalorder %s38, 0
      %s41 = sadd.s32 %s40, 1
      %s42 = scalar_select %p39, %s40, %s41
      %p45 = pneg %p39
      %p46 = scmp.eq.s32.totalorder %s16, 1
      %p47 = por %p45, %p46
      %p48 = scmp.ne.s32.totalorder %s40, %s43
      %p49 = scmp.eq.s32.totalorder %s16, 0
      %p50 = por %p48, %p49
      %p51 = scmp.ne.s32.totalorder %s40, %s43
      %p52 = scmp.eq.s32.totalorder %s21, 1
      %p53 = por %p51, %p52
      %p54 = scmp.ne.s32.totalorder %s43, %s44
      %p55 = scmp.eq.s32.totalorder %s21, 0
      %p56 = por %p54, %p55
      %p57 = scmp.ne.s32.totalorder %s43, %s44
      %p58 = scmp.eq.s32.totalorder %s22, 1
      %p59 = por %p57, %p58
      %p61 = scmp.ne.s32.totalorder %s44, %s60
      %p62 = scmp.eq.s32.totalorder %s22, 0
      %p63 = por %p61, %p62
      %s64 = ssub.s32 %s24, %s31
      %p65 = scmp.eq.s32.totalorder %s64, 0
      %s67 = sadd.s32 %s66, 1
      %s68 = scalar_select %p65, %s66, %s67
      %p71 = pneg %p65
      %p72 = scmp.eq.s32.totalorder %s16, 1
      %p73 = por %p71, %p72
      %p74 = scmp.ne.s32.totalorder %s66, %s69
      %p75 = scmp.eq.s32.totalorder %s16, 0
      %p76 = por %p74, %p75
      %p77 = scmp.ne.s32.totalorder %s66, %s69
      %p78 = scmp.eq.s32.totalorder %s21, 1
      %p79 = por %p77, %p78
      %p80 = scmp.ne.s32.totalorder %s69, %s70
      %p81 = scmp.eq.s32.totalorder %s21, 0
      %p82 = por %p80, %p81
      %p83 = scmp.ne.s32.totalorder %s69, %s70
      %p84 = scmp.eq.s32.totalorder %s22, 1
      %p85 = por %p83, %p84
      %p87 = scmp.ne.s32.totalorder %s70, %s86
      %p88 = scmp.eq.s32.totalorder %s22, 0
      %p89 = por %p87, %p88
      %s90 = ssub.s32 %s24, %s31
      %p91 = scmp.eq.s32.totalorder %s90, 0
      %s93 = sadd.s32 %s92, 1
      %s94 = scalar_select %p91, %s92, %s93
      %p97 = pneg %p91
      %p98 = scmp.eq.s32.totalorder %s16, 1
      %p99 = por %p97, %p98
      %p100 = scmp.ne.s32.totalorder %s92, %s95
      %p101 = scmp.eq.s32.totalorder %s16, 0
      %p102 = por %p100, %p101
      %p103 = scmp.ne.s32.totalorder %s92, %s95
      %p104 = scmp.eq.s32.totalorder %s21, 1
      %p105 = por %p103, %p104
      %p106 = scmp.ne.s32.totalorder %s95, %s96
      %p107 = scmp.eq.s32.totalorder %s21, 0
      %p108 = por %p106, %p107
      %p109 = scmp.ne.s32.totalorder %s95, %s96
      %p110 = scmp.eq.s32.totalorder %s22, 1
      %p111 = por %p109, %p110
      %p113 = scmp.ne.s32.totalorder %s96, %s112
      %p114 = scmp.eq.s32.totalorder %s22, 0
      %p115 = por %p113, %p114
      %s116 = ssub.s32 %s23, %s35
      %s117 = ssub.s32 %s24, %s31
      %s118 = sor.u32 %s116, %s117
      %p119 = scmp.eq.s32.totalorder %s118, 0
      %s121 = sadd.s32 %s120, 1
      %s122 = scalar_select %p119, %s120, %s121
      %p125 = pneg %p119
      %p126 = scmp.eq.s32.totalorder %s16, 1
      %p127 = por %p125, %p126
      %p128 = scmp.ne.s32.totalorder %s120, %s123
      %p129 = scmp.eq.s32.totalorder %s16, 0
      %p130 = por %p128, %p129
      %p131 = scmp.ne.s32.totalorder %s120, %s123
      %p132 = scmp.eq.s32.totalorder %s21, 1
      %p133 = por %p131, %p132
      %p134 = scmp.ne.s32.totalorder %s123, %s124
      %p135 = scmp.eq.s32.totalorder %s21, 0
      %p136 = por %p134, %p135
      %p137 = scmp.ne.s32.totalorder %s123, %s124
      %p138 = scmp.eq.s32.totalorder %s22, 1
      %p139 = por %p137, %p138
      %p141 = scmp.ne.s32.totalorder %s124, %s140
      %p142 = scmp.eq.s32.totalorder %s22, 0
      %p143 = por %p141, %p142
      %p144 = scmp.le.s32.totalorder 1, %s16
      %p145 = scmp.lt.s32.totalorder %s16, 3
      %p146 = pnand %p144, %p145
      %p147 = pneg %p146
      // Predicated region
      $region9: #{tpu_custom_call.1} parent=5 // pred_check
        _
      $region10: #{tpu_custom_call.1} parent=5 // pred_check_branch
        %149 = sbr.rel (%p146) target = $region12
      $region11: #{tpu_custom_call.1} parent=5 // pred_region
        %s150 = ssub.s32 %s16, 1
        // Predicated region
        $region13: #{tpu_custom_call.1} parent=11 // pred_check
          %p151 = pneg %p82
        $region14: #{tpu_custom_call.1} parent=11 // pred_check_branch
          %153 = sbr.rel (%p151) target = $region16
        $region15: #{tpu_custom_call.1} parent=11 // pred_region
          %s155 = ssub.s32 896, 896
          %156 = vsyncadd [#allocation7], %s155
          %s157 = smul.addr %s26, 128
          %s158 = scalar_lea.hbm %s1, %s157
          %s159 = sshll.u32 [#allocation6], 4
          %s160 = int_to_ptr.vmem [resolvable:$true] %s159
          %165 = dma.hbm_to_vmem [thread:$0]  %s158, 896, %s160, [#allocation7], 128, 128, 8
        $region16: #{tpu_custom_call.1} parent=11 // pred_fallthru
          _
        // Predicated region
        $region17: #{tpu_custom_call.1} parent=11 // pred_check
          %p166 = pneg %p108
        $region18: #{tpu_custom_call.1} parent=11 // pred_check_branch
          %168 = sbr.rel (%p166) target = $region20
        $region19: #{tpu_custom_call.1} parent=11 // pred_region
          %p169 = scmp.lt.s32.totalorder %s26, 0
          %s170 = scalar_select %p169, %s26, 0
          %s171 = scalar_lea.vmem %s2, %s170
        $region20: #{tpu_custom_call.1} parent=11 // pred_fallthru
          _
      $region12: #{tpu_custom_call.1} parent=5 // pred_fallthru
        _
      %p172 = scmp.lt.s32.totalorder %s16, 2
      // Predicated region
      $region21: #{tpu_custom_call.1} parent=5 // pred_check
        %p173 = pneg %p172
      $region22: #{tpu_custom_call.1} parent=5 // pred_check_branch
        %175 = sbr.rel (%p173) target = $region24
      $region23: #{tpu_custom_call.1} parent=5 // pred_region
        // Predicated region
        $region25: #{tpu_custom_call.1} parent=23 // pred_check
          %p176 = pneg %p50
        $region26: #{tpu_custom_call.1} parent=23 // pred_check_branch
          %178 = sbr.rel (%p176) target = $region28
        $region27: #{tpu_custom_call.1} parent=23 // pred_region
          %s179 = sand.u32 %s40, 1
          %s180 = scalar_lea.sflag [#allocation4], %s179
          %s181 = sand.u32 %s40, 1
          %s182 = smul.addr %s181, 256
          %s183 = scalar_lea.vmem [#allocation3], %s182
          %s185 = ssub.s32 4096, 4096
          %186 = vsyncadd %s180, %s185
          %s187 = smul.addr %s23, 32
          %s188 = sadd.s32 %s24, %s187
          %s189 = smul.addr %s188, 128
          %s190 = scalar_lea.hbm %s0, %s189
          %s191 = sshll.u32 %s183, 4
          %s192 = int_to_ptr.vmem [resolvable:$true] %s191
          %197 = dma.hbm_to_vmem [thread:$0]  %s190, 4096, %s192, %s180, 128, 128, 8
        $region28: #{tpu_custom_call.1} parent=23 // pred_fallthru
          _
      $region24: #{tpu_custom_call.1} parent=5 // pred_fallthru
        _
      %p198 = scmp.le.s32.totalorder 1, %s16
      %p199 = scmp.lt.s32.totalorder %s16, 3
      %p200 = pnand %p198, %p199
      %p201 = pneg %p200
      // Predicated region
      $region29: #{tpu_custom_call.1} parent=5 // pred_check
        _
      $region30: #{tpu_custom_call.1} parent=5 // pred_check_branch
        %203 = sbr.rel (%p200) target = $region32
      $region31: #{tpu_custom_call.1} parent=5 // pred_region
        %s204 = ssub.s32 %s16, 1
        %s205 = sand.u32 %s43, 1
        %s206 = scalar_lea.sflag [#allocation4], %s205
        %s207 = sand.u32 %s43, 1
        %s208 = smul.addr %s207, 256
        %s209 = scalar_lea.vmem [#allocation3], %s208
        // Predicated region
        $region33: #{tpu_custom_call.1} parent=31 // pred_check
          %p210 = pneg %p56
        $region34: #{tpu_custom_call.1} parent=31 // pred_check_branch
          %212 = sbr.rel (%p210) target = $region36
        $region35: #{tpu_custom_call.1} parent=31 // pred_region
          %213 = dma.done %s206, 4096
        $region36: #{tpu_custom_call.1} parent=31 // pred_fallthru
          _
        // Predicated region
        $region37: #{tpu_custom_call.1} parent=31 // pred_check
          %p214 = pneg %p82
        $region38: #{tpu_custom_call.1} parent=31 // pred_check_branch
          %216 = sbr.rel (%p214) target = $region40
        $region39: #{tpu_custom_call.1} parent=31 // pred_region
          %217 = dma.done [#allocation7], 896
        $region40: #{tpu_custom_call.1} parent=31 // pred_fallthru
          _
        %s218 = sand.u32 %s43, 1
        %s219 = scalar_lea.sflag [#allocation4], %s218
        %s220 = sand.u32 %s43, 1
        %s221 = smul.addr %s220, 256
        %s222 = scalar_lea.vmem [#allocation3], %s221
        %p223 = pneg %p56
        %p224 = pneg %p53
        %p225 = pneg %p82
        %p226 = pneg %p79
        %p227 = scmp.lt.s32.totalorder %s26, 0
        %s228 = scalar_select %p227, %s26, 0
        %s229 = scalar_lea.vmem %s2, %s228
        %p230 = pneg %p108
        %p231 = pneg %p105
        %p232 = pneg %p136
        %p233 = pneg %p133
        %s234 = sand.u32 %s123, 1
        %s235 = scalar_lea.sflag [#allocation5], %s234
        %s236 = sand.u32 %s123, 1
        %s237 = smul.addr %s236, 256
        %s238 = scalar_lea.vmem [#allocation8], %s237
        %p239 = scmp.lt.s32.totalorder %s26, 0
        %s240 = scalar_select %p239, %s26, 0
        %s241 = scalar_lea.vmem %s2, %s240
        %242 = vst [vmem:[#allocation2] sm:$0xff] 0.0
        %243 = vst [vmem:[#allocation2 + $0x8] sm:$0xff] 0.0
        %244 = vst [vmem:[#allocation2 + $0x10] sm:$0xff] 0.0
        %245 = vst [vmem:[#allocation2 + $0x18] sm:$0xff] 0.0
        %246 = vst [vmem:[#allocation2 + $0x20] sm:$0xff] 0.0
        %247 = vst [vmem:[#allocation2 + $0x28] sm:$0xff] 0.0
        %248 = vst [vmem:[#allocation2 + $0x30] sm:$0xff] 0.0
        %249 = vst [vmem:[#allocation2 + $0x38] sm:$0xff] 0.0
        %250 = vst [vmem:[#allocation2 + $0x40] sm:$0xff] 0.0
        %251 = vst [vmem:[#allocation2 + $0x48] sm:$0xff] 0.0
        %252 = vst [vmem:[#allocation2 + $0x50] sm:$0xff] 0.0
        %253 = vst [vmem:[#allocation2 + $0x58] sm:$0xff] 0.0
        %s254 = scalar_lea.vmem [#allocation2], 608
        %255 = vst [vmem:[%s254] sm:$0xff] 0.0
        %256 = vst [vmem:[%s254 + $0x8] sm:$0xff] 0.0
        %257 = vst [vmem:[%s254 + $0x10] sm:$0xff] 0.0
        %258 = vst [vmem:[%s254 + $0x18] sm:$0xff] 0.0
        %259 = vst [vmem:[%s254 + $0x20] sm:$0xff] 0.0
        %260 = vst [vmem:[%s254 + $0x28] sm:$0xff] 0.0
        %261 = vst [vmem:[%s254 + $0x30] sm:$0xff] 0.0
        %262 = vst [vmem:[%s254 + $0x38] sm:$0xff] 0.0
        %263 = vst [vmem:[%s254 + $0x40] sm:$0xff] 0.0
        %264 = vst [vmem:[%s254 + $0x48] sm:$0xff] 0.0
        %265 = vst [vmem:[%s254 + $0x50] sm:$0xff] 0.0
        %266 = vst [vmem:[%s254 + $0x58] sm:$0xff] 0.0
        %s267 = scalar_lea.vmem [#allocation2], 96
        %268 = vst [vmem:[%s267] sm:$0xff] 0.0
        %269 = vst [vmem:[%s267 + $0x20] sm:$0xff] 0.0
        %270 = vst [vmem:[%s267 + $0x40] sm:$0xff] 0.0
        %271 = vst [vmem:[%s267 + $0x60] sm:$0xff] 0.0
        %272 = vst [vmem:[%s267 + $0x80] sm:$0xff] 0.0
        %273 = vst [vmem:[%s267 + $0xa0] sm:$0xff] 0.0
        %274 = vst [vmem:[%s267 + $0xc0] sm:$0xff] 0.0
        %275 = vst [vmem:[%s267 + $0xe0] sm:$0xff] 0.0
        %276 = vst [vmem:[%s267 + $0x100] sm:$0xff] 0.0
        %277 = vst [vmem:[%s267 + $0x120] sm:$0xff] 0.0
        %278 = vst [vmem:[%s267 + $0x140] sm:$0xff] 0.0
        %279 = vst [vmem:[%s267 + $0x160] sm:$0xff] 0.0
        %280 = vst [vmem:[%s267 + $0x180] sm:$0xff] 0.0
        %281 = vst [vmem:[%s267 + $0x1a0] sm:$0xff] 0.0
        %282 = vst [vmem:[%s267 + $0x1c0] sm:$0xff] 0.0
        %283 = vst [vmem:[%s267 + $0x1e0] sm:$0xff] 0.0
        %284 = vst [vmem:[%s267 + $0x18] sm:$0xff] 0.0
        %285 = vst [vmem:[%s267 + $0x38] sm:$0xff] 0.0
        %286 = vst [vmem:[%s267 + $0x58] sm:$0xff] 0.0
        %287 = vst [vmem:[%s267 + $0x78] sm:$0xff] 0.0
        %288 = vst [vmem:[%s267 + $0x98] sm:$0xff] 0.0
        %289 = vst [vmem:[%s267 + $0xb8] sm:$0xff] 0.0
        %290 = vst [vmem:[%s267 + $0xd8] sm:$0xff] 0.0
        %291 = vst [vmem:[%s267 + $0xf8] sm:$0xff] 0.0
        %292 = vst [vmem:[%s267 + $0x118] sm:$0xff] 0.0
        %293 = vst [vmem:[%s267 + $0x138] sm:$0xff] 0.0
        %294 = vst [vmem:[%s267 + $0x158] sm:$0xff] 0.0
        %295 = vst [vmem:[%s267 + $0x178] sm:$0xff] 0.0
        %296 = vst [vmem:[%s267 + $0x198] sm:$0xff] 0.0
        %297 = vst [vmem:[%s267 + $0x1b8] sm:$0xff] 0.0
        %298 = vst [vmem:[%s267 + $0x1d8] sm:$0xff] 0.0
        %299 = vst [vmem:[%s267 + $0x1f8] sm:$0xff] 0.0
        %v300 = vld [vmem:[%s209] sm:$0xff]
        %v301 = vld [vmem:[%s209 + $0x8] sm:$0xff]
        %v302 = vld [vmem:[%s209 + $0x10] sm:$0xff]
        %v303 = vld [vmem:[%s209 + $0x18] sm:$0xff]
        %v304 = vld [vmem:[%s209 + $0x20] sm:$0xff]
        %v305 = vld [vmem:[%s209 + $0x28] sm:$0xff]
        %v306 = vld [vmem:[%s209 + $0x30] sm:$0xff]
        %v307 = vld [vmem:[%s209 + $0x38] sm:$0xff]
        %v308 = vld [vmem:[%s209 + $0x40] sm:$0xff]
        %v309 = vld [vmem:[%s209 + $0x48] sm:$0xff]
        %v310 = vld [vmem:[%s209 + $0x50] sm:$0xff]
        %v311 = vld [vmem:[%s209 + $0x58] sm:$0xff]
        %v312 = vld [vmem:[%s209 + $0x60] sm:$0xff]
        %v313 = vld [vmem:[%s209 + $0x68] sm:$0xff]
        %v314 = vld [vmem:[%s209 + $0x70] sm:$0xff]
        %v315 = vld [vmem:[%s209 + $0x78] sm:$0xff]
        %v316 = vld [vmem:[%s209 + $0x80] sm:$0xff]
        %v317 = vld [vmem:[%s209 + $0x88] sm:$0xff]
        %v318 = vld [vmem:[%s209 + $0x90] sm:$0xff]
        %v319 = vld [vmem:[%s209 + $0x98] sm:$0xff]
        %v320 = vld [vmem:[%s209 + $0xa0] sm:$0xff]
        %v321 = vld [vmem:[%s209 + $0xa8] sm:$0xff]
        %v322 = vld [vmem:[%s209 + $0xb0] sm:$0xff]
        %v323 = vld [vmem:[%s209 + $0xb8] sm:$0xff]
        %v324 = vld [vmem:[%s209 + $0xc0] sm:$0xff]
        %v325 = vld [vmem:[%s209 + $0xc8] sm:$0xff]
        %v326 = vld [vmem:[%s209 + $0xd0] sm:$0xff]
        %v327 = vld [vmem:[%s209 + $0xd8] sm:$0xff]
        %v328 = vld [vmem:[%s209 + $0xe0] sm:$0xff]
        %v329 = vld [vmem:[%s209 + $0xe8] sm:$0xff]
        %v330 = vld [vmem:[%s209 + $0xf0] sm:$0xff]
        %v331 = vld [vmem:[%s209 + $0xf8] sm:$0xff]
        %332 = vst [vmem:[%s267 + $0x8] sm:$0xff] %v300
        %333 = vst [vmem:[%s267 + $0x10] sm:$0xff] %v301
        %334 = vst [vmem:[%s267 + $0x28] sm:$0xff] %v302
        %335 = vst [vmem:[%s267 + $0x30] sm:$0xff] %v303
        %336 = vst [vmem:[%s267 + $0x48] sm:$0xff] %v304
        %337 = vst [vmem:[%s267 + $0x50] sm:$0xff] %v305
        %338 = vst [vmem:[%s267 + $0x68] sm:$0xff] %v306
        %339 = vst [vmem:[%s267 + $0x70] sm:$0xff] %v307
        %340 = vst [vmem:[%s267 + $0x88] sm:$0xff] %v308
        %341 = vst [vmem:[%s267 + $0x90] sm:$0xff] %v309
        %342 = vst [vmem:[%s267 + $0xa8] sm:$0xff] %v310
        %343 = vst [vmem:[%s267 + $0xb0] sm:$0xff] %v311
        %344 = vst [vmem:[%s267 + $0xc8] sm:$0xff] %v312
        %345 = vst [vmem:[%s267 + $0xd0] sm:$0xff] %v313
        %346 = vst [vmem:[%s267 + $0xe8] sm:$0xff] %v314
        %347 = vst [vmem:[%s267 + $0xf0] sm:$0xff] %v315
        %348 = vst [vmem:[%s267 + $0x108] sm:$0xff] %v316
        %349 = vst [vmem:[%s267 + $0x110] sm:$0xff] %v317
        %350 = vst [vmem:[%s267 + $0x128] sm:$0xff] %v318
        %351 = vst [vmem:[%s267 + $0x130] sm:$0xff] %v319
        %352 = vst [vmem:[%s267 + $0x148] sm:$0xff] %v320
        %353 = vst [vmem:[%s267 + $0x150] sm:$0xff] %v321
        %354 = vst [vmem:[%s267 + $0x168] sm:$0xff] %v322
        %355 = vst [vmem:[%s267 + $0x170] sm:$0xff] %v323
        %356 = vst [vmem:[%s267 + $0x188] sm:$0xff] %v324
        %357 = vst [vmem:[%s267 + $0x190] sm:$0xff] %v325
        %358 = vst [vmem:[%s267 + $0x1a8] sm:$0xff] %v326
        %359 = vst [vmem:[%s267 + $0x1b0] sm:$0xff] %v327
        %360 = vst [vmem:[%s267 + $0x1c8] sm:$0xff] %v328
        %361 = vst [vmem:[%s267 + $0x1d0] sm:$0xff] %v329
        %362 = vst [vmem:[%s267 + $0x1e8] sm:$0xff] %v330
        %363 = vst [vmem:[%s267 + $0x1f0] sm:$0xff] %v331
        %v364 = vld [vmem:[%s241] sm:$0x1]
        %v366 = vlaneseq
        %v367 = vshrl.u32 %v366, 7
        %v368 = vsub.s32 0, %v367
        %v369 = vrot.slane %v364, %v368
        %v371 = vld [vmem:[#allocation2 + $0x5] sm:$0xff]
        %v372 = vld [vmem:[#allocation2 + $0xd] sm:$0xff]
        %v373 = vld [vmem:[#allocation2 + $0x25] sm:$0xff]
        %v374 = vld [vmem:[#allocation2 + $0x2d] sm:$0xff]
        %v375 = vld [vmem:[#allocation2 + $0x45] sm:$0xff]
        %v376 = vld [vmem:[#allocation2 + $0x4d] sm:$0xff]
        %v377 = vld [vmem:[#allocation2 + $0x65] sm:$0xff]
        %v378 = vld [vmem:[#allocation2 + $0x6d] sm:$0xff]
        %v379 = vld [vmem:[#allocation2 + $0x85] sm:$0xff]
        %v380 = vld [vmem:[#allocation2 + $0x8d] sm:$0xff]
        %v381 = vld [vmem:[#allocation2 + $0xa5] sm:$0xff]
        %v382 = vld [vmem:[#allocation2 + $0xad] sm:$0xff]
        %v383 = vld [vmem:[#allocation2 + $0xc5] sm:$0xff]
        %v384 = vld [vmem:[#allocation2 + $0xcd] sm:$0xff]
        %v385 = vld [vmem:[#allocation2 + $0xe5] sm:$0xff]
        %v386 = vld [vmem:[#allocation2 + $0xed] sm:$0xff]
        %v387 = vld [vmem:[#allocation2 + $0x105] sm:$0xff]
        %v388 = vld [vmem:[#allocation2 + $0x10d] sm:$0xff]
        %v389 = vld [vmem:[#allocation2 + $0x125] sm:$0xff]
        %v390 = vld [vmem:[#allocation2 + $0x12d] sm:$0xff]
        %v391 = vld [vmem:[#allocation2 + $0x145] sm:$0xff]
        %v392 = vld [vmem:[#allocation2 + $0x14d] sm:$0xff]
        %v393 = vld [vmem:[#allocation2 + $0x165] sm:$0xff]
        %v394 = vld [vmem:[#allocation2 + $0x16d] sm:$0xff]
        %v395 = vld [vmem:[#allocation2 + $0x185] sm:$0xff]
        %v396 = vld [vmem:[#allocation2 + $0x18d] sm:$0xff]
        %v397 = vld [vmem:[#allocation2 + $0x1a5] sm:$0xff]
        %v398 = vld [vmem:[#allocation2 + $0x1ad] sm:$0xff]
        %v399 = vld [vmem:[#allocation6] sm:$0x1]
        %v400 = vlaneseq
        %v401 = vshrl.u32 %v400, 7
        %v402 = vsub.s32 0, %v401
        %v403 = vrot.slane %v399, %v402
        %v404 = vmul.f32 %v371, %v403
        %v405 = vmul.f32 %v372, %v403
        %v406 = vmul.f32 %v373, %v403
        %v407 = vmul.f32 %v374, %v403
        %v408 = vmul.f32 %v375, %v403
        %v409 = vmul.f32 %v376, %v403
        %v410 = vmul.f32 %v377, %v403
        %v411 = vmul.f32 %v378, %v403
        %v412 = vmul.f32 %v379, %v403
        %v413 = vmul.f32 %v380, %v403
        %v414 = vmul.f32 %v381, %v403
        %v415 = vmul.f32 %v382, %v403
        %v416 = vmul.f32 %v383, %v403
        %v417 = vmul.f32 %v384, %v403
        %v418 = vmul.f32 %v385, %v403
        %v419 = vmul.f32 %v386, %v403
        %v420 = vadd.f32 %v369, %v404
        %v421 = vadd.f32 %v369, %v405
        %v422 = vadd.f32 %v369, %v406
        %v423 = vadd.f32 %v369, %v407
        %v424 = vadd.f32 %v369, %v408
        %v425 = vadd.f32 %v369, %v409
        %v426 = vadd.f32 %v369, %v410
        %v427 = vadd.f32 %v369, %v411
        %v428 = vadd.f32 %v369, %v412
        %v429 = vadd.f32 %v369, %v413
        %v430 = vadd.f32 %v369, %v414
        %v431 = vadd.f32 %v369, %v415
        %v432 = vadd.f32 %v369, %v416
        %v433 = vadd.f32 %v369, %v417
        %v434 = vadd.f32 %v369, %v418
        %v435 = vadd.f32 %v369, %v419
        %s436 = scalar_lea.vmem [#allocation6], 8
        %v437 = vld [vmem:[%s436] sm:$0x1]
        %v438 = vlaneseq
        %v439 = vshrl.u32 %v438, 7
        %v440 = vsub.s32 0, %v439
        %v441 = vrot.slane %v437, %v440
        %v442 = vmul.f32 %v373, %v441
        %v443 = vmul.f32 %v374, %v441
        %v444 = vmul.f32 %v375, %v441
        %v445 = vmul.f32 %v376, %v441
        %v446 = vmul.f32 %v377, %v441
        %v447 = vmul.f32 %v378, %v441
        %v448 = vmul.f32 %v379, %v441
        %v449 = vmul.f32 %v380, %v441
        %v450 = vmul.f32 %v381, %v441
        %v451 = vmul.f32 %v382, %v441
        %v452 = vmul.f32 %v383, %v441
        %v453 = vmul.f32 %v384, %v441
        %v454 = vmul.f32 %v385, %v441
        %v455 = vmul.f32 %v386, %v441
        %v456 = vmul.f32 %v387, %v441
        %v457 = vmul.f32 %v388, %v441
        %v458 = vadd.f32 %v420, %v442
        %v459 = vadd.f32 %v421, %v443
        %v460 = vadd.f32 %v422, %v444
        %v461 = vadd.f32 %v423, %v445
        %v462 = vadd.f32 %v424, %v446
        %v463 = vadd.f32 %v425, %v447
        %v464 = vadd.f32 %v426, %v448
        %v465 = vadd.f32 %v427, %v449
        %v466 = vadd.f32 %v428, %v450
        %v467 = vadd.f32 %v429, %v451
        %v468 = vadd.f32 %v430, %v452
        %v469 = vadd.f32 %v431, %v453
        %v470 = vadd.f32 %v432, %v454
        %v471 = vadd.f32 %v433, %v455
        %v472 = vadd.f32 %v434, %v456
        %v473 = vadd.f32 %v435, %v457
        %s474 = scalar_lea.vmem [#allocation6], 16
        %v475 = vld [vmem:[%s474] sm:$0x1]
        %v476 = vlaneseq
        %v477 = vshrl.u32 %v476, 7
        %v478 = vsub.s32 0, %v477
        %v479 = vrot.slane %v475, %v478
        %v480 = vmul.f32 %v375, %v479
        %v481 = vmul.f32 %v376, %v479
        %v482 = vmul.f32 %v377, %v479
        %v483 = vmul.f32 %v378, %v479
        %v484 = vmul.f32 %v379, %v479
        %v485 = vmul.f32 %v380, %v479
        %v486 = vmul.f32 %v381, %v479
        %v487 = vmul.f32 %v382, %v479
        %v488 = vmul.f32 %v383, %v479
        %v489 = vmul.f32 %v384, %v479
        %v490 = vmul.f32 %v385, %v479
        %v491 = vmul.f32 %v386, %v479
        %v492 = vmul.f32 %v387, %v479
        %v493 = vmul.f32 %v388, %v479
        %v494 = vmul.f32 %v389, %v479
        %v495 = vmul.f32 %v390, %v479
        %v496 = vadd.f32 %v458, %v480
        %v497 = vadd.f32 %v459, %v481
        %v498 = vadd.f32 %v460, %v482
        %v499 = vadd.f32 %v461, %v483
        %v500 = vadd.f32 %v462, %v484
        %v501 = vadd.f32 %v463, %v485
        %v502 = vadd.f32 %v464, %v486
        %v503 = vadd.f32 %v465, %v487
        %v504 = vadd.f32 %v466, %v488
        %v505 = vadd.f32 %v467, %v489
        %v506 = vadd.f32 %v468, %v490
        %v507 = vadd.f32 %v469, %v491
        %v508 = vadd.f32 %v470, %v492
        %v509 = vadd.f32 %v471, %v493
        %v510 = vadd.f32 %v472, %v494
        %v511 = vadd.f32 %v473, %v495
        %s512 = scalar_lea.vmem [#allocation6], 24
        %v513 = vld [vmem:[%s512] sm:$0x1]
        %v514 = vlaneseq
        %v515 = vshrl.u32 %v514, 7
        %v516 = vsub.s32 0, %v515
        %v517 = vrot.slane %v513, %v516
        %v518 = vmul.f32 %v377, %v517
        %v519 = vmul.f32 %v378, %v517
        %v520 = vmul.f32 %v379, %v517
        %v521 = vmul.f32 %v380, %v517
        %v522 = vmul.f32 %v381, %v517
        %v523 = vmul.f32 %v382, %v517
        %v524 = vmul.f32 %v383, %v517
        %v525 = vmul.f32 %v384, %v517
        %v526 = vmul.f32 %v385, %v517
        %v527 = vmul.f32 %v386, %v517
        %v528 = vmul.f32 %v387, %v517
        %v529 = vmul.f32 %v388, %v517
        %v530 = vmul.f32 %v389, %v517
        %v531 = vmul.f32 %v390, %v517
        %v532 = vmul.f32 %v391, %v517
        %v533 = vmul.f32 %v392, %v517
        %v534 = vadd.f32 %v496, %v518
        %v535 = vadd.f32 %v497, %v519
        %v536 = vadd.f32 %v498, %v520
        %v537 = vadd.f32 %v499, %v521
        %v538 = vadd.f32 %v500, %v522
        %v539 = vadd.f32 %v501, %v523
        %v540 = vadd.f32 %v502, %v524
        %v541 = vadd.f32 %v503, %v525
        %v542 = vadd.f32 %v504, %v526
        %v543 = vadd.f32 %v505, %v527
        %v544 = vadd.f32 %v506, %v528
        %v545 = vadd.f32 %v507, %v529
        %v546 = vadd.f32 %v508, %v530
        %v547 = vadd.f32 %v509, %v531
        %v548 = vadd.f32 %v510, %v532
        %v549 = vadd.f32 %v511, %v533
        %s550 = scalar_lea.vmem [#allocation6], 32
        %v551 = vld [vmem:[%s550] sm:$0x1]
        %v552 = vlaneseq
        %v553 = vshrl.u32 %v552, 7
        %v554 = vsub.s32 0, %v553
        %v555 = vrot.slane %v551, %v554
        %v556 = vmul.f32 %v379, %v555
        %v557 = vmul.f32 %v380, %v555
        %v558 = vmul.f32 %v381, %v555
        %v559 = vmul.f32 %v382, %v555
        %v560 = vmul.f32 %v383, %v555
        %v561 = vmul.f32 %v384, %v555
        %v562 = vmul.f32 %v385, %v555
        %v563 = vmul.f32 %v386, %v555
        %v564 = vmul.f32 %v387, %v555
        %v565 = vmul.f32 %v388, %v555
        %v566 = vmul.f32 %v389, %v555
        %v567 = vmul.f32 %v390, %v555
        %v568 = vmul.f32 %v391, %v555
        %v569 = vmul.f32 %v392, %v555
        %v570 = vmul.f32 %v393, %v555
        %v571 = vmul.f32 %v394, %v555
        %v572 = vadd.f32 %v534, %v556
        %v573 = vadd.f32 %v535, %v557
        %v574 = vadd.f32 %v536, %v558
        %v575 = vadd.f32 %v537, %v559
        %v576 = vadd.f32 %v538, %v560
        %v577 = vadd.f32 %v539, %v561
        %v578 = vadd.f32 %v540, %v562
        %v579 = vadd.f32 %v541, %v563
        %v580 = vadd.f32 %v542, %v564
        %v581 = vadd.f32 %v543, %v565
        %v582 = vadd.f32 %v544, %v566
        %v583 = vadd.f32 %v545, %v567
        %v584 = vadd.f32 %v546, %v568
        %v585 = vadd.f32 %v547, %v569
        %v586 = vadd.f32 %v548, %v570
        %v587 = vadd.f32 %v549, %v571
        %s588 = scalar_lea.vmem [#allocation6], 40
        %v589 = vld [vmem:[%s588] sm:$0x1]
        %v590 = vlaneseq
        %v591 = vshrl.u32 %v590, 7
        %v592 = vsub.s32 0, %v591
        %v593 = vrot.slane %v589, %v592
        %v594 = vmul.f32 %v381, %v593
        %v595 = vmul.f32 %v382, %v593
        %v596 = vmul.f32 %v383, %v593
        %v597 = vmul.f32 %v384, %v593
        %v598 = vmul.f32 %v385, %v593
        %v599 = vmul.f32 %v386, %v593
        %v600 = vmul.f32 %v387, %v593
        %v601 = vmul.f32 %v388, %v593
        %v602 = vmul.f32 %v389, %v593
        %v603 = vmul.f32 %v390, %v593
        %v604 = vmul.f32 %v391, %v593
        %v605 = vmul.f32 %v392, %v593
        %v606 = vmul.f32 %v393, %v593
        %v607 = vmul.f32 %v394, %v593
        %v608 = vmul.f32 %v395, %v593
        %v609 = vmul.f32 %v396, %v593
        %v610 = vadd.f32 %v572, %v594
        %v611 = vadd.f32 %v573, %v595
        %v612 = vadd.f32 %v574, %v596
        %v613 = vadd.f32 %v575, %v597
        %v614 = vadd.f32 %v576, %v598
        %v615 = vadd.f32 %v577, %v599
        %v616 = vadd.f32 %v578, %v600
        %v617 = vadd.f32 %v579, %v601
        %v618 = vadd.f32 %v580, %v602
        %v619 = vadd.f32 %v581, %v603
        %v620 = vadd.f32 %v582, %v604
        %v621 = vadd.f32 %v583, %v605
        %v622 = vadd.f32 %v584, %v606
        %v623 = vadd.f32 %v585, %v607
        %v624 = vadd.f32 %v586, %v608
        %v625 = vadd.f32 %v587, %v609
        %s626 = scalar_lea.vmem [#allocation6], 48
        %v627 = vld [vmem:[%s626] sm:$0x1]
        %v628 = vlaneseq
        %v629 = vshrl.u32 %v628, 7
        %v630 = vsub.s32 0, %v629
        %v631 = vrot.slane %v627, %v630
        %v632 = vmul.f32 %v383, %v631
        %v633 = vmul.f32 %v384, %v631
        %v634 = vmul.f32 %v385, %v631
        %v635 = vmul.f32 %v386, %v631
        %v636 = vmul.f32 %v387, %v631
        %v637 = vmul.f32 %v388, %v631
        %v638 = vmul.f32 %v389, %v631
        %v639 = vmul.f32 %v390, %v631
        %v640 = vmul.f32 %v391, %v631
        %v641 = vmul.f32 %v392, %v631
        %v642 = vmul.f32 %v393, %v631
        %v643 = vmul.f32 %v394, %v631
        %v644 = vmul.f32 %v395, %v631
        %v645 = vmul.f32 %v396, %v631
        %v646 = vmul.f32 %v397, %v631
        %v647 = vmul.f32 %v398, %v631
        %v648 = vadd.f32 %v610, %v632
        %v649 = vadd.f32 %v611, %v633
        %v650 = vadd.f32 %v612, %v634
        %v651 = vadd.f32 %v613, %v635
        %v652 = vadd.f32 %v614, %v636
        %v653 = vadd.f32 %v615, %v637
        %v654 = vadd.f32 %v616, %v638
        %v655 = vadd.f32 %v617, %v639
        %v656 = vadd.f32 %v618, %v640
        %v657 = vadd.f32 %v619, %v641
        %v658 = vadd.f32 %v620, %v642
        %v659 = vadd.f32 %v621, %v643
        %v660 = vadd.f32 %v622, %v644
        %v661 = vadd.f32 %v623, %v645
        %v662 = vadd.f32 %v624, %v646
        %v663 = vadd.f32 %v625, %v647
        %v664 = vld [vmem:[#allocation2 + $0x6] sm:$0xff]
        %v665 = vld [vmem:[#allocation2 + $0xe] sm:$0xff]
        %v666 = vld [vmem:[#allocation2 + $0x26] sm:$0xff]
        %v667 = vld [vmem:[#allocation2 + $0x2e] sm:$0xff]
        %v668 = vld [vmem:[#allocation2 + $0x46] sm:$0xff]
        %v669 = vld [vmem:[#allocation2 + $0x4e] sm:$0xff]
        %v670 = vld [vmem:[#allocation2 + $0x66] sm:$0xff]
        %v671 = vld [vmem:[#allocation2 + $0x6e] sm:$0xff]
        %v672 = vld [vmem:[#allocation2 + $0x86] sm:$0xff]
        %v673 = vld [vmem:[#allocation2 + $0x8e] sm:$0xff]
        %v674 = vld [vmem:[#allocation2 + $0xa6] sm:$0xff]
        %v675 = vld [vmem:[#allocation2 + $0xae] sm:$0xff]
        %v676 = vld [vmem:[#allocation2 + $0xc6] sm:$0xff]
        %v677 = vld [vmem:[#allocation2 + $0xce] sm:$0xff]
        %v678 = vld [vmem:[#allocation2 + $0xe6] sm:$0xff]
        %v679 = vld [vmem:[#allocation2 + $0xee] sm:$0xff]
        %v680 = vld [vmem:[#allocation2 + $0x106] sm:$0xff]
        %v681 = vld [vmem:[#allocation2 + $0x10e] sm:$0xff]
        %v682 = vld [vmem:[#allocation2 + $0x126] sm:$0xff]
        %v683 = vld [vmem:[#allocation2 + $0x12e] sm:$0xff]
        %v684 = vld [vmem:[#allocation2 + $0x146] sm:$0xff]
        %v685 = vld [vmem:[#allocation2 + $0x14e] sm:$0xff]
        %v686 = vld [vmem:[#allocation2 + $0x166] sm:$0xff]
        %v687 = vld [vmem:[#allocation2 + $0x16e] sm:$0xff]
        %v688 = vld [vmem:[#allocation2 + $0x186] sm:$0xff]
        %v689 = vld [vmem:[#allocation2 + $0x18e] sm:$0xff]
        %v690 = vld [vmem:[#allocation2 + $0x1a6] sm:$0xff]
        %v691 = vld [vmem:[#allocation2 + $0x1ae] sm:$0xff]
        %v692 = vld [vmem:[#allocation6 + $0x1] sm:$0x1]
        %v693 = vlaneseq
        %v694 = vshrl.u32 %v693, 7
        %v695 = vsub.s32 0, %v694
        %v696 = vrot.slane %v692, %v695
        %v697 = vmul.f32 %v664, %v696
        %v698 = vmul.f32 %v665, %v696
        %v699 = vmul.f32 %v666, %v696
        %v700 = vmul.f32 %v667, %v696
        %v701 = vmul.f32 %v668, %v696
        %v702 = vmul.f32 %v669, %v696
        %v703 = vmul.f32 %v670, %v696
        %v704 = vmul.f32 %v671, %v696
        %v705 = vmul.f32 %v672, %v696
        %v706 = vmul.f32 %v673, %v696
        %v707 = vmul.f32 %v674, %v696
        %v708 = vmul.f32 %v675, %v696
        %v709 = vmul.f32 %v676, %v696
        %v710 = vmul.f32 %v677, %v696
        %v711 = vmul.f32 %v678, %v696
        %v712 = vmul.f32 %v679, %v696
        %v713 = vadd.f32 %v648, %v697
        %v714 = vadd.f32 %v649, %v698
        %v715 = vadd.f32 %v650, %v699
        %v716 = vadd.f32 %v651, %v700
        %v717 = vadd.f32 %v652, %v701
        %v718 = vadd.f32 %v653, %v702
        %v719 = vadd.f32 %v654, %v703
        %v720 = vadd.f32 %v655, %v704
        %v721 = vadd.f32 %v656, %v705
        %v722 = vadd.f32 %v657, %v706
        %v723 = vadd.f32 %v658, %v707
        %v724 = vadd.f32 %v659, %v708
        %v725 = vadd.f32 %v660, %v709
        %v726 = vadd.f32 %v661, %v710
        %v727 = vadd.f32 %v662, %v711
        %v728 = vadd.f32 %v663, %v712
        %v729 = vld [vmem:[%s436 + $0x1] sm:$0x1]
        %v730 = vlaneseq
        %v731 = vshrl.u32 %v730, 7
        %v732 = vsub.s32 0, %v731
        %v733 = vrot.slane %v729, %v732
        %v734 = vmul.f32 %v666, %v733
        %v735 = vmul.f32 %v667, %v733
        %v736 = vmul.f32 %v668, %v733
        %v737 = vmul.f32 %v669, %v733
        %v738 = vmul.f32 %v670, %v733
        %v739 = vmul.f32 %v671, %v733
        %v740 = vmul.f32 %v672, %v733
        %v741 = vmul.f32 %v673, %v733
        %v742 = vmul.f32 %v674, %v733
        %v743 = vmul.f32 %v675, %v733
        %v744 = vmul.f32 %v676, %v733
        %v745 = vmul.f32 %v677, %v733
        %v746 = vmul.f32 %v678, %v733
        %v747 = vmul.f32 %v679, %v733
        %v748 = vmul.f32 %v680, %v733
        %v749 = vmul.f32 %v681, %v733
        %v750 = vadd.f32 %v713, %v734
        %v751 = vadd.f32 %v714, %v735
        %v752 = vadd.f32 %v715, %v736
        %v753 = vadd.f32 %v716, %v737
        %v754 = vadd.f32 %v717, %v738
        %v755 = vadd.f32 %v718, %v739
        %v756 = vadd.f32 %v719, %v740
        %v757 = vadd.f32 %v720, %v741
        %v758 = vadd.f32 %v721, %v742
        %v759 = vadd.f32 %v722, %v743
        %v760 = vadd.f32 %v723, %v744
        %v761 = vadd.f32 %v724, %v745
        %v762 = vadd.f32 %v725, %v746
        %v763 = vadd.f32 %v726, %v747
        %v764 = vadd.f32 %v727, %v748
        %v765 = vadd.f32 %v728, %v749
        %v766 = vld [vmem:[%s474 + $0x1] sm:$0x1]
        %v767 = vlaneseq
        %v768 = vshrl.u32 %v767, 7
        %v769 = vsub.s32 0, %v768
        %v770 = vrot.slane %v766, %v769
        %v771 = vmul.f32 %v668, %v770
        %v772 = vmul.f32 %v669, %v770
        %v773 = vmul.f32 %v670, %v770
        %v774 = vmul.f32 %v671, %v770
        %v775 = vmul.f32 %v672, %v770
        %v776 = vmul.f32 %v673, %v770
        %v777 = vmul.f32 %v674, %v770
        %v778 = vmul.f32 %v675, %v770
        %v779 = vmul.f32 %v676, %v770
        %v780 = vmul.f32 %v677, %v770
        %v781 = vmul.f32 %v678, %v770
        %v782 = vmul.f32 %v679, %v770
        %v783 = vmul.f32 %v680, %v770
        %v784 = vmul.f32 %v681, %v770
        %v785 = vmul.f32 %v682, %v770
        %v786 = vmul.f32 %v683, %v770
        %v787 = vadd.f32 %v750, %v771
        %v788 = vadd.f32 %v751, %v772
        %v789 = vadd.f32 %v752, %v773
        %v790 = vadd.f32 %v753, %v774
        %v791 = vadd.f32 %v754, %v775
        %v792 = vadd.f32 %v755, %v776
        %v793 = vadd.f32 %v756, %v777
        %v794 = vadd.f32 %v757, %v778
        %v795 = vadd.f32 %v758, %v779
        %v796 = vadd.f32 %v759, %v780
        %v797 = vadd.f32 %v760, %v781
        %v798 = vadd.f32 %v761, %v782
        %v799 = vadd.f32 %v762, %v783
        %v800 = vadd.f32 %v763, %v784
        %v801 = vadd.f32 %v764, %v785
        %v802 = vadd.f32 %v765, %v786
        %v803 = vld [vmem:[%s512 + $0x1] sm:$0x1]
        %v804 = vlaneseq
        %v805 = vshrl.u32 %v804, 7
        %v806 = vsub.s32 0, %v805
        %v807 = vrot.slane %v803, %v806
        %v808 = vmul.f32 %v670, %v807
        %v809 = vmul.f32 %v671, %v807
        %v810 = vmul.f32 %v672, %v807
        %v811 = vmul.f32 %v673, %v807
        %v812 = vmul.f32 %v674, %v807
        %v813 = vmul.f32 %v675, %v807
        %v814 = vmul.f32 %v676, %v807
        %v815 = vmul.f32 %v677, %v807
        %v816 = vmul.f32 %v678, %v807
        %v817 = vmul.f32 %v679, %v807
        %v818 = vmul.f32 %v680, %v807
        %v819 = vmul.f32 %v681, %v807
        %v820 = vmul.f32 %v682, %v807
        %v821 = vmul.f32 %v683, %v807
        %v822 = vmul.f32 %v684, %v807
        %v823 = vmul.f32 %v685, %v807
        %v824 = vadd.f32 %v787, %v808
        %v825 = vadd.f32 %v788, %v809
        %v826 = vadd.f32 %v789, %v810
        %v827 = vadd.f32 %v790, %v811
        %v828 = vadd.f32 %v791, %v812
        %v829 = vadd.f32 %v792, %v813
        %v830 = vadd.f32 %v793, %v814
        %v831 = vadd.f32 %v794, %v815
        %v832 = vadd.f32 %v795, %v816
        %v833 = vadd.f32 %v796, %v817
        %v834 = vadd.f32 %v797, %v818
        %v835 = vadd.f32 %v798, %v819
        %v836 = vadd.f32 %v799, %v820
        %v837 = vadd.f32 %v800, %v821
        %v838 = vadd.f32 %v801, %v822
        %v839 = vadd.f32 %v802, %v823
        %v840 = vld [vmem:[%s550 + $0x1] sm:$0x1]
        %v841 = vlaneseq
        %v842 = vshrl.u32 %v841, 7
        %v843 = vsub.s32 0, %v842
        %v844 = vrot.slane %v840, %v843
        %v845 = vmul.f32 %v672, %v844
        %v846 = vmul.f32 %v673, %v844
        %v847 = vmul.f32 %v674, %v844
        %v848 = vmul.f32 %v675, %v844
        %v849 = vmul.f32 %v676, %v844
        %v850 = vmul.f32 %v677, %v844
        %v851 = vmul.f32 %v678, %v844
        %v852 = vmul.f32 %v679, %v844
        %v853 = vmul.f32 %v680, %v844
        %v854 = vmul.f32 %v681, %v844
        %v855 = vmul.f32 %v682, %v844
        %v856 = vmul.f32 %v683, %v844
        %v857 = vmul.f32 %v684, %v844
        %v858 = vmul.f32 %v685, %v844
        %v859 = vmul.f32 %v686, %v844
        %v860 = vmul.f32 %v687, %v844
        %v861 = vadd.f32 %v824, %v845
        %v862 = vadd.f32 %v825, %v846
        %v863 = vadd.f32 %v826, %v847
        %v864 = vadd.f32 %v827, %v848
        %v865 = vadd.f32 %v828, %v849
        %v866 = vadd.f32 %v829, %v850
        %v867 = vadd.f32 %v830, %v851
        %v868 = vadd.f32 %v831, %v852
        %v869 = vadd.f32 %v832, %v853
        %v870 = vadd.f32 %v833, %v854
        %v871 = vadd.f32 %v834, %v855
        %v872 = vadd.f32 %v835, %v856
        %v873 = vadd.f32 %v836, %v857
        %v874 = vadd.f32 %v837, %v858
        %v875 = vadd.f32 %v838, %v859
        %v876 = vadd.f32 %v839, %v860
        %v877 = vld [vmem:[%s588 + $0x1] sm:$0x1]
        %v878 = vlaneseq
        %v879 = vshrl.u32 %v878, 7
        %v880 = vsub.s32 0, %v879
        %v881 = vrot.slane %v877, %v880
        %v882 = vmul.f32 %v674, %v881
        %v883 = vmul.f32 %v675, %v881
        %v884 = vmul.f32 %v676, %v881
        %v885 = vmul.f32 %v677, %v881
        %v886 = vmul.f32 %v678, %v881
        %v887 = vmul.f32 %v679, %v881
        %v888 = vmul.f32 %v680, %v881
        %v889 = vmul.f32 %v681, %v881
        %v890 = vmul.f32 %v682, %v881
        %v891 = vmul.f32 %v683, %v881
        %v892 = vmul.f32 %v684, %v881
        %v893 = vmul.f32 %v685, %v881
        %v894 = vmul.f32 %v686, %v881
        %v895 = vmul.f32 %v687, %v881
        %v896 = vmul.f32 %v688, %v881
        %v897 = vmul.f32 %v689, %v881
        %v898 = vadd.f32 %v861, %v882
        %v899 = vadd.f32 %v862, %v883
        %v900 = vadd.f32 %v863, %v884
        %v901 = vadd.f32 %v864, %v885
        %v902 = vadd.f32 %v865, %v886
        %v903 = vadd.f32 %v866, %v887
        %v904 = vadd.f32 %v867, %v888
        %v905 = vadd.f32 %v868, %v889
        %v906 = vadd.f32 %v869, %v890
        %v907 = vadd.f32 %v870, %v891
        %v908 = vadd.f32 %v871, %v892
        %v909 = vadd.f32 %v872, %v893
        %v910 = vadd.f32 %v873, %v894
        %v911 = vadd.f32 %v874, %v895
        %v912 = vadd.f32 %v875, %v896
        %v913 = vadd.f32 %v876, %v897
        %v914 = vld [vmem:[%s626 + $0x1] sm:$0x1]
        %v915 = vlaneseq
        %v916 = vshrl.u32 %v915, 7
        %v917 = vsub.s32 0, %v916
        %v918 = vrot.slane %v914, %v917
        %v919 = vmul.f32 %v676, %v918
        %v920 = vmul.f32 %v677, %v918
        %v921 = vmul.f32 %v678, %v918
        %v922 = vmul.f32 %v679, %v918
        %v923 = vmul.f32 %v680, %v918
        %v924 = vmul.f32 %v681, %v918
        %v925 = vmul.f32 %v682, %v918
        %v926 = vmul.f32 %v683, %v918
        %v927 = vmul.f32 %v684, %v918
        %v928 = vmul.f32 %v685, %v918
        %v929 = vmul.f32 %v686, %v918
        %v930 = vmul.f32 %v687, %v918
        %v931 = vmul.f32 %v688, %v918
        %v932 = vmul.f32 %v689, %v918
        %v933 = vmul.f32 %v690, %v918
        %v934 = vmul.f32 %v691, %v918
        %v935 = vadd.f32 %v898, %v919
        %v936 = vadd.f32 %v899, %v920
        %v937 = vadd.f32 %v900, %v921
        %v938 = vadd.f32 %v901, %v922
        %v939 = vadd.f32 %v902, %v923
        %v940 = vadd.f32 %v903, %v924
        %v941 = vadd.f32 %v904, %v925
        %v942 = vadd.f32 %v905, %v926
        %v943 = vadd.f32 %v906, %v927
        %v944 = vadd.f32 %v907, %v928
        %v945 = vadd.f32 %v908, %v929
        %v946 = vadd.f32 %v909, %v930
        %v947 = vadd.f32 %v910, %v931
        %v948 = vadd.f32 %v911, %v932
        %v949 = vadd.f32 %v912, %v933
        %v950 = vadd.f32 %v913, %v934
        %v951 = vld [vmem:[#allocation2 + $0x7] sm:$0xff]
        %v952 = vld [vmem:[#allocation2 + $0xf] sm:$0xff]
        %v953 = vld [vmem:[#allocation2 + $0x27] sm:$0xff]
        %v954 = vld [vmem:[#allocation2 + $0x2f] sm:$0xff]
        %v955 = vld [vmem:[#allocation2 + $0x47] sm:$0xff]
        %v956 = vld [vmem:[#allocation2 + $0x4f] sm:$0xff]
        %v957 = vld [vmem:[#allocation2 + $0x67] sm:$0xff]
        %v958 = vld [vmem:[#allocation2 + $0x6f] sm:$0xff]
        %v959 = vld [vmem:[#allocation2 + $0x87] sm:$0xff]
        %v960 = vld [vmem:[#allocation2 + $0x8f] sm:$0xff]
        %v961 = vld [vmem:[#allocation2 + $0xa7] sm:$0xff]
        %v962 = vld [vmem:[#allocation2 + $0xaf] sm:$0xff]
        %v963 = vld [vmem:[#allocation2 + $0xc7] sm:$0xff]
        %v964 = vld [vmem:[#allocation2 + $0xcf] sm:$0xff]
        %v965 = vld [vmem:[#allocation2 + $0xe7] sm:$0xff]
        %v966 = vld [vmem:[#allocation2 + $0xef] sm:$0xff]
        %v967 = vld [vmem:[#allocation2 + $0x107] sm:$0xff]
        %v968 = vld [vmem:[#allocation2 + $0x10f] sm:$0xff]
        %v969 = vld [vmem:[#allocation2 + $0x127] sm:$0xff]
        %v970 = vld [vmem:[#allocation2 + $0x12f] sm:$0xff]
        %v971 = vld [vmem:[#allocation2 + $0x147] sm:$0xff]
        %v972 = vld [vmem:[#allocation2 + $0x14f] sm:$0xff]
        %v973 = vld [vmem:[#allocation2 + $0x167] sm:$0xff]
        %v974 = vld [vmem:[#allocation2 + $0x16f] sm:$0xff]
        %v975 = vld [vmem:[#allocation2 + $0x187] sm:$0xff]
        %v976 = vld [vmem:[#allocation2 + $0x18f] sm:$0xff]
        %v977 = vld [vmem:[#allocation2 + $0x1a7] sm:$0xff]
        %v978 = vld [vmem:[#allocation2 + $0x1af] sm:$0xff]
        %v979 = vld [vmem:[#allocation6 + $0x2] sm:$0x1]
        %v980 = vlaneseq
        %v981 = vshrl.u32 %v980, 7
        %v982 = vsub.s32 0, %v981
        %v983 = vrot.slane %v979, %v982
        %v984 = vmul.f32 %v951, %v983
        %v985 = vmul.f32 %v952, %v983
        %v986 = vmul.f32 %v953, %v983
        %v987 = vmul.f32 %v954, %v983
        %v988 = vmul.f32 %v955, %v983
        %v989 = vmul.f32 %v956, %v983
        %v990 = vmul.f32 %v957, %v983
        %v991 = vmul.f32 %v958, %v983
        %v992 = vmul.f32 %v959, %v983
        %v993 = vmul.f32 %v960, %v983
        %v994 = vmul.f32 %v961, %v983
        %v995 = vmul.f32 %v962, %v983
        %v996 = vmul.f32 %v963, %v983
        %v997 = vmul.f32 %v964, %v983
        %v998 = vmul.f32 %v965, %v983
        %v999 = vmul.f32 %v966, %v983
        %v1000 = vadd.f32 %v935, %v984
        %v1001 = vadd.f32 %v936, %v985
        %v1002 = vadd.f32 %v937, %v986
        %v1003 = vadd.f32 %v938, %v987
        %v1004 = vadd.f32 %v939, %v988
        %v1005 = vadd.f32 %v940, %v989
        %v1006 = vadd.f32 %v941, %v990
        %v1007 = vadd.f32 %v942, %v991
        %v1008 = vadd.f32 %v943, %v992
        %v1009 = vadd.f32 %v944, %v993
        %v1010 = vadd.f32 %v945, %v994
        %v1011 = vadd.f32 %v946, %v995
        %v1012 = vadd.f32 %v947, %v996
        %v1013 = vadd.f32 %v948, %v997
        %v1014 = vadd.f32 %v949, %v998
        %v1015 = vadd.f32 %v950, %v999
        %v1016 = vld [vmem:[%s436 + $0x2] sm:$0x1]
        %v1017 = vlaneseq
        %v1018 = vshrl.u32 %v1017, 7
        %v1019 = vsub.s32 0, %v1018
        %v1020 = vrot.slane %v1016, %v1019
        %v1021 = vmul.f32 %v953, %v1020
        %v1022 = vmul.f32 %v954, %v1020
        %v1023 = vmul.f32 %v955, %v1020
        %v1024 = vmul.f32 %v956, %v1020
        %v1025 = vmul.f32 %v957, %v1020
        %v1026 = vmul.f32 %v958, %v1020
        %v1027 = vmul.f32 %v959, %v1020
        %v1028 = vmul.f32 %v960, %v1020
        %v1029 = vmul.f32 %v961, %v1020
        %v1030 = vmul.f32 %v962, %v1020
        %v1031 = vmul.f32 %v963, %v1020
        %v1032 = vmul.f32 %v964, %v1020
        %v1033 = vmul.f32 %v965, %v1020
        %v1034 = vmul.f32 %v966, %v1020
        %v1035 = vmul.f32 %v967, %v1020
        %v1036 = vmul.f32 %v968, %v1020
        %v1037 = vadd.f32 %v1000, %v1021
        %v1038 = vadd.f32 %v1001, %v1022
        %v1039 = vadd.f32 %v1002, %v1023
        %v1040 = vadd.f32 %v1003, %v1024
        %v1041 = vadd.f32 %v1004, %v1025
        %v1042 = vadd.f32 %v1005, %v1026
        %v1043 = vadd.f32 %v1006, %v1027
        %v1044 = vadd.f32 %v1007, %v1028
        %v1045 = vadd.f32 %v1008, %v1029
        %v1046 = vadd.f32 %v1009, %v1030
        %v1047 = vadd.f32 %v1010, %v1031
        %v1048 = vadd.f32 %v1011, %v1032
        %v1049 = vadd.f32 %v1012, %v1033
        %v1050 = vadd.f32 %v1013, %v1034
        %v1051 = vadd.f32 %v1014, %v1035
        %v1052 = vadd.f32 %v1015, %v1036
        %v1053 = vld [vmem:[%s474 + $0x2] sm:$0x1]
        %v1054 = vlaneseq
        %v1055 = vshrl.u32 %v1054, 7
        %v1056 = vsub.s32 0, %v1055
        %v1057 = vrot.slane %v1053, %v1056
        %v1058 = vmul.f32 %v955, %v1057
        %v1059 = vmul.f32 %v956, %v1057
        %v1060 = vmul.f32 %v957, %v1057
        %v1061 = vmul.f32 %v958, %v1057
        %v1062 = vmul.f32 %v959, %v1057
        %v1063 = vmul.f32 %v960, %v1057
        %v1064 = vmul.f32 %v961, %v1057
        %v1065 = vmul.f32 %v962, %v1057
        %v1066 = vmul.f32 %v963, %v1057
        %v1067 = vmul.f32 %v964, %v1057
        %v1068 = vmul.f32 %v965, %v1057
        %v1069 = vmul.f32 %v966, %v1057
        %v1070 = vmul.f32 %v967, %v1057
        %v1071 = vmul.f32 %v968, %v1057
        %v1072 = vmul.f32 %v969, %v1057
        %v1073 = vmul.f32 %v970, %v1057
        %v1074 = vadd.f32 %v1037, %v1058
        %v1075 = vadd.f32 %v1038, %v1059
        %v1076 = vadd.f32 %v1039, %v1060
        %v1077 = vadd.f32 %v1040, %v1061
        %v1078 = vadd.f32 %v1041, %v1062
        %v1079 = vadd.f32 %v1042, %v1063
        %v1080 = vadd.f32 %v1043, %v1064
        %v1081 = vadd.f32 %v1044, %v1065
        %v1082 = vadd.f32 %v1045, %v1066
        %v1083 = vadd.f32 %v1046, %v1067
        %v1084 = vadd.f32 %v1047, %v1068
        %v1085 = vadd.f32 %v1048, %v1069
        %v1086 = vadd.f32 %v1049, %v1070
        %v1087 = vadd.f32 %v1050, %v1071
        %v1088 = vadd.f32 %v1051, %v1072
        %v1089 = vadd.f32 %v1052, %v1073
        %v1090 = vld [vmem:[%s512 + $0x2] sm:$0x1]
        %v1091 = vlaneseq
        %v1092 = vshrl.u32 %v1091, 7
        %v1093 = vsub.s32 0, %v1092
        %v1094 = vrot.slane %v1090, %v1093
        %v1095 = vmul.f32 %v957, %v1094
        %v1096 = vmul.f32 %v958, %v1094
        %v1097 = vmul.f32 %v959, %v1094
        %v1098 = vmul.f32 %v960, %v1094
        %v1099 = vmul.f32 %v961, %v1094
        %v1100 = vmul.f32 %v962, %v1094
        %v1101 = vmul.f32 %v963, %v1094
        %v1102 = vmul.f32 %v964, %v1094
        %v1103 = vmul.f32 %v965, %v1094
        %v1104 = vmul.f32 %v966, %v1094
        %v1105 = vmul.f32 %v967, %v1094
        %v1106 = vmul.f32 %v968, %v1094
        %v1107 = vmul.f32 %v969, %v1094
        %v1108 = vmul.f32 %v970, %v1094
        %v1109 = vmul.f32 %v971, %v1094
        %v1110 = vmul.f32 %v972, %v1094
        %v1111 = vadd.f32 %v1074, %v1095
        %v1112 = vadd.f32 %v1075, %v1096
        %v1113 = vadd.f32 %v1076, %v1097
        %v1114 = vadd.f32 %v1077, %v1098
        %v1115 = vadd.f32 %v1078, %v1099
        %v1116 = vadd.f32 %v1079, %v1100
        %v1117 = vadd.f32 %v1080, %v1101
        %v1118 = vadd.f32 %v1081, %v1102
        %v1119 = vadd.f32 %v1082, %v1103
        %v1120 = vadd.f32 %v1083, %v1104
        %v1121 = vadd.f32 %v1084, %v1105
        %v1122 = vadd.f32 %v1085, %v1106
        %v1123 = vadd.f32 %v1086, %v1107
        %v1124 = vadd.f32 %v1087, %v1108
        %v1125 = vadd.f32 %v1088, %v1109
        %v1126 = vadd.f32 %v1089, %v1110
        %v1127 = vld [vmem:[%s550 + $0x2] sm:$0x1]
        %v1128 = vlaneseq
        %v1129 = vshrl.u32 %v1128, 7
        %v1130 = vsub.s32 0, %v1129
        %v1131 = vrot.slane %v1127, %v1130
        %v1132 = vmul.f32 %v959, %v1131
        %v1133 = vmul.f32 %v960, %v1131
        %v1134 = vmul.f32 %v961, %v1131
        %v1135 = vmul.f32 %v962, %v1131
        %v1136 = vmul.f32 %v963, %v1131
        %v1137 = vmul.f32 %v964, %v1131
        %v1138 = vmul.f32 %v965, %v1131
        %v1139 = vmul.f32 %v966, %v1131
        %v1140 = vmul.f32 %v967, %v1131
        %v1141 = vmul.f32 %v968, %v1131
        %v1142 = vmul.f32 %v969, %v1131
        %v1143 = vmul.f32 %v970, %v1131
        %v1144 = vmul.f32 %v971, %v1131
        %v1145 = vmul.f32 %v972, %v1131
        %v1146 = vmul.f32 %v973, %v1131
        %v1147 = vmul.f32 %v974, %v1131
        %v1148 = vadd.f32 %v1111, %v1132
        %v1149 = vadd.f32 %v1112, %v1133
        %v1150 = vadd.f32 %v1113, %v1134
        %v1151 = vadd.f32 %v1114, %v1135
        %v1152 = vadd.f32 %v1115, %v1136
        %v1153 = vadd.f32 %v1116, %v1137
        %v1154 = vadd.f32 %v1117, %v1138
        %v1155 = vadd.f32 %v1118, %v1139
        %v1156 = vadd.f32 %v1119, %v1140
        %v1157 = vadd.f32 %v1120, %v1141
        %v1158 = vadd.f32 %v1121, %v1142
        %v1159 = vadd.f32 %v1122, %v1143
        %v1160 = vadd.f32 %v1123, %v1144
        %v1161 = vadd.f32 %v1124, %v1145
        %v1162 = vadd.f32 %v1125, %v1146
        %v1163 = vadd.f32 %v1126, %v1147
        %v1164 = vld [vmem:[%s588 + $0x2] sm:$0x1]
        %v1165 = vlaneseq
        %v1166 = vshrl.u32 %v1165, 7
        %v1167 = vsub.s32 0, %v1166
        %v1168 = vrot.slane %v1164, %v1167
        %v1169 = vmul.f32 %v961, %v1168
        %v1170 = vmul.f32 %v962, %v1168
        %v1171 = vmul.f32 %v963, %v1168
        %v1172 = vmul.f32 %v964, %v1168
        %v1173 = vmul.f32 %v965, %v1168
        %v1174 = vmul.f32 %v966, %v1168
        %v1175 = vmul.f32 %v967, %v1168
        %v1176 = vmul.f32 %v968, %v1168
        %v1177 = vmul.f32 %v969, %v1168
        %v1178 = vmul.f32 %v970, %v1168
        %v1179 = vmul.f32 %v971, %v1168
        %v1180 = vmul.f32 %v972, %v1168
        %v1181 = vmul.f32 %v973, %v1168
        %v1182 = vmul.f32 %v974, %v1168
        %v1183 = vmul.f32 %v975, %v1168
        %v1184 = vmul.f32 %v976, %v1168
        %v1185 = vadd.f32 %v1148, %v1169
        %v1186 = vadd.f32 %v1149, %v1170
        %v1187 = vadd.f32 %v1150, %v1171
        %v1188 = vadd.f32 %v1151, %v1172
        %v1189 = vadd.f32 %v1152, %v1173
        %v1190 = vadd.f32 %v1153, %v1174
        %v1191 = vadd.f32 %v1154, %v1175
        %v1192 = vadd.f32 %v1155, %v1176
        %v1193 = vadd.f32 %v1156, %v1177
        %v1194 = vadd.f32 %v1157, %v1178
        %v1195 = vadd.f32 %v1158, %v1179
        %v1196 = vadd.f32 %v1159, %v1180
        %v1197 = vadd.f32 %v1160, %v1181
        %v1198 = vadd.f32 %v1161, %v1182
        %v1199 = vadd.f32 %v1162, %v1183
        %v1200 = vadd.f32 %v1163, %v1184
        %v1201 = vld [vmem:[%s626 + $0x2] sm:$0x1]
        %v1202 = vlaneseq
        %v1203 = vshrl.u32 %v1202, 7
        %v1204 = vsub.s32 0, %v1203
        %v1205 = vrot.slane %v1201, %v1204
        %v1206 = vmul.f32 %v963, %v1205
        %v1207 = vmul.f32 %v964, %v1205
        %v1208 = vmul.f32 %v965, %v1205
        %v1209 = vmul.f32 %v966, %v1205
        %v1210 = vmul.f32 %v967, %v1205
        %v1211 = vmul.f32 %v968, %v1205
        %v1212 = vmul.f32 %v969, %v1205
        %v1213 = vmul.f32 %v970, %v1205
        %v1214 = vmul.f32 %v971, %v1205
        %v1215 = vmul.f32 %v972, %v1205
        %v1216 = vmul.f32 %v973, %v1205
        %v1217 = vmul.f32 %v974, %v1205
        %v1218 = vmul.f32 %v975, %v1205
        %v1219 = vmul.f32 %v976, %v1205
        %v1220 = vmul.f32 %v977, %v1205
        %v1221 = vmul.f32 %v978, %v1205
        %v1222 = vadd.f32 %v1185, %v1206
        %v1223 = vadd.f32 %v1186, %v1207
        %v1224 = vadd.f32 %v1187, %v1208
        %v1225 = vadd.f32 %v1188, %v1209
        %v1226 = vadd.f32 %v1189, %v1210
        %v1227 = vadd.f32 %v1190, %v1211
        %v1228 = vadd.f32 %v1191, %v1212
        %v1229 = vadd.f32 %v1192, %v1213
        %v1230 = vadd.f32 %v1193, %v1214
        %v1231 = vadd.f32 %v1194, %v1215
        %v1232 = vadd.f32 %v1195, %v1216
        %v1233 = vadd.f32 %v1196, %v1217
        %v1234 = vadd.f32 %v1197, %v1218
        %v1235 = vadd.f32 %v1198, %v1219
        %v1236 = vadd.f32 %v1199, %v1220
        %v1237 = vadd.f32 %v1200, %v1221
        %v1238 = vld [vmem:[#allocation2 + $0x8] sm:$0xff]
        %v1239 = vld [vmem:[#allocation2 + $0x10] sm:$0xff]
        %v1240 = vld [vmem:[#allocation2 + $0x28] sm:$0xff]
        %v1241 = vld [vmem:[#allocation2 + $0x30] sm:$0xff]
        %v1242 = vld [vmem:[#allocation2 + $0x48] sm:$0xff]
        %v1243 = vld [vmem:[#allocation2 + $0x50] sm:$0xff]
        %v1244 = vld [vmem:[#allocation2 + $0x68] sm:$0xff]
        %v1245 = vld [vmem:[#allocation2 + $0x70] sm:$0xff]
        %v1246 = vld [vmem:[#allocation2 + $0x88] sm:$0xff]
        %v1247 = vld [vmem:[#allocation2 + $0x90] sm:$0xff]
        %v1248 = vld [vmem:[#allocation2 + $0xa8] sm:$0xff]
        %v1249 = vld [vmem:[#allocation2 + $0xb0] sm:$0xff]
        %v1250 = vld [vmem:[#allocation2 + $0xc8] sm:$0xff]
        %v1251 = vld [vmem:[#allocation2 + $0xd0] sm:$0xff]
        %v1252 = vld [vmem:[#allocation2 + $0xe8] sm:$0xff]
        %v1253 = vld [vmem:[#allocation2 + $0xf0] sm:$0xff]
        %v1254 = vld [vmem:[#allocation2 + $0x108] sm:$0xff]
        %v1255 = vld [vmem:[#allocation2 + $0x110] sm:$0xff]
        %v1256 = vld [vmem:[#allocation2 + $0x128] sm:$0xff]
        %v1257 = vld [vmem:[#allocation2 + $0x130] sm:$0xff]
        %v1258 = vld [vmem:[#allocation2 + $0x148] sm:$0xff]
        %v1259 = vld [vmem:[#allocation2 + $0x150] sm:$0xff]
        %v1260 = vld [vmem:[#allocation2 + $0x168] sm:$0xff]
        %v1261 = vld [vmem:[#allocation2 + $0x170] sm:$0xff]
        %v1262 = vld [vmem:[#allocation2 + $0x188] sm:$0xff]
        %v1263 = vld [vmem:[#allocation2 + $0x190] sm:$0xff]
        %v1264 = vld [vmem:[#allocation2 + $0x1a8] sm:$0xff]
        %v1265 = vld [vmem:[#allocation2 + $0x1b0] sm:$0xff]
        %v1266 = vld [vmem:[#allocation6 + $0x3] sm:$0x1]
        %v1267 = vlaneseq
        %v1268 = vshrl.u32 %v1267, 7
        %v1269 = vsub.s32 0, %v1268
        %v1270 = vrot.slane %v1266, %v1269
        %v1271 = vmul.f32 %v1238, %v1270
        %v1272 = vmul.f32 %v1239, %v1270
        %v1273 = vmul.f32 %v1240, %v1270
        %v1274 = vmul.f32 %v1241, %v1270
        %v1275 = vmul.f32 %v1242, %v1270
        %v1276 = vmul.f32 %v1243, %v1270
        %v1277 = vmul.f32 %v1244, %v1270
        %v1278 = vmul.f32 %v1245, %v1270
        %v1279 = vmul.f32 %v1246, %v1270
        %v1280 = vmul.f32 %v1247, %v1270
        %v1281 = vmul.f32 %v1248, %v1270
        %v1282 = vmul.f32 %v1249, %v1270
        %v1283 = vmul.f32 %v1250, %v1270
        %v1284 = vmul.f32 %v1251, %v1270
        %v1285 = vmul.f32 %v1252, %v1270
        %v1286 = vmul.f32 %v1253, %v1270
        %v1287 = vadd.f32 %v1222, %v1271
        %v1288 = vadd.f32 %v1223, %v1272
        %v1289 = vadd.f32 %v1224, %v1273
        %v1290 = vadd.f32 %v1225, %v1274
        %v1291 = vadd.f32 %v1226, %v1275
        %v1292 = vadd.f32 %v1227, %v1276
        %v1293 = vadd.f32 %v1228, %v1277
        %v1294 = vadd.f32 %v1229, %v1278
        %v1295 = vadd.f32 %v1230, %v1279
        %v1296 = vadd.f32 %v1231, %v1280
        %v1297 = vadd.f32 %v1232, %v1281
        %v1298 = vadd.f32 %v1233, %v1282
        %v1299 = vadd.f32 %v1234, %v1283
        %v1300 = vadd.f32 %v1235, %v1284
        %v1301 = vadd.f32 %v1236, %v1285
        %v1302 = vadd.f32 %v1237, %v1286
        %v1303 = vld [vmem:[%s436 + $0x3] sm:$0x1]
        %v1304 = vlaneseq
        %v1305 = vshrl.u32 %v1304, 7
        %v1306 = vsub.s32 0, %v1305
        %v1307 = vrot.slane %v1303, %v1306
        %v1308 = vmul.f32 %v1240, %v1307
        %v1309 = vmul.f32 %v1241, %v1307
        %v1310 = vmul.f32 %v1242, %v1307
        %v1311 = vmul.f32 %v1243, %v1307
        %v1312 = vmul.f32 %v1244, %v1307
        %v1313 = vmul.f32 %v1245, %v1307
        %v1314 = vmul.f32 %v1246, %v1307
        %v1315 = vmul.f32 %v1247, %v1307
        %v1316 = vmul.f32 %v1248, %v1307
        %v1317 = vmul.f32 %v1249, %v1307
        %v1318 = vmul.f32 %v1250, %v1307
        %v1319 = vmul.f32 %v1251, %v1307
        %v1320 = vmul.f32 %v1252, %v1307
        %v1321 = vmul.f32 %v1253, %v1307
        %v1322 = vmul.f32 %v1254, %v1307
        %v1323 = vmul.f32 %v1255, %v1307
        %v1324 = vadd.f32 %v1287, %v1308
        %v1325 = vadd.f32 %v1288, %v1309
        %v1326 = vadd.f32 %v1289, %v1310
        %v1327 = vadd.f32 %v1290, %v1311
        %v1328 = vadd.f32 %v1291, %v1312
        %v1329 = vadd.f32 %v1292, %v1313
        %v1330 = vadd.f32 %v1293, %v1314
        %v1331 = vadd.f32 %v1294, %v1315
        %v1332 = vadd.f32 %v1295, %v1316
        %v1333 = vadd.f32 %v1296, %v1317
        %v1334 = vadd.f32 %v1297, %v1318
        %v1335 = vadd.f32 %v1298, %v1319
        %v1336 = vadd.f32 %v1299, %v1320
        %v1337 = vadd.f32 %v1300, %v1321
        %v1338 = vadd.f32 %v1301, %v1322
        %v1339 = vadd.f32 %v1302, %v1323
        %v1340 = vld [vmem:[%s474 + $0x3] sm:$0x1]
        %v1341 = vlaneseq
        %v1342 = vshrl.u32 %v1341, 7
        %v1343 = vsub.s32 0, %v1342
        %v1344 = vrot.slane %v1340, %v1343
        %v1345 = vmul.f32 %v1242, %v1344
        %v1346 = vmul.f32 %v1243, %v1344
        %v1347 = vmul.f32 %v1244, %v1344
        %v1348 = vmul.f32 %v1245, %v1344
        %v1349 = vmul.f32 %v1246, %v1344
        %v1350 = vmul.f32 %v1247, %v1344
        %v1351 = vmul.f32 %v1248, %v1344
        %v1352 = vmul.f32 %v1249, %v1344
        %v1353 = vmul.f32 %v1250, %v1344
        %v1354 = vmul.f32 %v1251, %v1344
        %v1355 = vmul.f32 %v1252, %v1344
        %v1356 = vmul.f32 %v1253, %v1344
        %v1357 = vmul.f32 %v1254, %v1344
        %v1358 = vmul.f32 %v1255, %v1344
        %v1359 = vmul.f32 %v1256, %v1344
        %v1360 = vmul.f32 %v1257, %v1344
        %v1361 = vadd.f32 %v1324, %v1345
        %v1362 = vadd.f32 %v1325, %v1346
        %v1363 = vadd.f32 %v1326, %v1347
        %v1364 = vadd.f32 %v1327, %v1348
        %v1365 = vadd.f32 %v1328, %v1349
        %v1366 = vadd.f32 %v1329, %v1350
        %v1367 = vadd.f32 %v1330, %v1351
        %v1368 = vadd.f32 %v1331, %v1352
        %v1369 = vadd.f32 %v1332, %v1353
        %v1370 = vadd.f32 %v1333, %v1354
        %v1371 = vadd.f32 %v1334, %v1355
        %v1372 = vadd.f32 %v1335, %v1356
        %v1373 = vadd.f32 %v1336, %v1357
        %v1374 = vadd.f32 %v1337, %v1358
        %v1375 = vadd.f32 %v1338, %v1359
        %v1376 = vadd.f32 %v1339, %v1360
        %v1377 = vld [vmem:[%s512 + $0x3] sm:$0x1]
        %v1378 = vlaneseq
        %v1379 = vshrl.u32 %v1378, 7
        %v1380 = vsub.s32 0, %v1379
        %v1381 = vrot.slane %v1377, %v1380
        %v1382 = vmul.f32 %v1244, %v1381
        %v1383 = vmul.f32 %v1245, %v1381
        %v1384 = vmul.f32 %v1246, %v1381
        %v1385 = vmul.f32 %v1247, %v1381
        %v1386 = vmul.f32 %v1248, %v1381
        %v1387 = vmul.f32 %v1249, %v1381
        %v1388 = vmul.f32 %v1250, %v1381
        %v1389 = vmul.f32 %v1251, %v1381
        %v1390 = vmul.f32 %v1252, %v1381
        %v1391 = vmul.f32 %v1253, %v1381
        %v1392 = vmul.f32 %v1254, %v1381
        %v1393 = vmul.f32 %v1255, %v1381
        %v1394 = vmul.f32 %v1256, %v1381
        %v1395 = vmul.f32 %v1257, %v1381
        %v1396 = vmul.f32 %v1258, %v1381
        %v1397 = vmul.f32 %v1259, %v1381
        %v1398 = vadd.f32 %v1361, %v1382
        %v1399 = vadd.f32 %v1362, %v1383
        %v1400 = vadd.f32 %v1363, %v1384
        %v1401 = vadd.f32 %v1364, %v1385
        %v1402 = vadd.f32 %v1365, %v1386
        %v1403 = vadd.f32 %v1366, %v1387
        %v1404 = vadd.f32 %v1367, %v1388
        %v1405 = vadd.f32 %v1368, %v1389
        %v1406 = vadd.f32 %v1369, %v1390
        %v1407 = vadd.f32 %v1370, %v1391
        %v1408 = vadd.f32 %v1371, %v1392
        %v1409 = vadd.f32 %v1372, %v1393
        %v1410 = vadd.f32 %v1373, %v1394
        %v1411 = vadd.f32 %v1374, %v1395
        %v1412 = vadd.f32 %v1375, %v1396
        %v1413 = vadd.f32 %v1376, %v1397
        %v1414 = vld [vmem:[%s550 + $0x3] sm:$0x1]
        %v1415 = vlaneseq
        %v1416 = vshrl.u32 %v1415, 7
        %v1417 = vsub.s32 0, %v1416
        %v1418 = vrot.slane %v1414, %v1417
        %v1419 = vmul.f32 %v1246, %v1418
        %v1420 = vmul.f32 %v1247, %v1418
        %v1421 = vmul.f32 %v1248, %v1418
        %v1422 = vmul.f32 %v1249, %v1418
        %v1423 = vmul.f32 %v1250, %v1418
        %v1424 = vmul.f32 %v1251, %v1418
        %v1425 = vmul.f32 %v1252, %v1418
        %v1426 = vmul.f32 %v1253, %v1418
        %v1427 = vmul.f32 %v1254, %v1418
        %v1428 = vmul.f32 %v1255, %v1418
        %v1429 = vmul.f32 %v1256, %v1418
        %v1430 = vmul.f32 %v1257, %v1418
        %v1431 = vmul.f32 %v1258, %v1418
        %v1432 = vmul.f32 %v1259, %v1418
        %v1433 = vmul.f32 %v1260, %v1418
        %v1434 = vmul.f32 %v1261, %v1418
        %v1435 = vadd.f32 %v1398, %v1419
        %v1436 = vadd.f32 %v1399, %v1420
        %v1437 = vadd.f32 %v1400, %v1421
        %v1438 = vadd.f32 %v1401, %v1422
        %v1439 = vadd.f32 %v1402, %v1423
        %v1440 = vadd.f32 %v1403, %v1424
        %v1441 = vadd.f32 %v1404, %v1425
        %v1442 = vadd.f32 %v1405, %v1426
        %v1443 = vadd.f32 %v1406, %v1427
        %v1444 = vadd.f32 %v1407, %v1428
        %v1445 = vadd.f32 %v1408, %v1429
        %v1446 = vadd.f32 %v1409, %v1430
        %v1447 = vadd.f32 %v1410, %v1431
        %v1448 = vadd.f32 %v1411, %v1432
        %v1449 = vadd.f32 %v1412, %v1433
        %v1450 = vadd.f32 %v1413, %v1434
        %v1451 = vld [vmem:[%s588 + $0x3] sm:$0x1]
        %v1452 = vlaneseq
        %v1453 = vshrl.u32 %v1452, 7
        %v1454 = vsub.s32 0, %v1453
        %v1455 = vrot.slane %v1451, %v1454
        %v1456 = vmul.f32 %v1248, %v1455
        %v1457 = vmul.f32 %v1249, %v1455
        %v1458 = vmul.f32 %v1250, %v1455
        %v1459 = vmul.f32 %v1251, %v1455
        %v1460 = vmul.f32 %v1252, %v1455
        %v1461 = vmul.f32 %v1253, %v1455
        %v1462 = vmul.f32 %v1254, %v1455
        %v1463 = vmul.f32 %v1255, %v1455
        %v1464 = vmul.f32 %v1256, %v1455
        %v1465 = vmul.f32 %v1257, %v1455
        %v1466 = vmul.f32 %v1258, %v1455
        %v1467 = vmul.f32 %v1259, %v1455
        %v1468 = vmul.f32 %v1260, %v1455
        %v1469 = vmul.f32 %v1261, %v1455
        %v1470 = vmul.f32 %v1262, %v1455
        %v1471 = vmul.f32 %v1263, %v1455
        %v1472 = vadd.f32 %v1435, %v1456
        %v1473 = vadd.f32 %v1436, %v1457
        %v1474 = vadd.f32 %v1437, %v1458
        %v1475 = vadd.f32 %v1438, %v1459
        %v1476 = vadd.f32 %v1439, %v1460
        %v1477 = vadd.f32 %v1440, %v1461
        %v1478 = vadd.f32 %v1441, %v1462
        %v1479 = vadd.f32 %v1442, %v1463
        %v1480 = vadd.f32 %v1443, %v1464
        %v1481 = vadd.f32 %v1444, %v1465
        %v1482 = vadd.f32 %v1445, %v1466
        %v1483 = vadd.f32 %v1446, %v1467
        %v1484 = vadd.f32 %v1447, %v1468
        %v1485 = vadd.f32 %v1448, %v1469
        %v1486 = vadd.f32 %v1449, %v1470
        %v1487 = vadd.f32 %v1450, %v1471
        %v1488 = vld [vmem:[%s626 + $0x3] sm:$0x1]
        %v1489 = vlaneseq
        %v1490 = vshrl.u32 %v1489, 7
        %v1491 = vsub.s32 0, %v1490
        %v1492 = vrot.slane %v1488, %v1491
        %v1493 = vmul.f32 %v1250, %v1492
        %v1494 = vmul.f32 %v1251, %v1492
        %v1495 = vmul.f32 %v1252, %v1492
        %v1496 = vmul.f32 %v1253, %v1492
        %v1497 = vmul.f32 %v1254, %v1492
        %v1498 = vmul.f32 %v1255, %v1492
        %v1499 = vmul.f32 %v1256, %v1492
        %v1500 = vmul.f32 %v1257, %v1492
        %v1501 = vmul.f32 %v1258, %v1492
        %v1502 = vmul.f32 %v1259, %v1492
        %v1503 = vmul.f32 %v1260, %v1492
        %v1504 = vmul.f32 %v1261, %v1492
        %v1505 = vmul.f32 %v1262, %v1492
        %v1506 = vmul.f32 %v1263, %v1492
        %v1507 = vmul.f32 %v1264, %v1492
        %v1508 = vmul.f32 %v1265, %v1492
        %v1509 = vadd.f32 %v1472, %v1493
        %v1510 = vadd.f32 %v1473, %v1494
        %v1511 = vadd.f32 %v1474, %v1495
        %v1512 = vadd.f32 %v1475, %v1496
        %v1513 = vadd.f32 %v1476, %v1497
        %v1514 = vadd.f32 %v1477, %v1498
        %v1515 = vadd.f32 %v1478, %v1499
        %v1516 = vadd.f32 %v1479, %v1500
        %v1517 = vadd.f32 %v1480, %v1501
        %v1518 = vadd.f32 %v1481, %v1502
        %v1519 = vadd.f32 %v1482, %v1503
        %v1520 = vadd.f32 %v1483, %v1504
        %v1521 = vadd.f32 %v1484, %v1505
        %v1522 = vadd.f32 %v1485, %v1506
        %v1523 = vadd.f32 %v1486, %v1507
        %v1524 = vadd.f32 %v1487, %v1508
        %v1525 = vld [vmem:[#allocation2 + $0x9] sm:$0xff]
        %v1526 = vld [vmem:[#allocation2 + $0x11] sm:$0xff]
        %v1527 = vld [vmem:[#allocation2 + $0x29] sm:$0xff]
        %v1528 = vld [vmem:[#allocation2 + $0x31] sm:$0xff]
        %v1529 = vld [vmem:[#allocation2 + $0x49] sm:$0xff]
        %v1530 = vld [vmem:[#allocation2 + $0x51] sm:$0xff]
        %v1531 = vld [vmem:[#allocation2 + $0x69] sm:$0xff]
        %v1532 = vld [vmem:[#allocation2 + $0x71] sm:$0xff]
        %v1533 = vld [vmem:[#allocation2 + $0x89] sm:$0xff]
        %v1534 = vld [vmem:[#allocation2 + $0x91] sm:$0xff]
        %v1535 = vld [vmem:[#allocation2 + $0xa9] sm:$0xff]
        %v1536 = vld [vmem:[#allocation2 + $0xb1] sm:$0xff]
        %v1537 = vld [vmem:[#allocation2 + $0xc9] sm:$0xff]
        %v1538 = vld [vmem:[#allocation2 + $0xd1] sm:$0xff]
        %v1539 = vld [vmem:[#allocation2 + $0xe9] sm:$0xff]
        %v1540 = vld [vmem:[#allocation2 + $0xf1] sm:$0xff]
        %v1541 = vld [vmem:[#allocation2 + $0x109] sm:$0xff]
        %v1542 = vld [vmem:[#allocation2 + $0x111] sm:$0xff]
        %v1543 = vld [vmem:[#allocation2 + $0x129] sm:$0xff]
        %v1544 = vld [vmem:[#allocation2 + $0x131] sm:$0xff]
        %v1545 = vld [vmem:[#allocation2 + $0x149] sm:$0xff]
        %v1546 = vld [vmem:[#allocation2 + $0x151] sm:$0xff]
        %v1547 = vld [vmem:[#allocation2 + $0x169] sm:$0xff]
        %v1548 = vld [vmem:[#allocation2 + $0x171] sm:$0xff]
        %v1549 = vld [vmem:[#allocation2 + $0x189] sm:$0xff]
        %v1550 = vld [vmem:[#allocation2 + $0x191] sm:$0xff]
        %v1551 = vld [vmem:[#allocation2 + $0x1a9] sm:$0xff]
        %v1552 = vld [vmem:[#allocation2 + $0x1b1] sm:$0xff]
        %v1553 = vld [vmem:[#allocation6 + $0x4] sm:$0x1]
        %v1554 = vlaneseq
        %v1555 = vshrl.u32 %v1554, 7
        %v1556 = vsub.s32 0, %v1555
        %v1557 = vrot.slane %v1553, %v1556
        %v1558 = vmul.f32 %v1525, %v1557
        %v1559 = vmul.f32 %v1526, %v1557
        %v1560 = vmul.f32 %v1527, %v1557
        %v1561 = vmul.f32 %v1528, %v1557
        %v1562 = vmul.f32 %v1529, %v1557
        %v1563 = vmul.f32 %v1530, %v1557
        %v1564 = vmul.f32 %v1531, %v1557
        %v1565 = vmul.f32 %v1532, %v1557
        %v1566 = vmul.f32 %v1533, %v1557
        %v1567 = vmul.f32 %v1534, %v1557
        %v1568 = vmul.f32 %v1535, %v1557
        %v1569 = vmul.f32 %v1536, %v1557
        %v1570 = vmul.f32 %v1537, %v1557
        %v1571 = vmul.f32 %v1538, %v1557
        %v1572 = vmul.f32 %v1539, %v1557
        %v1573 = vmul.f32 %v1540, %v1557
        %v1574 = vadd.f32 %v1509, %v1558
        %v1575 = vadd.f32 %v1510, %v1559
        %v1576 = vadd.f32 %v1511, %v1560
        %v1577 = vadd.f32 %v1512, %v1561
        %v1578 = vadd.f32 %v1513, %v1562
        %v1579 = vadd.f32 %v1514, %v1563
        %v1580 = vadd.f32 %v1515, %v1564
        %v1581 = vadd.f32 %v1516, %v1565
        %v1582 = vadd.f32 %v1517, %v1566
        %v1583 = vadd.f32 %v1518, %v1567
        %v1584 = vadd.f32 %v1519, %v1568
        %v1585 = vadd.f32 %v1520, %v1569
        %v1586 = vadd.f32 %v1521, %v1570
        %v1587 = vadd.f32 %v1522, %v1571
        %v1588 = vadd.f32 %v1523, %v1572
        %v1589 = vadd.f32 %v1524, %v1573
        %v1590 = vld [vmem:[%s436 + $0x4] sm:$0x1]
        %v1591 = vlaneseq
        %v1592 = vshrl.u32 %v1591, 7
        %v1593 = vsub.s32 0, %v1592
        %v1594 = vrot.slane %v1590, %v1593
        %v1595 = vmul.f32 %v1527, %v1594
        %v1596 = vmul.f32 %v1528, %v1594
        %v1597 = vmul.f32 %v1529, %v1594
        %v1598 = vmul.f32 %v1530, %v1594
        %v1599 = vmul.f32 %v1531, %v1594
        %v1600 = vmul.f32 %v1532, %v1594
        %v1601 = vmul.f32 %v1533, %v1594
        %v1602 = vmul.f32 %v1534, %v1594
        %v1603 = vmul.f32 %v1535, %v1594
        %v1604 = vmul.f32 %v1536, %v1594
        %v1605 = vmul.f32 %v1537, %v1594
        %v1606 = vmul.f32 %v1538, %v1594
        %v1607 = vmul.f32 %v1539, %v1594
        %v1608 = vmul.f32 %v1540, %v1594
        %v1609 = vmul.f32 %v1541, %v1594
        %v1610 = vmul.f32 %v1542, %v1594
        %v1611 = vadd.f32 %v1574, %v1595
        %v1612 = vadd.f32 %v1575, %v1596
        %v1613 = vadd.f32 %v1576, %v1597
        %v1614 = vadd.f32 %v1577, %v1598
        %v1615 = vadd.f32 %v1578, %v1599
        %v1616 = vadd.f32 %v1579, %v1600
        %v1617 = vadd.f32 %v1580, %v1601
        %v1618 = vadd.f32 %v1581, %v1602
        %v1619 = vadd.f32 %v1582, %v1603
        %v1620 = vadd.f32 %v1583, %v1604
        %v1621 = vadd.f32 %v1584, %v1605
        %v1622 = vadd.f32 %v1585, %v1606
        %v1623 = vadd.f32 %v1586, %v1607
        %v1624 = vadd.f32 %v1587, %v1608
        %v1625 = vadd.f32 %v1588, %v1609
        %v1626 = vadd.f32 %v1589, %v1610
        %v1627 = vld [vmem:[%s474 + $0x4] sm:$0x1]
        %v1628 = vlaneseq
        %v1629 = vshrl.u32 %v1628, 7
        %v1630 = vsub.s32 0, %v1629
        %v1631 = vrot.slane %v1627, %v1630
        %v1632 = vmul.f32 %v1529, %v1631
        %v1633 = vmul.f32 %v1530, %v1631
        %v1634 = vmul.f32 %v1531, %v1631
        %v1635 = vmul.f32 %v1532, %v1631
        %v1636 = vmul.f32 %v1533, %v1631
        %v1637 = vmul.f32 %v1534, %v1631
        %v1638 = vmul.f32 %v1535, %v1631
        %v1639 = vmul.f32 %v1536, %v1631
        %v1640 = vmul.f32 %v1537, %v1631
        %v1641 = vmul.f32 %v1538, %v1631
        %v1642 = vmul.f32 %v1539, %v1631
        %v1643 = vmul.f32 %v1540, %v1631
        %v1644 = vmul.f32 %v1541, %v1631
        %v1645 = vmul.f32 %v1542, %v1631
        %v1646 = vmul.f32 %v1543, %v1631
        %v1647 = vmul.f32 %v1544, %v1631
        %v1648 = vadd.f32 %v1611, %v1632
        %v1649 = vadd.f32 %v1612, %v1633
        %v1650 = vadd.f32 %v1613, %v1634
        %v1651 = vadd.f32 %v1614, %v1635
        %v1652 = vadd.f32 %v1615, %v1636
        %v1653 = vadd.f32 %v1616, %v1637
        %v1654 = vadd.f32 %v1617, %v1638
        %v1655 = vadd.f32 %v1618, %v1639
        %v1656 = vadd.f32 %v1619, %v1640
        %v1657 = vadd.f32 %v1620, %v1641
        %v1658 = vadd.f32 %v1621, %v1642
        %v1659 = vadd.f32 %v1622, %v1643
        %v1660 = vadd.f32 %v1623, %v1644
        %v1661 = vadd.f32 %v1624, %v1645
        %v1662 = vadd.f32 %v1625, %v1646
        %v1663 = vadd.f32 %v1626, %v1647
        %v1664 = vld [vmem:[%s512 + $0x4] sm:$0x1]
        %v1665 = vlaneseq
        %v1666 = vshrl.u32 %v1665, 7
        %v1667 = vsub.s32 0, %v1666
        %v1668 = vrot.slane %v1664, %v1667
        %v1669 = vmul.f32 %v1531, %v1668
        %v1670 = vmul.f32 %v1532, %v1668
        %v1671 = vmul.f32 %v1533, %v1668
        %v1672 = vmul.f32 %v1534, %v1668
        %v1673 = vmul.f32 %v1535, %v1668
        %v1674 = vmul.f32 %v1536, %v1668
        %v1675 = vmul.f32 %v1537, %v1668
        %v1676 = vmul.f32 %v1538, %v1668
        %v1677 = vmul.f32 %v1539, %v1668
        %v1678 = vmul.f32 %v1540, %v1668
        %v1679 = vmul.f32 %v1541, %v1668
        %v1680 = vmul.f32 %v1542, %v1668
        %v1681 = vmul.f32 %v1543, %v1668
        %v1682 = vmul.f32 %v1544, %v1668
        %v1683 = vmul.f32 %v1545, %v1668
        %v1684 = vmul.f32 %v1546, %v1668
        %v1685 = vadd.f32 %v1648, %v1669
        %v1686 = vadd.f32 %v1649, %v1670
        %v1687 = vadd.f32 %v1650, %v1671
        %v1688 = vadd.f32 %v1651, %v1672
        %v1689 = vadd.f32 %v1652, %v1673
        %v1690 = vadd.f32 %v1653, %v1674
        %v1691 = vadd.f32 %v1654, %v1675
        %v1692 = vadd.f32 %v1655, %v1676
        %v1693 = vadd.f32 %v1656, %v1677
        %v1694 = vadd.f32 %v1657, %v1678
        %v1695 = vadd.f32 %v1658, %v1679
        %v1696 = vadd.f32 %v1659, %v1680
        %v1697 = vadd.f32 %v1660, %v1681
        %v1698 = vadd.f32 %v1661, %v1682
        %v1699 = vadd.f32 %v1662, %v1683
        %v1700 = vadd.f32 %v1663, %v1684
        %v1701 = vld [vmem:[%s550 + $0x4] sm:$0x1]
        %v1702 = vlaneseq
        %v1703 = vshrl.u32 %v1702, 7
        %v1704 = vsub.s32 0, %v1703
        %v1705 = vrot.slane %v1701, %v1704
        %v1706 = vmul.f32 %v1533, %v1705
        %v1707 = vmul.f32 %v1534, %v1705
        %v1708 = vmul.f32 %v1535, %v1705
        %v1709 = vmul.f32 %v1536, %v1705
        %v1710 = vmul.f32 %v1537, %v1705
        %v1711 = vmul.f32 %v1538, %v1705
        %v1712 = vmul.f32 %v1539, %v1705
        %v1713 = vmul.f32 %v1540, %v1705
        %v1714 = vmul.f32 %v1541, %v1705
        %v1715 = vmul.f32 %v1542, %v1705
        %v1716 = vmul.f32 %v1543, %v1705
        %v1717 = vmul.f32 %v1544, %v1705
        %v1718 = vmul.f32 %v1545, %v1705
        %v1719 = vmul.f32 %v1546, %v1705
        %v1720 = vmul.f32 %v1547, %v1705
        %v1721 = vmul.f32 %v1548, %v1705
        %v1722 = vadd.f32 %v1685, %v1706
        %v1723 = vadd.f32 %v1686, %v1707
        %v1724 = vadd.f32 %v1687, %v1708
        %v1725 = vadd.f32 %v1688, %v1709
        %v1726 = vadd.f32 %v1689, %v1710
        %v1727 = vadd.f32 %v1690, %v1711
        %v1728 = vadd.f32 %v1691, %v1712
        %v1729 = vadd.f32 %v1692, %v1713
        %v1730 = vadd.f32 %v1693, %v1714
        %v1731 = vadd.f32 %v1694, %v1715
        %v1732 = vadd.f32 %v1695, %v1716
        %v1733 = vadd.f32 %v1696, %v1717
        %v1734 = vadd.f32 %v1697, %v1718
        %v1735 = vadd.f32 %v1698, %v1719
        %v1736 = vadd.f32 %v1699, %v1720
        %v1737 = vadd.f32 %v1700, %v1721
        %v1738 = vld [vmem:[%s588 + $0x4] sm:$0x1]
        %v1739 = vlaneseq
        %v1740 = vshrl.u32 %v1739, 7
        %v1741 = vsub.s32 0, %v1740
        %v1742 = vrot.slane %v1738, %v1741
        %v1743 = vmul.f32 %v1535, %v1742
        %v1744 = vmul.f32 %v1536, %v1742
        %v1745 = vmul.f32 %v1537, %v1742
        %v1746 = vmul.f32 %v1538, %v1742
        %v1747 = vmul.f32 %v1539, %v1742
        %v1748 = vmul.f32 %v1540, %v1742
        %v1749 = vmul.f32 %v1541, %v1742
        %v1750 = vmul.f32 %v1542, %v1742
        %v1751 = vmul.f32 %v1543, %v1742
        %v1752 = vmul.f32 %v1544, %v1742
        %v1753 = vmul.f32 %v1545, %v1742
        %v1754 = vmul.f32 %v1546, %v1742
        %v1755 = vmul.f32 %v1547, %v1742
        %v1756 = vmul.f32 %v1548, %v1742
        %v1757 = vmul.f32 %v1549, %v1742
        %v1758 = vmul.f32 %v1550, %v1742
        %v1759 = vadd.f32 %v1722, %v1743
        %v1760 = vadd.f32 %v1723, %v1744
        %v1761 = vadd.f32 %v1724, %v1745
        %v1762 = vadd.f32 %v1725, %v1746
        %v1763 = vadd.f32 %v1726, %v1747
        %v1764 = vadd.f32 %v1727, %v1748
        %v1765 = vadd.f32 %v1728, %v1749
        %v1766 = vadd.f32 %v1729, %v1750
        %v1767 = vadd.f32 %v1730, %v1751
        %v1768 = vadd.f32 %v1731, %v1752
        %v1769 = vadd.f32 %v1732, %v1753
        %v1770 = vadd.f32 %v1733, %v1754
        %v1771 = vadd.f32 %v1734, %v1755
        %v1772 = vadd.f32 %v1735, %v1756
        %v1773 = vadd.f32 %v1736, %v1757
        %v1774 = vadd.f32 %v1737, %v1758
        %v1775 = vld [vmem:[%s626 + $0x4] sm:$0x1]
        %v1776 = vlaneseq
        %v1777 = vshrl.u32 %v1776, 7
        %v1778 = vsub.s32 0, %v1777
        %v1779 = vrot.slane %v1775, %v1778
        %v1780 = vmul.f32 %v1537, %v1779
        %v1781 = vmul.f32 %v1538, %v1779
        %v1782 = vmul.f32 %v1539, %v1779
        %v1783 = vmul.f32 %v1540, %v1779
        %v1784 = vmul.f32 %v1541, %v1779
        %v1785 = vmul.f32 %v1542, %v1779
        %v1786 = vmul.f32 %v1543, %v1779
        %v1787 = vmul.f32 %v1544, %v1779
        %v1788 = vmul.f32 %v1545, %v1779
        %v1789 = vmul.f32 %v1546, %v1779
        %v1790 = vmul.f32 %v1547, %v1779
        %v1791 = vmul.f32 %v1548, %v1779
        %v1792 = vmul.f32 %v1549, %v1779
        %v1793 = vmul.f32 %v1550, %v1779
        %v1794 = vmul.f32 %v1551, %v1779
        %v1795 = vmul.f32 %v1552, %v1779
        %v1796 = vadd.f32 %v1759, %v1780
        %v1797 = vadd.f32 %v1760, %v1781
        %v1798 = vadd.f32 %v1761, %v1782
        %v1799 = vadd.f32 %v1762, %v1783
        %v1800 = vadd.f32 %v1763, %v1784
        %v1801 = vadd.f32 %v1764, %v1785
        %v1802 = vadd.f32 %v1765, %v1786
        %v1803 = vadd.f32 %v1766, %v1787
        %v1804 = vadd.f32 %v1767, %v1788
        %v1805 = vadd.f32 %v1768, %v1789
        %v1806 = vadd.f32 %v1769, %v1790
        %v1807 = vadd.f32 %v1770, %v1791
        %v1808 = vadd.f32 %v1771, %v1792
        %v1809 = vadd.f32 %v1772, %v1793
        %v1810 = vadd.f32 %v1773, %v1794
        %v1811 = vadd.f32 %v1774, %v1795
        %v1812 = vld [vmem:[#allocation2 + $0xa] sm:$0xff]
        %v1813 = vld [vmem:[#allocation2 + $0x12] sm:$0xff]
        %v1814 = vld [vmem:[#allocation2 + $0x2a] sm:$0xff]
        %v1815 = vld [vmem:[#allocation2 + $0x32] sm:$0xff]
        %v1816 = vld [vmem:[#allocation2 + $0x4a] sm:$0xff]
        %v1817 = vld [vmem:[#allocation2 + $0x52] sm:$0xff]
        %v1818 = vld [vmem:[#allocation2 + $0x6a] sm:$0xff]
        %v1819 = vld [vmem:[#allocation2 + $0x72] sm:$0xff]
        %v1820 = vld [vmem:[#allocation2 + $0x8a] sm:$0xff]
        %v1821 = vld [vmem:[#allocation2 + $0x92] sm:$0xff]
        %v1822 = vld [vmem:[#allocation2 + $0xaa] sm:$0xff]
        %v1823 = vld [vmem:[#allocation2 + $0xb2] sm:$0xff]
        %v1824 = vld [vmem:[#allocation2 + $0xca] sm:$0xff]
        %v1825 = vld [vmem:[#allocation2 + $0xd2] sm:$0xff]
        %v1826 = vld [vmem:[#allocation2 + $0xea] sm:$0xff]
        %v1827 = vld [vmem:[#allocation2 + $0xf2] sm:$0xff]
        %v1828 = vld [vmem:[#allocation2 + $0x10a] sm:$0xff]
        %v1829 = vld [vmem:[#allocation2 + $0x112] sm:$0xff]
        %v1830 = vld [vmem:[#allocation2 + $0x12a] sm:$0xff]
        %v1831 = vld [vmem:[#allocation2 + $0x132] sm:$0xff]
        %v1832 = vld [vmem:[#allocation2 + $0x14a] sm:$0xff]
        %v1833 = vld [vmem:[#allocation2 + $0x152] sm:$0xff]
        %v1834 = vld [vmem:[#allocation2 + $0x16a] sm:$0xff]
        %v1835 = vld [vmem:[#allocation2 + $0x172] sm:$0xff]
        %v1836 = vld [vmem:[#allocation2 + $0x18a] sm:$0xff]
        %v1837 = vld [vmem:[#allocation2 + $0x192] sm:$0xff]
        %v1838 = vld [vmem:[#allocation2 + $0x1aa] sm:$0xff]
        %v1839 = vld [vmem:[#allocation2 + $0x1b2] sm:$0xff]
        %v1840 = vld [vmem:[#allocation6 + $0x5] sm:$0x1]
        %v1841 = vlaneseq
        %v1842 = vshrl.u32 %v1841, 7
        %v1843 = vsub.s32 0, %v1842
        %v1844 = vrot.slane %v1840, %v1843
        %v1845 = vmul.f32 %v1812, %v1844
        %v1846 = vmul.f32 %v1813, %v1844
        %v1847 = vmul.f32 %v1814, %v1844
        %v1848 = vmul.f32 %v1815, %v1844
        %v1849 = vmul.f32 %v1816, %v1844
        %v1850 = vmul.f32 %v1817, %v1844
        %v1851 = vmul.f32 %v1818, %v1844
        %v1852 = vmul.f32 %v1819, %v1844
        %v1853 = vmul.f32 %v1820, %v1844
        %v1854 = vmul.f32 %v1821, %v1844
        %v1855 = vmul.f32 %v1822, %v1844
        %v1856 = vmul.f32 %v1823, %v1844
        %v1857 = vmul.f32 %v1824, %v1844
        %v1858 = vmul.f32 %v1825, %v1844
        %v1859 = vmul.f32 %v1826, %v1844
        %v1860 = vmul.f32 %v1827, %v1844
        %v1861 = vadd.f32 %v1796, %v1845
        %v1862 = vadd.f32 %v1797, %v1846
        %v1863 = vadd.f32 %v1798, %v1847
        %v1864 = vadd.f32 %v1799, %v1848
        %v1865 = vadd.f32 %v1800, %v1849
        %v1866 = vadd.f32 %v1801, %v1850
        %v1867 = vadd.f32 %v1802, %v1851
        %v1868 = vadd.f32 %v1803, %v1852
        %v1869 = vadd.f32 %v1804, %v1853
        %v1870 = vadd.f32 %v1805, %v1854
        %v1871 = vadd.f32 %v1806, %v1855
        %v1872 = vadd.f32 %v1807, %v1856
        %v1873 = vadd.f32 %v1808, %v1857
        %v1874 = vadd.f32 %v1809, %v1858
        %v1875 = vadd.f32 %v1810, %v1859
        %v1876 = vadd.f32 %v1811, %v1860
        %v1877 = vld [vmem:[%s436 + $0x5] sm:$0x1]
        %v1878 = vlaneseq
        %v1879 = vshrl.u32 %v1878, 7
        %v1880 = vsub.s32 0, %v1879
        %v1881 = vrot.slane %v1877, %v1880
        %v1882 = vmul.f32 %v1814, %v1881
        %v1883 = vmul.f32 %v1815, %v1881
        %v1884 = vmul.f32 %v1816, %v1881
        %v1885 = vmul.f32 %v1817, %v1881
        %v1886 = vmul.f32 %v1818, %v1881
        %v1887 = vmul.f32 %v1819, %v1881
        %v1888 = vmul.f32 %v1820, %v1881
        %v1889 = vmul.f32 %v1821, %v1881
        %v1890 = vmul.f32 %v1822, %v1881
        %v1891 = vmul.f32 %v1823, %v1881
        %v1892 = vmul.f32 %v1824, %v1881
        %v1893 = vmul.f32 %v1825, %v1881
        %v1894 = vmul.f32 %v1826, %v1881
        %v1895 = vmul.f32 %v1827, %v1881
        %v1896 = vmul.f32 %v1828, %v1881
        %v1897 = vmul.f32 %v1829, %v1881
        %v1898 = vadd.f32 %v1861, %v1882
        %v1899 = vadd.f32 %v1862, %v1883
        %v1900 = vadd.f32 %v1863, %v1884
        %v1901 = vadd.f32 %v1864, %v1885
        %v1902 = vadd.f32 %v1865, %v1886
        %v1903 = vadd.f32 %v1866, %v1887
        %v1904 = vadd.f32 %v1867, %v1888
        %v1905 = vadd.f32 %v1868, %v1889
        %v1906 = vadd.f32 %v1869, %v1890
        %v1907 = vadd.f32 %v1870, %v1891
        %v1908 = vadd.f32 %v1871, %v1892
        %v1909 = vadd.f32 %v1872, %v1893
        %v1910 = vadd.f32 %v1873, %v1894
        %v1911 = vadd.f32 %v1874, %v1895
        %v1912 = vadd.f32 %v1875, %v1896
        %v1913 = vadd.f32 %v1876, %v1897
        %v1914 = vld [vmem:[%s474 + $0x5] sm:$0x1]
        %v1915 = vlaneseq
        %v1916 = vshrl.u32 %v1915, 7
        %v1917 = vsub.s32 0, %v1916
        %v1918 = vrot.slane %v1914, %v1917
        %v1919 = vmul.f32 %v1816, %v1918
        %v1920 = vmul.f32 %v1817, %v1918
        %v1921 = vmul.f32 %v1818, %v1918
        %v1922 = vmul.f32 %v1819, %v1918
        %v1923 = vmul.f32 %v1820, %v1918
        %v1924 = vmul.f32 %v1821, %v1918
        %v1925 = vmul.f32 %v1822, %v1918
        %v1926 = vmul.f32 %v1823, %v1918
        %v1927 = vmul.f32 %v1824, %v1918
        %v1928 = vmul.f32 %v1825, %v1918
        %v1929 = vmul.f32 %v1826, %v1918
        %v1930 = vmul.f32 %v1827, %v1918
        %v1931 = vmul.f32 %v1828, %v1918
        %v1932 = vmul.f32 %v1829, %v1918
        %v1933 = vmul.f32 %v1830, %v1918
        %v1934 = vmul.f32 %v1831, %v1918
        %v1935 = vadd.f32 %v1898, %v1919
        %v1936 = vadd.f32 %v1899, %v1920
        %v1937 = vadd.f32 %v1900, %v1921
        %v1938 = vadd.f32 %v1901, %v1922
        %v1939 = vadd.f32 %v1902, %v1923
        %v1940 = vadd.f32 %v1903, %v1924
        %v1941 = vadd.f32 %v1904, %v1925
        %v1942 = vadd.f32 %v1905, %v1926
        %v1943 = vadd.f32 %v1906, %v1927
        %v1944 = vadd.f32 %v1907, %v1928
        %v1945 = vadd.f32 %v1908, %v1929
        %v1946 = vadd.f32 %v1909, %v1930
        %v1947 = vadd.f32 %v1910, %v1931
        %v1948 = vadd.f32 %v1911, %v1932
        %v1949 = vadd.f32 %v1912, %v1933
        %v1950 = vadd.f32 %v1913, %v1934
        %v1951 = vld [vmem:[%s512 + $0x5] sm:$0x1]
        %v1952 = vlaneseq
        %v1953 = vshrl.u32 %v1952, 7
        %v1954 = vsub.s32 0, %v1953
        %v1955 = vrot.slane %v1951, %v1954
        %v1956 = vmul.f32 %v1818, %v1955
        %v1957 = vmul.f32 %v1819, %v1955
        %v1958 = vmul.f32 %v1820, %v1955
        %v1959 = vmul.f32 %v1821, %v1955
        %v1960 = vmul.f32 %v1822, %v1955
        %v1961 = vmul.f32 %v1823, %v1955
        %v1962 = vmul.f32 %v1824, %v1955
        %v1963 = vmul.f32 %v1825, %v1955
        %v1964 = vmul.f32 %v1826, %v1955
        %v1965 = vmul.f32 %v1827, %v1955
        %v1966 = vmul.f32 %v1828, %v1955
        %v1967 = vmul.f32 %v1829, %v1955
        %v1968 = vmul.f32 %v1830, %v1955
        %v1969 = vmul.f32 %v1831, %v1955
        %v1970 = vmul.f32 %v1832, %v1955
        %v1971 = vmul.f32 %v1833, %v1955
        %v1972 = vadd.f32 %v1935, %v1956
        %v1973 = vadd.f32 %v1936, %v1957
        %v1974 = vadd.f32 %v1937, %v1958
        %v1975 = vadd.f32 %v1938, %v1959
        %v1976 = vadd.f32 %v1939, %v1960
        %v1977 = vadd.f32 %v1940, %v1961
        %v1978 = vadd.f32 %v1941, %v1962
        %v1979 = vadd.f32 %v1942, %v1963
        %v1980 = vadd.f32 %v1943, %v1964
        %v1981 = vadd.f32 %v1944, %v1965
        %v1982 = vadd.f32 %v1945, %v1966
        %v1983 = vadd.f32 %v1946, %v1967
        %v1984 = vadd.f32 %v1947, %v1968
        %v1985 = vadd.f32 %v1948, %v1969
        %v1986 = vadd.f32 %v1949, %v1970
        %v1987 = vadd.f32 %v1950, %v1971
        %v1988 = vld [vmem:[%s550 + $0x5] sm:$0x1]
        %v1989 = vlaneseq
        %v1990 = vshrl.u32 %v1989, 7
        %v1991 = vsub.s32 0, %v1990
        %v1992 = vrot.slane %v1988, %v1991
        %v1993 = vmul.f32 %v1820, %v1992
        %v1994 = vmul.f32 %v1821, %v1992
        %v1995 = vmul.f32 %v1822, %v1992
        %v1996 = vmul.f32 %v1823, %v1992
        %v1997 = vmul.f32 %v1824, %v1992
        %v1998 = vmul.f32 %v1825, %v1992
        %v1999 = vmul.f32 %v1826, %v1992
        %v2000 = vmul.f32 %v1827, %v1992
        %v2001 = vmul.f32 %v1828, %v1992
        %v2002 = vmul.f32 %v1829, %v1992
        %v2003 = vmul.f32 %v1830, %v1992
        %v2004 = vmul.f32 %v1831, %v1992
        %v2005 = vmul.f32 %v1832, %v1992
        %v2006 = vmul.f32 %v1833, %v1992
        %v2007 = vmul.f32 %v1834, %v1992
        %v2008 = vmul.f32 %v1835, %v1992
        %v2009 = vadd.f32 %v1972, %v1993
        %v2010 = vadd.f32 %v1973, %v1994
        %v2011 = vadd.f32 %v1974, %v1995
        %v2012 = vadd.f32 %v1975, %v1996
        %v2013 = vadd.f32 %v1976, %v1997
        %v2014 = vadd.f32 %v1977, %v1998
        %v2015 = vadd.f32 %v1978, %v1999
        %v2016 = vadd.f32 %v1979, %v2000
        %v2017 = vadd.f32 %v1980, %v2001
        %v2018 = vadd.f32 %v1981, %v2002
        %v2019 = vadd.f32 %v1982, %v2003
        %v2020 = vadd.f32 %v1983, %v2004
        %v2021 = vadd.f32 %v1984, %v2005
        %v2022 = vadd.f32 %v1985, %v2006
        %v2023 = vadd.f32 %v1986, %v2007
        %v2024 = vadd.f32 %v1987, %v2008
        %v2025 = vld [vmem:[%s588 + $0x5] sm:$0x1]
        %v2026 = vlaneseq
        %v2027 = vshrl.u32 %v2026, 7
        %v2028 = vsub.s32 0, %v2027
        %v2029 = vrot.slane %v2025, %v2028
        %v2030 = vmul.f32 %v1822, %v2029
        %v2031 = vmul.f32 %v1823, %v2029
        %v2032 = vmul.f32 %v1824, %v2029
        %v2033 = vmul.f32 %v1825, %v2029
        %v2034 = vmul.f32 %v1826, %v2029
        %v2035 = vmul.f32 %v1827, %v2029
        %v2036 = vmul.f32 %v1828, %v2029
        %v2037 = vmul.f32 %v1829, %v2029
        %v2038 = vmul.f32 %v1830, %v2029
        %v2039 = vmul.f32 %v1831, %v2029
        %v2040 = vmul.f32 %v1832, %v2029
        %v2041 = vmul.f32 %v1833, %v2029
        %v2042 = vmul.f32 %v1834, %v2029
        %v2043 = vmul.f32 %v1835, %v2029
        %v2044 = vmul.f32 %v1836, %v2029
        %v2045 = vmul.f32 %v1837, %v2029
        %v2046 = vadd.f32 %v2009, %v2030
        %v2047 = vadd.f32 %v2010, %v2031
        %v2048 = vadd.f32 %v2011, %v2032
        %v2049 = vadd.f32 %v2012, %v2033
        %v2050 = vadd.f32 %v2013, %v2034
        %v2051 = vadd.f32 %v2014, %v2035
        %v2052 = vadd.f32 %v2015, %v2036
        %v2053 = vadd.f32 %v2016, %v2037
        %v2054 = vadd.f32 %v2017, %v2038
        %v2055 = vadd.f32 %v2018, %v2039
        %v2056 = vadd.f32 %v2019, %v2040
        %v2057 = vadd.f32 %v2020, %v2041
        %v2058 = vadd.f32 %v2021, %v2042
        %v2059 = vadd.f32 %v2022, %v2043
        %v2060 = vadd.f32 %v2023, %v2044
        %v2061 = vadd.f32 %v2024, %v2045
        %v2062 = vld [vmem:[%s626 + $0x5] sm:$0x1]
        %v2063 = vlaneseq
        %v2064 = vshrl.u32 %v2063, 7
        %v2065 = vsub.s32 0, %v2064
        %v2066 = vrot.slane %v2062, %v2065
        %v2067 = vmul.f32 %v1824, %v2066
        %v2068 = vmul.f32 %v1825, %v2066
        %v2069 = vmul.f32 %v1826, %v2066
        %v2070 = vmul.f32 %v1827, %v2066
        %v2071 = vmul.f32 %v1828, %v2066
        %v2072 = vmul.f32 %v1829, %v2066
        %v2073 = vmul.f32 %v1830, %v2066
        %v2074 = vmul.f32 %v1831, %v2066
        %v2075 = vmul.f32 %v1832, %v2066
        %v2076 = vmul.f32 %v1833, %v2066
        %v2077 = vmul.f32 %v1834, %v2066
        %v2078 = vmul.f32 %v1835, %v2066
        %v2079 = vmul.f32 %v1836, %v2066
        %v2080 = vmul.f32 %v1837, %v2066
        %v2081 = vmul.f32 %v1838, %v2066
        %v2082 = vmul.f32 %v1839, %v2066
        %v2083 = vadd.f32 %v2046, %v2067
        %v2084 = vadd.f32 %v2047, %v2068
        %v2085 = vadd.f32 %v2048, %v2069
        %v2086 = vadd.f32 %v2049, %v2070
        %v2087 = vadd.f32 %v2050, %v2071
        %v2088 = vadd.f32 %v2051, %v2072
        %v2089 = vadd.f32 %v2052, %v2073
        %v2090 = vadd.f32 %v2053, %v2074
        %v2091 = vadd.f32 %v2054, %v2075
        %v2092 = vadd.f32 %v2055, %v2076
        %v2093 = vadd.f32 %v2056, %v2077
        %v2094 = vadd.f32 %v2057, %v2078
        %v2095 = vadd.f32 %v2058, %v2079
        %v2096 = vadd.f32 %v2059, %v2080
        %v2097 = vadd.f32 %v2060, %v2081
        %v2098 = vadd.f32 %v2061, %v2082
        %v2099 = vld [vmem:[#allocation2 + $0xb] sm:$0xff]
        %v2100 = vld [vmem:[#allocation2 + $0x13] sm:$0xff]
        %v2101 = vld [vmem:[#allocation2 + $0x2b] sm:$0xff]
        %v2102 = vld [vmem:[#allocation2 + $0x33] sm:$0xff]
        %v2103 = vld [vmem:[#allocation2 + $0x4b] sm:$0xff]
        %v2104 = vld [vmem:[#allocation2 + $0x53] sm:$0xff]
        %v2105 = vld [vmem:[#allocation2 + $0x6b] sm:$0xff]
        %v2106 = vld [vmem:[#allocation2 + $0x73] sm:$0xff]
        %v2107 = vld [vmem:[#allocation2 + $0x8b] sm:$0xff]
        %v2108 = vld [vmem:[#allocation2 + $0x93] sm:$0xff]
        %v2109 = vld [vmem:[#allocation2 + $0xab] sm:$0xff]
        %v2110 = vld [vmem:[#allocation2 + $0xb3] sm:$0xff]
        %v2111 = vld [vmem:[#allocation2 + $0xcb] sm:$0xff]
        %v2112 = vld [vmem:[#allocation2 + $0xd3] sm:$0xff]
        %v2113 = vld [vmem:[#allocation2 + $0xeb] sm:$0xff]
        %v2114 = vld [vmem:[#allocation2 + $0xf3] sm:$0xff]
        %v2115 = vld [vmem:[#allocation2 + $0x10b] sm:$0xff]
        %v2116 = vld [vmem:[#allocation2 + $0x113] sm:$0xff]
        %v2117 = vld [vmem:[#allocation2 + $0x12b] sm:$0xff]
        %v2118 = vld [vmem:[#allocation2 + $0x133] sm:$0xff]
        %v2119 = vld [vmem:[#allocation2 + $0x14b] sm:$0xff]
        %v2120 = vld [vmem:[#allocation2 + $0x153] sm:$0xff]
        %v2121 = vld [vmem:[#allocation2 + $0x16b] sm:$0xff]
        %v2122 = vld [vmem:[#allocation2 + $0x173] sm:$0xff]
        %v2123 = vld [vmem:[#allocation2 + $0x18b] sm:$0xff]
        %v2124 = vld [vmem:[#allocation2 + $0x193] sm:$0xff]
        %v2125 = vld [vmem:[#allocation2 + $0x1ab] sm:$0xff]
        %v2126 = vld [vmem:[#allocation2 + $0x1b3] sm:$0xff]
        %v2127 = vld [vmem:[#allocation6 + $0x6] sm:$0x1]
        %v2128 = vlaneseq
        %v2129 = vshrl.u32 %v2128, 7
        %v2130 = vsub.s32 0, %v2129
        %v2131 = vrot.slane %v2127, %v2130
        %v2132 = vmul.f32 %v2099, %v2131
        %v2133 = vmul.f32 %v2100, %v2131
        %v2134 = vmul.f32 %v2101, %v2131
        %v2135 = vmul.f32 %v2102, %v2131
        %v2136 = vmul.f32 %v2103, %v2131
        %v2137 = vmul.f32 %v2104, %v2131
        %v2138 = vmul.f32 %v2105, %v2131
        %v2139 = vmul.f32 %v2106, %v2131
        %v2140 = vmul.f32 %v2107, %v2131
        %v2141 = vmul.f32 %v2108, %v2131
        %v2142 = vmul.f32 %v2109, %v2131
        %v2143 = vmul.f32 %v2110, %v2131
        %v2144 = vmul.f32 %v2111, %v2131
        %v2145 = vmul.f32 %v2112, %v2131
        %v2146 = vmul.f32 %v2113, %v2131
        %v2147 = vmul.f32 %v2114, %v2131
        %v2148 = vadd.f32 %v2083, %v2132
        %v2149 = vadd.f32 %v2084, %v2133
        %v2150 = vadd.f32 %v2085, %v2134
        %v2151 = vadd.f32 %v2086, %v2135
        %v2152 = vadd.f32 %v2087, %v2136
        %v2153 = vadd.f32 %v2088, %v2137
        %v2154 = vadd.f32 %v2089, %v2138
        %v2155 = vadd.f32 %v2090, %v2139
        %v2156 = vadd.f32 %v2091, %v2140
        %v2157 = vadd.f32 %v2092, %v2141
        %v2158 = vadd.f32 %v2093, %v2142
        %v2159 = vadd.f32 %v2094, %v2143
        %v2160 = vadd.f32 %v2095, %v2144
        %v2161 = vadd.f32 %v2096, %v2145
        %v2162 = vadd.f32 %v2097, %v2146
        %v2163 = vadd.f32 %v2098, %v2147
        %v2164 = vld [vmem:[%s436 + $0x6] sm:$0x1]
        %v2165 = vlaneseq
        %v2166 = vshrl.u32 %v2165, 7
        %v2167 = vsub.s32 0, %v2166
        %v2168 = vrot.slane %v2164, %v2167
        %v2169 = vmul.f32 %v2101, %v2168
        %v2170 = vmul.f32 %v2102, %v2168
        %v2171 = vmul.f32 %v2103, %v2168
        %v2172 = vmul.f32 %v2104, %v2168
        %v2173 = vmul.f32 %v2105, %v2168
        %v2174 = vmul.f32 %v2106, %v2168
        %v2175 = vmul.f32 %v2107, %v2168
        %v2176 = vmul.f32 %v2108, %v2168
        %v2177 = vmul.f32 %v2109, %v2168
        %v2178 = vmul.f32 %v2110, %v2168
        %v2179 = vmul.f32 %v2111, %v2168
        %v2180 = vmul.f32 %v2112, %v2168
        %v2181 = vmul.f32 %v2113, %v2168
        %v2182 = vmul.f32 %v2114, %v2168
        %v2183 = vmul.f32 %v2115, %v2168
        %v2184 = vmul.f32 %v2116, %v2168
        %v2185 = vadd.f32 %v2148, %v2169
        %v2186 = vadd.f32 %v2149, %v2170
        %v2187 = vadd.f32 %v2150, %v2171
        %v2188 = vadd.f32 %v2151, %v2172
        %v2189 = vadd.f32 %v2152, %v2173
        %v2190 = vadd.f32 %v2153, %v2174
        %v2191 = vadd.f32 %v2154, %v2175
        %v2192 = vadd.f32 %v2155, %v2176
        %v2193 = vadd.f32 %v2156, %v2177
        %v2194 = vadd.f32 %v2157, %v2178
        %v2195 = vadd.f32 %v2158, %v2179
        %v2196 = vadd.f32 %v2159, %v2180
        %v2197 = vadd.f32 %v2160, %v2181
        %v2198 = vadd.f32 %v2161, %v2182
        %v2199 = vadd.f32 %v2162, %v2183
        %v2200 = vadd.f32 %v2163, %v2184
        %v2201 = vld [vmem:[%s474 + $0x6] sm:$0x1]
        %v2202 = vlaneseq
        %v2203 = vshrl.u32 %v2202, 7
        %v2204 = vsub.s32 0, %v2203
        %v2205 = vrot.slane %v2201, %v2204
        %v2206 = vmul.f32 %v2103, %v2205
        %v2207 = vmul.f32 %v2104, %v2205
        %v2208 = vmul.f32 %v2105, %v2205
        %v2209 = vmul.f32 %v2106, %v2205
        %v2210 = vmul.f32 %v2107, %v2205
        %v2211 = vmul.f32 %v2108, %v2205
        %v2212 = vmul.f32 %v2109, %v2205
        %v2213 = vmul.f32 %v2110, %v2205
        %v2214 = vmul.f32 %v2111, %v2205
        %v2215 = vmul.f32 %v2112, %v2205
        %v2216 = vmul.f32 %v2113, %v2205
        %v2217 = vmul.f32 %v2114, %v2205
        %v2218 = vmul.f32 %v2115, %v2205
        %v2219 = vmul.f32 %v2116, %v2205
        %v2220 = vmul.f32 %v2117, %v2205
        %v2221 = vmul.f32 %v2118, %v2205
        %v2222 = vadd.f32 %v2185, %v2206
        %v2223 = vadd.f32 %v2186, %v2207
        %v2224 = vadd.f32 %v2187, %v2208
        %v2225 = vadd.f32 %v2188, %v2209
        %v2226 = vadd.f32 %v2189, %v2210
        %v2227 = vadd.f32 %v2190, %v2211
        %v2228 = vadd.f32 %v2191, %v2212
        %v2229 = vadd.f32 %v2192, %v2213
        %v2230 = vadd.f32 %v2193, %v2214
        %v2231 = vadd.f32 %v2194, %v2215
        %v2232 = vadd.f32 %v2195, %v2216
        %v2233 = vadd.f32 %v2196, %v2217
        %v2234 = vadd.f32 %v2197, %v2218
        %v2235 = vadd.f32 %v2198, %v2219
        %v2236 = vadd.f32 %v2199, %v2220
        %v2237 = vadd.f32 %v2200, %v2221
        %v2238 = vld [vmem:[%s512 + $0x6] sm:$0x1]
        %v2239 = vlaneseq
        %v2240 = vshrl.u32 %v2239, 7
        %v2241 = vsub.s32 0, %v2240
        %v2242 = vrot.slane %v2238, %v2241
        %v2243 = vmul.f32 %v2105, %v2242
        %v2244 = vmul.f32 %v2106, %v2242
        %v2245 = vmul.f32 %v2107, %v2242
        %v2246 = vmul.f32 %v2108, %v2242
        %v2247 = vmul.f32 %v2109, %v2242
        %v2248 = vmul.f32 %v2110, %v2242
        %v2249 = vmul.f32 %v2111, %v2242
        %v2250 = vmul.f32 %v2112, %v2242
        %v2251 = vmul.f32 %v2113, %v2242
        %v2252 = vmul.f32 %v2114, %v2242
        %v2253 = vmul.f32 %v2115, %v2242
        %v2254 = vmul.f32 %v2116, %v2242
        %v2255 = vmul.f32 %v2117, %v2242
        %v2256 = vmul.f32 %v2118, %v2242
        %v2257 = vmul.f32 %v2119, %v2242
        %v2258 = vmul.f32 %v2120, %v2242
        %v2259 = vadd.f32 %v2222, %v2243
        %v2260 = vadd.f32 %v2223, %v2244
        %v2261 = vadd.f32 %v2224, %v2245
        %v2262 = vadd.f32 %v2225, %v2246
        %v2263 = vadd.f32 %v2226, %v2247
        %v2264 = vadd.f32 %v2227, %v2248
        %v2265 = vadd.f32 %v2228, %v2249
        %v2266 = vadd.f32 %v2229, %v2250
        %v2267 = vadd.f32 %v2230, %v2251
        %v2268 = vadd.f32 %v2231, %v2252
        %v2269 = vadd.f32 %v2232, %v2253
        %v2270 = vadd.f32 %v2233, %v2254
        %v2271 = vadd.f32 %v2234, %v2255
        %v2272 = vadd.f32 %v2235, %v2256
        %v2273 = vadd.f32 %v2236, %v2257
        %v2274 = vadd.f32 %v2237, %v2258
        %v2275 = vld [vmem:[%s550 + $0x6] sm:$0x1]
        %v2276 = vlaneseq
        %v2277 = vshrl.u32 %v2276, 7
        %v2278 = vsub.s32 0, %v2277
        %v2279 = vrot.slane %v2275, %v2278
        %v2280 = vmul.f32 %v2107, %v2279
        %v2281 = vmul.f32 %v2108, %v2279
        %v2282 = vmul.f32 %v2109, %v2279
        %v2283 = vmul.f32 %v2110, %v2279
        %v2284 = vmul.f32 %v2111, %v2279
        %v2285 = vmul.f32 %v2112, %v2279
        %v2286 = vmul.f32 %v2113, %v2279
        %v2287 = vmul.f32 %v2114, %v2279
        %v2288 = vmul.f32 %v2115, %v2279
        %v2289 = vmul.f32 %v2116, %v2279
        %v2290 = vmul.f32 %v2117, %v2279
        %v2291 = vmul.f32 %v2118, %v2279
        %v2292 = vmul.f32 %v2119, %v2279
        %v2293 = vmul.f32 %v2120, %v2279
        %v2294 = vmul.f32 %v2121, %v2279
        %v2295 = vmul.f32 %v2122, %v2279
        %v2296 = vadd.f32 %v2259, %v2280
        %v2297 = vadd.f32 %v2260, %v2281
        %v2298 = vadd.f32 %v2261, %v2282
        %v2299 = vadd.f32 %v2262, %v2283
        %v2300 = vadd.f32 %v2263, %v2284
        %v2301 = vadd.f32 %v2264, %v2285
        %v2302 = vadd.f32 %v2265, %v2286
        %v2303 = vadd.f32 %v2266, %v2287
        %v2304 = vadd.f32 %v2267, %v2288
        %v2305 = vadd.f32 %v2268, %v2289
        %v2306 = vadd.f32 %v2269, %v2290
        %v2307 = vadd.f32 %v2270, %v2291
        %v2308 = vadd.f32 %v2271, %v2292
        %v2309 = vadd.f32 %v2272, %v2293
        %v2310 = vadd.f32 %v2273, %v2294
        %v2311 = vadd.f32 %v2274, %v2295
        %v2312 = vld [vmem:[%s588 + $0x6] sm:$0x1]
        %v2313 = vlaneseq
        %v2314 = vshrl.u32 %v2313, 7
        %v2315 = vsub.s32 0, %v2314
        %v2316 = vrot.slane %v2312, %v2315
        %v2317 = vmul.f32 %v2109, %v2316
        %v2318 = vmul.f32 %v2110, %v2316
        %v2319 = vmul.f32 %v2111, %v2316
        %v2320 = vmul.f32 %v2112, %v2316
        %v2321 = vmul.f32 %v2113, %v2316
        %v2322 = vmul.f32 %v2114, %v2316
        %v2323 = vmul.f32 %v2115, %v2316
        %v2324 = vmul.f32 %v2116, %v2316
        %v2325 = vmul.f32 %v2117, %v2316
        %v2326 = vmul.f32 %v2118, %v2316
        %v2327 = vmul.f32 %v2119, %v2316
        %v2328 = vmul.f32 %v2120, %v2316
        %v2329 = vmul.f32 %v2121, %v2316
        %v2330 = vmul.f32 %v2122, %v2316
        %v2331 = vmul.f32 %v2123, %v2316
        %v2332 = vmul.f32 %v2124, %v2316
        %v2333 = vadd.f32 %v2296, %v2317
        %v2334 = vadd.f32 %v2297, %v2318
        %v2335 = vadd.f32 %v2298, %v2319
        %v2336 = vadd.f32 %v2299, %v2320
        %v2337 = vadd.f32 %v2300, %v2321
        %v2338 = vadd.f32 %v2301, %v2322
        %v2339 = vadd.f32 %v2302, %v2323
        %v2340 = vadd.f32 %v2303, %v2324
        %v2341 = vadd.f32 %v2304, %v2325
        %v2342 = vadd.f32 %v2305, %v2326
        %v2343 = vadd.f32 %v2306, %v2327
        %v2344 = vadd.f32 %v2307, %v2328
        %v2345 = vadd.f32 %v2308, %v2329
        %v2346 = vadd.f32 %v2309, %v2330
        %v2347 = vadd.f32 %v2310, %v2331
        %v2348 = vadd.f32 %v2311, %v2332
        %v2349 = vld [vmem:[%s626 + $0x6] sm:$0x1]
        %v2350 = vlaneseq
        %v2351 = vshrl.u32 %v2350, 7
        %v2352 = vsub.s32 0, %v2351
        %v2353 = vrot.slane %v2349, %v2352
        %v2354 = vmul.f32 %v2111, %v2353
        %v2355 = vmul.f32 %v2112, %v2353
        %v2356 = vmul.f32 %v2113, %v2353
        %v2357 = vmul.f32 %v2114, %v2353
        %v2358 = vmul.f32 %v2115, %v2353
        %v2359 = vmul.f32 %v2116, %v2353
        %v2360 = vmul.f32 %v2117, %v2353
        %v2361 = vmul.f32 %v2118, %v2353
        %v2362 = vmul.f32 %v2119, %v2353
        %v2363 = vmul.f32 %v2120, %v2353
        %v2364 = vmul.f32 %v2121, %v2353
        %v2365 = vmul.f32 %v2122, %v2353
        %v2366 = vmul.f32 %v2123, %v2353
        %v2367 = vmul.f32 %v2124, %v2353
        %v2368 = vmul.f32 %v2125, %v2353
        %v2369 = vmul.f32 %v2126, %v2353
        %v2370 = vadd.f32 %v2333, %v2354
        %v2371 = vadd.f32 %v2334, %v2355
        %v2372 = vadd.f32 %v2335, %v2356
        %v2373 = vadd.f32 %v2336, %v2357
        %v2374 = vadd.f32 %v2337, %v2358
        %v2375 = vadd.f32 %v2338, %v2359
        %v2376 = vadd.f32 %v2339, %v2360
        %v2377 = vadd.f32 %v2340, %v2361
        %v2378 = vadd.f32 %v2341, %v2362
        %v2379 = vadd.f32 %v2342, %v2363
        %v2380 = vadd.f32 %v2343, %v2364
        %v2381 = vadd.f32 %v2344, %v2365
        %v2382 = vadd.f32 %v2345, %v2366
        %v2383 = vadd.f32 %v2346, %v2367
        %v2384 = vadd.f32 %v2347, %v2368
        %v2385 = vadd.f32 %v2348, %v2369
        %2386 = vst [vmem:[%s238] sm:$0xff] %v2370
        %2387 = vst [vmem:[%s238 + $0x8] sm:$0xff] %v2371
        %2388 = vst [vmem:[%s238 + $0x10] sm:$0xff] %v2372
        %2389 = vst [vmem:[%s238 + $0x18] sm:$0xff] %v2373
        %2390 = vst [vmem:[%s238 + $0x20] sm:$0xff] %v2374
        %2391 = vst [vmem:[%s238 + $0x28] sm:$0xff] %v2375
        %2392 = vst [vmem:[%s238 + $0x30] sm:$0xff] %v2376
        %2393 = vst [vmem:[%s238 + $0x38] sm:$0xff] %v2377
        %2394 = vst [vmem:[%s238 + $0x40] sm:$0xff] %v2378
        %2395 = vst [vmem:[%s238 + $0x48] sm:$0xff] %v2379
        %2396 = vst [vmem:[%s238 + $0x50] sm:$0xff] %v2380
        %2397 = vst [vmem:[%s238 + $0x58] sm:$0xff] %v2381
        %2398 = vst [vmem:[%s238 + $0x60] sm:$0xff] %v2382
        %2399 = vst [vmem:[%s238 + $0x68] sm:$0xff] %v2383
        %2400 = vst [vmem:[%s238 + $0x70] sm:$0xff] %v2384
        %2401 = vst [vmem:[%s238 + $0x78] sm:$0xff] %v2385
        %s2402 = scalar_lea.vmem [#allocation2], 256
        %v2403 = vld [vmem:[%s2402 + $0x5] sm:$0xff]
        %v2404 = vld [vmem:[%s2402 + $0xd] sm:$0xff]
        %v2405 = vld [vmem:[%s2402 + $0x25] sm:$0xff]
        %v2406 = vld [vmem:[%s2402 + $0x2d] sm:$0xff]
        %v2407 = vld [vmem:[%s2402 + $0x45] sm:$0xff]
        %v2408 = vld [vmem:[%s2402 + $0x4d] sm:$0xff]
        %v2409 = vld [vmem:[%s2402 + $0x65] sm:$0xff]
        %v2410 = vld [vmem:[%s2402 + $0x6d] sm:$0xff]
        %v2411 = vld [vmem:[%s2402 + $0x85] sm:$0xff]
        %v2412 = vld [vmem:[%s2402 + $0x8d] sm:$0xff]
        %v2413 = vld [vmem:[%s2402 + $0xa5] sm:$0xff]
        %v2414 = vld [vmem:[%s2402 + $0xad] sm:$0xff]
        %v2415 = vld [vmem:[%s2402 + $0xc5] sm:$0xff]
        %v2416 = vld [vmem:[%s2402 + $0xcd] sm:$0xff]
        %v2417 = vld [vmem:[%s2402 + $0xe5] sm:$0xff]
        %v2418 = vld [vmem:[%s2402 + $0xed] sm:$0xff]
        %v2419 = vld [vmem:[%s2402 + $0x105] sm:$0xff]
        %v2420 = vld [vmem:[%s2402 + $0x10d] sm:$0xff]
        %v2421 = vld [vmem:[%s2402 + $0x125] sm:$0xff]
        %v2422 = vld [vmem:[%s2402 + $0x12d] sm:$0xff]
        %v2423 = vld [vmem:[%s2402 + $0x145] sm:$0xff]
        %v2424 = vld [vmem:[%s2402 + $0x14d] sm:$0xff]
        %v2425 = vld [vmem:[%s2402 + $0x165] sm:$0xff]
        %v2426 = vld [vmem:[%s2402 + $0x16d] sm:$0xff]
        %v2427 = vld [vmem:[%s2402 + $0x185] sm:$0xff]
        %v2428 = vld [vmem:[%s2402 + $0x18d] sm:$0xff]
        %v2429 = vld [vmem:[%s2402 + $0x1a5] sm:$0xff]
        %v2430 = vld [vmem:[%s2402 + $0x1ad] sm:$0xff]
        %v2431 = vld [vmem:[#allocation6] sm:$0x1]
        %v2432 = vlaneseq
        %v2433 = vshrl.u32 %v2432, 7
        %v2434 = vsub.s32 0, %v2433
        %v2435 = vrot.slane %v2431, %v2434
        %v2436 = vmul.f32 %v2403, %v2435
        %v2437 = vmul.f32 %v2404, %v2435
        %v2438 = vmul.f32 %v2405, %v2435
        %v2439 = vmul.f32 %v2406, %v2435
        %v2440 = vmul.f32 %v2407, %v2435
        %v2441 = vmul.f32 %v2408, %v2435
        %v2442 = vmul.f32 %v2409, %v2435
        %v2443 = vmul.f32 %v2410, %v2435
        %v2444 = vmul.f32 %v2411, %v2435
        %v2445 = vmul.f32 %v2412, %v2435
        %v2446 = vmul.f32 %v2413, %v2435
        %v2447 = vmul.f32 %v2414, %v2435
        %v2448 = vmul.f32 %v2415, %v2435
        %v2449 = vmul.f32 %v2416, %v2435
        %v2450 = vmul.f32 %v2417, %v2435
        %v2451 = vmul.f32 %v2418, %v2435
        %v2452 = vadd.f32 %v369, %v2436
        %v2453 = vadd.f32 %v369, %v2437
        %v2454 = vadd.f32 %v369, %v2438
        %v2455 = vadd.f32 %v369, %v2439
        %v2456 = vadd.f32 %v369, %v2440
        %v2457 = vadd.f32 %v369, %v2441
        %v2458 = vadd.f32 %v369, %v2442
        %v2459 = vadd.f32 %v369, %v2443
        %v2460 = vadd.f32 %v369, %v2444
        %v2461 = vadd.f32 %v369, %v2445
        %v2462 = vadd.f32 %v369, %v2446
        %v2463 = vadd.f32 %v369, %v2447
        %v2464 = vadd.f32 %v369, %v2448
        %v2465 = vadd.f32 %v369, %v2449
        %v2466 = vadd.f32 %v369, %v2450
        %v2467 = vadd.f32 %v369, %v2451
        %v2468 = vld [vmem:[%s436] sm:$0x1]
        %v2469 = vlaneseq
        %v2470 = vshrl.u32 %v2469, 7
        %v2471 = vsub.s32 0, %v2470
        %v2472 = vrot.slane %v2468, %v2471
        %v2473 = vmul.f32 %v2405, %v2472
        %v2474 = vmul.f32 %v2406, %v2472
        %v2475 = vmul.f32 %v2407, %v2472
        %v2476 = vmul.f32 %v2408, %v2472
        %v2477 = vmul.f32 %v2409, %v2472
        %v2478 = vmul.f32 %v2410, %v2472
        %v2479 = vmul.f32 %v2411, %v2472
        %v2480 = vmul.f32 %v2412, %v2472
        %v2481 = vmul.f32 %v2413, %v2472
        %v2482 = vmul.f32 %v2414, %v2472
        %v2483 = vmul.f32 %v2415, %v2472
        %v2484 = vmul.f32 %v2416, %v2472
        %v2485 = vmul.f32 %v2417, %v2472
        %v2486 = vmul.f32 %v2418, %v2472
        %v2487 = vmul.f32 %v2419, %v2472
        %v2488 = vmul.f32 %v2420, %v2472
        %v2489 = vadd.f32 %v2452, %v2473
        %v2490 = vadd.f32 %v2453, %v2474
        %v2491 = vadd.f32 %v2454, %v2475
        %v2492 = vadd.f32 %v2455, %v2476
        %v2493 = vadd.f32 %v2456, %v2477
        %v2494 = vadd.f32 %v2457, %v2478
        %v2495 = vadd.f32 %v2458, %v2479
        %v2496 = vadd.f32 %v2459, %v2480
        %v2497 = vadd.f32 %v2460, %v2481
        %v2498 = vadd.f32 %v2461, %v2482
        %v2499 = vadd.f32 %v2462, %v2483
        %v2500 = vadd.f32 %v2463, %v2484
        %v2501 = vadd.f32 %v2464, %v2485
        %v2502 = vadd.f32 %v2465, %v2486
        %v2503 = vadd.f32 %v2466, %v2487
        %v2504 = vadd.f32 %v2467, %v2488
        %v2505 = vld [vmem:[%s474] sm:$0x1]
        %v2506 = vlaneseq
        %v2507 = vshrl.u32 %v2506, 7
        %v2508 = vsub.s32 0, %v2507
        %v2509 = vrot.slane %v2505, %v2508
        %v2510 = vmul.f32 %v2407, %v2509
        %v2511 = vmul.f32 %v2408, %v2509
        %v2512 = vmul.f32 %v2409, %v2509
        %v2513 = vmul.f32 %v2410, %v2509
        %v2514 = vmul.f32 %v2411, %v2509
        %v2515 = vmul.f32 %v2412, %v2509
        %v2516 = vmul.f32 %v2413, %v2509
        %v2517 = vmul.f32 %v2414, %v2509
        %v2518 = vmul.f32 %v2415, %v2509
        %v2519 = vmul.f32 %v2416, %v2509
        %v2520 = vmul.f32 %v2417, %v2509
        %v2521 = vmul.f32 %v2418, %v2509
        %v2522 = vmul.f32 %v2419, %v2509
        %v2523 = vmul.f32 %v2420, %v2509
        %v2524 = vmul.f32 %v2421, %v2509
        %v2525 = vmul.f32 %v2422, %v2509
        %v2526 = vadd.f32 %v2489, %v2510
        %v2527 = vadd.f32 %v2490, %v2511
        %v2528 = vadd.f32 %v2491, %v2512
        %v2529 = vadd.f32 %v2492, %v2513
        %v2530 = vadd.f32 %v2493, %v2514
        %v2531 = vadd.f32 %v2494, %v2515
        %v2532 = vadd.f32 %v2495, %v2516
        %v2533 = vadd.f32 %v2496, %v2517
        %v2534 = vadd.f32 %v2497, %v2518
        %v2535 = vadd.f32 %v2498, %v2519
        %v2536 = vadd.f32 %v2499, %v2520
        %v2537 = vadd.f32 %v2500, %v2521
        %v2538 = vadd.f32 %v2501, %v2522
        %v2539 = vadd.f32 %v2502, %v2523
        %v2540 = vadd.f32 %v2503, %v2524
        %v2541 = vadd.f32 %v2504, %v2525
        %v2542 = vld [vmem:[%s512] sm:$0x1]
        %v2543 = vlaneseq
        %v2544 = vshrl.u32 %v2543, 7
        %v2545 = vsub.s32 0, %v2544
        %v2546 = vrot.slane %v2542, %v2545
        %v2547 = vmul.f32 %v2409, %v2546
        %v2548 = vmul.f32 %v2410, %v2546
        %v2549 = vmul.f32 %v2411, %v2546
        %v2550 = vmul.f32 %v2412, %v2546
        %v2551 = vmul.f32 %v2413, %v2546
        %v2552 = vmul.f32 %v2414, %v2546
        %v2553 = vmul.f32 %v2415, %v2546
        %v2554 = vmul.f32 %v2416, %v2546
        %v2555 = vmul.f32 %v2417, %v2546
        %v2556 = vmul.f32 %v2418, %v2546
        %v2557 = vmul.f32 %v2419, %v2546
        %v2558 = vmul.f32 %v2420, %v2546
        %v2559 = vmul.f32 %v2421, %v2546
        %v2560 = vmul.f32 %v2422, %v2546
        %v2561 = vmul.f32 %v2423, %v2546
        %v2562 = vmul.f32 %v2424, %v2546
        %v2563 = vadd.f32 %v2526, %v2547
        %v2564 = vadd.f32 %v2527, %v2548
        %v2565 = vadd.f32 %v2528, %v2549
        %v2566 = vadd.f32 %v2529, %v2550
        %v2567 = vadd.f32 %v2530, %v2551
        %v2568 = vadd.f32 %v2531, %v2552
        %v2569 = vadd.f32 %v2532, %v2553
        %v2570 = vadd.f32 %v2533, %v2554
        %v2571 = vadd.f32 %v2534, %v2555
        %v2572 = vadd.f32 %v2535, %v2556
        %v2573 = vadd.f32 %v2536, %v2557
        %v2574 = vadd.f32 %v2537, %v2558
        %v2575 = vadd.f32 %v2538, %v2559
        %v2576 = vadd.f32 %v2539, %v2560
        %v2577 = vadd.f32 %v2540, %v2561
        %v2578 = vadd.f32 %v2541, %v2562
        %v2579 = vld [vmem:[%s550] sm:$0x1]
        %v2580 = vlaneseq
        %v2581 = vshrl.u32 %v2580, 7
        %v2582 = vsub.s32 0, %v2581
        %v2583 = vrot.slane %v2579, %v2582
        %v2584 = vmul.f32 %v2411, %v2583
        %v2585 = vmul.f32 %v2412, %v2583
        %v2586 = vmul.f32 %v2413, %v2583
        %v2587 = vmul.f32 %v2414, %v2583
        %v2588 = vmul.f32 %v2415, %v2583
        %v2589 = vmul.f32 %v2416, %v2583
        %v2590 = vmul.f32 %v2417, %v2583
        %v2591 = vmul.f32 %v2418, %v2583
        %v2592 = vmul.f32 %v2419, %v2583
        %v2593 = vmul.f32 %v2420, %v2583
        %v2594 = vmul.f32 %v2421, %v2583
        %v2595 = vmul.f32 %v2422, %v2583
        %v2596 = vmul.f32 %v2423, %v2583
        %v2597 = vmul.f32 %v2424, %v2583
        %v2598 = vmul.f32 %v2425, %v2583
        %v2599 = vmul.f32 %v2426, %v2583
        %v2600 = vadd.f32 %v2563, %v2584
        %v2601 = vadd.f32 %v2564, %v2585
        %v2602 = vadd.f32 %v2565, %v2586
        %v2603 = vadd.f32 %v2566, %v2587
        %v2604 = vadd.f32 %v2567, %v2588
        %v2605 = vadd.f32 %v2568, %v2589
        %v2606 = vadd.f32 %v2569, %v2590
        %v2607 = vadd.f32 %v2570, %v2591
        %v2608 = vadd.f32 %v2571, %v2592
        %v2609 = vadd.f32 %v2572, %v2593
        %v2610 = vadd.f32 %v2573, %v2594
        %v2611 = vadd.f32 %v2574, %v2595
        %v2612 = vadd.f32 %v2575, %v2596
        %v2613 = vadd.f32 %v2576, %v2597
        %v2614 = vadd.f32 %v2577, %v2598
        %v2615 = vadd.f32 %v2578, %v2599
        %v2616 = vld [vmem:[%s588] sm:$0x1]
        %v2617 = vlaneseq
        %v2618 = vshrl.u32 %v2617, 7
        %v2619 = vsub.s32 0, %v2618
        %v2620 = vrot.slane %v2616, %v2619
        %v2621 = vmul.f32 %v2413, %v2620
        %v2622 = vmul.f32 %v2414, %v2620
        %v2623 = vmul.f32 %v2415, %v2620
        %v2624 = vmul.f32 %v2416, %v2620
        %v2625 = vmul.f32 %v2417, %v2620
        %v2626 = vmul.f32 %v2418, %v2620
        %v2627 = vmul.f32 %v2419, %v2620
        %v2628 = vmul.f32 %v2420, %v2620
        %v2629 = vmul.f32 %v2421, %v2620
        %v2630 = vmul.f32 %v2422, %v2620
        %v2631 = vmul.f32 %v2423, %v2620
        %v2632 = vmul.f32 %v2424, %v2620
        %v2633 = vmul.f32 %v2425, %v2620
        %v2634 = vmul.f32 %v2426, %v2620
        %v2635 = vmul.f32 %v2427, %v2620
        %v2636 = vmul.f32 %v2428, %v2620
        %v2637 = vadd.f32 %v2600, %v2621
        %v2638 = vadd.f32 %v2601, %v2622
        %v2639 = vadd.f32 %v2602, %v2623
        %v2640 = vadd.f32 %v2603, %v2624
        %v2641 = vadd.f32 %v2604, %v2625
        %v2642 = vadd.f32 %v2605, %v2626
        %v2643 = vadd.f32 %v2606, %v2627
        %v2644 = vadd.f32 %v2607, %v2628
        %v2645 = vadd.f32 %v2608, %v2629
        %v2646 = vadd.f32 %v2609, %v2630
        %v2647 = vadd.f32 %v2610, %v2631
        %v2648 = vadd.f32 %v2611, %v2632
        %v2649 = vadd.f32 %v2612, %v2633
        %v2650 = vadd.f32 %v2613, %v2634
        %v2651 = vadd.f32 %v2614, %v2635
        %v2652 = vadd.f32 %v2615, %v2636
        %v2653 = vld [vmem:[%s626] sm:$0x1]
        %v2654 = vlaneseq
        %v2655 = vshrl.u32 %v2654, 7
        %v2656 = vsub.s32 0, %v2655
        %v2657 = vrot.slane %v2653, %v2656
        %v2658 = vmul.f32 %v2415, %v2657
        %v2659 = vmul.f32 %v2416, %v2657
        %v2660 = vmul.f32 %v2417, %v2657
        %v2661 = vmul.f32 %v2418, %v2657
        %v2662 = vmul.f32 %v2419, %v2657
        %v2663 = vmul.f32 %v2420, %v2657
        %v2664 = vmul.f32 %v2421, %v2657
        %v2665 = vmul.f32 %v2422, %v2657
        %v2666 = vmul.f32 %v2423, %v2657
        %v2667 = vmul.f32 %v2424, %v2657
        %v2668 = vmul.f32 %v2425, %v2657
        %v2669 = vmul.f32 %v2426, %v2657
        %v2670 = vmul.f32 %v2427, %v2657
        %v2671 = vmul.f32 %v2428, %v2657
        %v2672 = vmul.f32 %v2429, %v2657
        %v2673 = vmul.f32 %v2430, %v2657
        %v2674 = vadd.f32 %v2637, %v2658
        %v2675 = vadd.f32 %v2638, %v2659
        %v2676 = vadd.f32 %v2639, %v2660
        %v2677 = vadd.f32 %v2640, %v2661
        %v2678 = vadd.f32 %v2641, %v2662
        %v2679 = vadd.f32 %v2642, %v2663
        %v2680 = vadd.f32 %v2643, %v2664
        %v2681 = vadd.f32 %v2644, %v2665
        %v2682 = vadd.f32 %v2645, %v2666
        %v2683 = vadd.f32 %v2646, %v2667
        %v2684 = vadd.f32 %v2647, %v2668
        %v2685 = vadd.f32 %v2648, %v2669
        %v2686 = vadd.f32 %v2649, %v2670
        %v2687 = vadd.f32 %v2650, %v2671
        %v2688 = vadd.f32 %v2651, %v2672
        %v2689 = vadd.f32 %v2652, %v2673
        %v2690 = vld [vmem:[%s2402 + $0x6] sm:$0xff]
        %v2691 = vld [vmem:[%s2402 + $0xe] sm:$0xff]
        %v2692 = vld [vmem:[%s2402 + $0x26] sm:$0xff]
        %v2693 = vld [vmem:[%s2402 + $0x2e] sm:$0xff]
        %v2694 = vld [vmem:[%s2402 + $0x46] sm:$0xff]
        %v2695 = vld [vmem:[%s2402 + $0x4e] sm:$0xff]
        %v2696 = vld [vmem:[%s2402 + $0x66] sm:$0xff]
        %v2697 = vld [vmem:[%s2402 + $0x6e] sm:$0xff]
        %v2698 = vld [vmem:[%s2402 + $0x86] sm:$0xff]
        %v2699 = vld [vmem:[%s2402 + $0x8e] sm:$0xff]
        %v2700 = vld [vmem:[%s2402 + $0xa6] sm:$0xff]
        %v2701 = vld [vmem:[%s2402 + $0xae] sm:$0xff]
        %v2702 = vld [vmem:[%s2402 + $0xc6] sm:$0xff]
        %v2703 = vld [vmem:[%s2402 + $0xce] sm:$0xff]
        %v2704 = vld [vmem:[%s2402 + $0xe6] sm:$0xff]
        %v2705 = vld [vmem:[%s2402 + $0xee] sm:$0xff]
        %v2706 = vld [vmem:[%s2402 + $0x106] sm:$0xff]
        %v2707 = vld [vmem:[%s2402 + $0x10e] sm:$0xff]
        %v2708 = vld [vmem:[%s2402 + $0x126] sm:$0xff]
        %v2709 = vld [vmem:[%s2402 + $0x12e] sm:$0xff]
        %v2710 = vld [vmem:[%s2402 + $0x146] sm:$0xff]
        %v2711 = vld [vmem:[%s2402 + $0x14e] sm:$0xff]
        %v2712 = vld [vmem:[%s2402 + $0x166] sm:$0xff]
        %v2713 = vld [vmem:[%s2402 + $0x16e] sm:$0xff]
        %v2714 = vld [vmem:[%s2402 + $0x186] sm:$0xff]
        %v2715 = vld [vmem:[%s2402 + $0x18e] sm:$0xff]
        %v2716 = vld [vmem:[%s2402 + $0x1a6] sm:$0xff]
        %v2717 = vld [vmem:[%s2402 + $0x1ae] sm:$0xff]
        %v2718 = vld [vmem:[#allocation6 + $0x1] sm:$0x1]
        %v2719 = vlaneseq
        %v2720 = vshrl.u32 %v2719, 7
        %v2721 = vsub.s32 0, %v2720
        %v2722 = vrot.slane %v2718, %v2721
        %v2723 = vmul.f32 %v2690, %v2722
        %v2724 = vmul.f32 %v2691, %v2722
        %v2725 = vmul.f32 %v2692, %v2722
        %v2726 = vmul.f32 %v2693, %v2722
        %v2727 = vmul.f32 %v2694, %v2722
        %v2728 = vmul.f32 %v2695, %v2722
        %v2729 = vmul.f32 %v2696, %v2722
        %v2730 = vmul.f32 %v2697, %v2722
        %v2731 = vmul.f32 %v2698, %v2722
        %v2732 = vmul.f32 %v2699, %v2722
        %v2733 = vmul.f32 %v2700, %v2722
        %v2734 = vmul.f32 %v2701, %v2722
        %v2735 = vmul.f32 %v2702, %v2722
        %v2736 = vmul.f32 %v2703, %v2722
        %v2737 = vmul.f32 %v2704, %v2722
        %v2738 = vmul.f32 %v2705, %v2722
        %v2739 = vadd.f32 %v2674, %v2723
        %v2740 = vadd.f32 %v2675, %v2724
        %v2741 = vadd.f32 %v2676, %v2725
        %v2742 = vadd.f32 %v2677, %v2726
        %v2743 = vadd.f32 %v2678, %v2727
        %v2744 = vadd.f32 %v2679, %v2728
        %v2745 = vadd.f32 %v2680, %v2729
        %v2746 = vadd.f32 %v2681, %v2730
        %v2747 = vadd.f32 %v2682, %v2731
        %v2748 = vadd.f32 %v2683, %v2732
        %v2749 = vadd.f32 %v2684, %v2733
        %v2750 = vadd.f32 %v2685, %v2734
        %v2751 = vadd.f32 %v2686, %v2735
        %v2752 = vadd.f32 %v2687, %v2736
        %v2753 = vadd.f32 %v2688, %v2737
        %v2754 = vadd.f32 %v2689, %v2738
        %v2755 = vld [vmem:[%s436 + $0x1] sm:$0x1]
        %v2756 = vlaneseq
        %v2757 = vshrl.u32 %v2756, 7
        %v2758 = vsub.s32 0, %v2757
        %v2759 = vrot.slane %v2755, %v2758
        %v2760 = vmul.f32 %v2692, %v2759
        %v2761 = vmul.f32 %v2693, %v2759
        %v2762 = vmul.f32 %v2694, %v2759
        %v2763 = vmul.f32 %v2695, %v2759
        %v2764 = vmul.f32 %v2696, %v2759
        %v2765 = vmul.f32 %v2697, %v2759
        %v2766 = vmul.f32 %v2698, %v2759
        %v2767 = vmul.f32 %v2699, %v2759
        %v2768 = vmul.f32 %v2700, %v2759
        %v2769 = vmul.f32 %v2701, %v2759
        %v2770 = vmul.f32 %v2702, %v2759
        %v2771 = vmul.f32 %v2703, %v2759
        %v2772 = vmul.f32 %v2704, %v2759
        %v2773 = vmul.f32 %v2705, %v2759
        %v2774 = vmul.f32 %v2706, %v2759
        %v2775 = vmul.f32 %v2707, %v2759
        %v2776 = vadd.f32 %v2739, %v2760
        %v2777 = vadd.f32 %v2740, %v2761
        %v2778 = vadd.f32 %v2741, %v2762
        %v2779 = vadd.f32 %v2742, %v2763
        %v2780 = vadd.f32 %v2743, %v2764
        %v2781 = vadd.f32 %v2744, %v2765
        %v2782 = vadd.f32 %v2745, %v2766
        %v2783 = vadd.f32 %v2746, %v2767
        %v2784 = vadd.f32 %v2747, %v2768
        %v2785 = vadd.f32 %v2748, %v2769
        %v2786 = vadd.f32 %v2749, %v2770
        %v2787 = vadd.f32 %v2750, %v2771
        %v2788 = vadd.f32 %v2751, %v2772
        %v2789 = vadd.f32 %v2752, %v2773
        %v2790 = vadd.f32 %v2753, %v2774
        %v2791 = vadd.f32 %v2754, %v2775
        %v2792 = vld [vmem:[%s474 + $0x1] sm:$0x1]
        %v2793 = vlaneseq
        %v2794 = vshrl.u32 %v2793, 7
        %v2795 = vsub.s32 0, %v2794
        %v2796 = vrot.slane %v2792, %v2795
        %v2797 = vmul.f32 %v2694, %v2796
        %v2798 = vmul.f32 %v2695, %v2796
        %v2799 = vmul.f32 %v2696, %v2796
        %v2800 = vmul.f32 %v2697, %v2796
        %v2801 = vmul.f32 %v2698, %v2796
        %v2802 = vmul.f32 %v2699, %v2796
        %v2803 = vmul.f32 %v2700, %v2796
        %v2804 = vmul.f32 %v2701, %v2796
        %v2805 = vmul.f32 %v2702, %v2796
        %v2806 = vmul.f32 %v2703, %v2796
        %v2807 = vmul.f32 %v2704, %v2796
        %v2808 = vmul.f32 %v2705, %v2796
        %v2809 = vmul.f32 %v2706, %v2796
        %v2810 = vmul.f32 %v2707, %v2796
        %v2811 = vmul.f32 %v2708, %v2796
        %v2812 = vmul.f32 %v2709, %v2796
        %v2813 = vadd.f32 %v2776, %v2797
        %v2814 = vadd.f32 %v2777, %v2798
        %v2815 = vadd.f32 %v2778, %v2799
        %v2816 = vadd.f32 %v2779, %v2800
        %v2817 = vadd.f32 %v2780, %v2801
        %v2818 = vadd.f32 %v2781, %v2802
        %v2819 = vadd.f32 %v2782, %v2803
        %v2820 = vadd.f32 %v2783, %v2804
        %v2821 = vadd.f32 %v2784, %v2805
        %v2822 = vadd.f32 %v2785, %v2806
        %v2823 = vadd.f32 %v2786, %v2807
        %v2824 = vadd.f32 %v2787, %v2808
        %v2825 = vadd.f32 %v2788, %v2809
        %v2826 = vadd.f32 %v2789, %v2810
        %v2827 = vadd.f32 %v2790, %v2811
        %v2828 = vadd.f32 %v2791, %v2812
        %v2829 = vld [vmem:[%s512 + $0x1] sm:$0x1]
        %v2830 = vlaneseq
        %v2831 = vshrl.u32 %v2830, 7
        %v2832 = vsub.s32 0, %v2831
        %v2833 = vrot.slane %v2829, %v2832
        %v2834 = vmul.f32 %v2696, %v2833
        %v2835 = vmul.f32 %v2697, %v2833
        %v2836 = vmul.f32 %v2698, %v2833
        %v2837 = vmul.f32 %v2699, %v2833
        %v2838 = vmul.f32 %v2700, %v2833
        %v2839 = vmul.f32 %v2701, %v2833
        %v2840 = vmul.f32 %v2702, %v2833
        %v2841 = vmul.f32 %v2703, %v2833
        %v2842 = vmul.f32 %v2704, %v2833
        %v2843 = vmul.f32 %v2705, %v2833
        %v2844 = vmul.f32 %v2706, %v2833
        %v2845 = vmul.f32 %v2707, %v2833
        %v2846 = vmul.f32 %v2708, %v2833
        %v2847 = vmul.f32 %v2709, %v2833
        %v2848 = vmul.f32 %v2710, %v2833
        %v2849 = vmul.f32 %v2711, %v2833
        %v2850 = vadd.f32 %v2813, %v2834
        %v2851 = vadd.f32 %v2814, %v2835
        %v2852 = vadd.f32 %v2815, %v2836
        %v2853 = vadd.f32 %v2816, %v2837
        %v2854 = vadd.f32 %v2817, %v2838
        %v2855 = vadd.f32 %v2818, %v2839
        %v2856 = vadd.f32 %v2819, %v2840
        %v2857 = vadd.f32 %v2820, %v2841
        %v2858 = vadd.f32 %v2821, %v2842
        %v2859 = vadd.f32 %v2822, %v2843
        %v2860 = vadd.f32 %v2823, %v2844
        %v2861 = vadd.f32 %v2824, %v2845
        %v2862 = vadd.f32 %v2825, %v2846
        %v2863 = vadd.f32 %v2826, %v2847
        %v2864 = vadd.f32 %v2827, %v2848
        %v2865 = vadd.f32 %v2828, %v2849
        %v2866 = vld [vmem:[%s550 + $0x1] sm:$0x1]
        %v2867 = vlaneseq
        %v2868 = vshrl.u32 %v2867, 7
        %v2869 = vsub.s32 0, %v2868
        %v2870 = vrot.slane %v2866, %v2869
        %v2871 = vmul.f32 %v2698, %v2870
        %v2872 = vmul.f32 %v2699, %v2870
        %v2873 = vmul.f32 %v2700, %v2870
        %v2874 = vmul.f32 %v2701, %v2870
        %v2875 = vmul.f32 %v2702, %v2870
        %v2876 = vmul.f32 %v2703, %v2870
        %v2877 = vmul.f32 %v2704, %v2870
        %v2878 = vmul.f32 %v2705, %v2870
        %v2879 = vmul.f32 %v2706, %v2870
        %v2880 = vmul.f32 %v2707, %v2870
        %v2881 = vmul.f32 %v2708, %v2870
        %v2882 = vmul.f32 %v2709, %v2870
        %v2883 = vmul.f32 %v2710, %v2870
        %v2884 = vmul.f32 %v2711, %v2870
        %v2885 = vmul.f32 %v2712, %v2870
        %v2886 = vmul.f32 %v2713, %v2870
        %v2887 = vadd.f32 %v2850, %v2871
        %v2888 = vadd.f32 %v2851, %v2872
        %v2889 = vadd.f32 %v2852, %v2873
        %v2890 = vadd.f32 %v2853, %v2874
        %v2891 = vadd.f32 %v2854, %v2875
        %v2892 = vadd.f32 %v2855, %v2876
        %v2893 = vadd.f32 %v2856, %v2877
        %v2894 = vadd.f32 %v2857, %v2878
        %v2895 = vadd.f32 %v2858, %v2879
        %v2896 = vadd.f32 %v2859, %v2880
        %v2897 = vadd.f32 %v2860, %v2881
        %v2898 = vadd.f32 %v2861, %v2882
        %v2899 = vadd.f32 %v2862, %v2883
        %v2900 = vadd.f32 %v2863, %v2884
        %v2901 = vadd.f32 %v2864, %v2885
        %v2902 = vadd.f32 %v2865, %v2886
        %v2903 = vld [vmem:[%s588 + $0x1] sm:$0x1]
        %v2904 = vlaneseq
        %v2905 = vshrl.u32 %v2904, 7
        %v2906 = vsub.s32 0, %v2905
        %v2907 = vrot.slane %v2903, %v2906
        %v2908 = vmul.f32 %v2700, %v2907
        %v2909 = vmul.f32 %v2701, %v2907
        %v2910 = vmul.f32 %v2702, %v2907
        %v2911 = vmul.f32 %v2703, %v2907
        %v2912 = vmul.f32 %v2704, %v2907
        %v2913 = vmul.f32 %v2705, %v2907
        %v2914 = vmul.f32 %v2706, %v2907
        %v2915 = vmul.f32 %v2707, %v2907
        %v2916 = vmul.f32 %v2708, %v2907
        %v2917 = vmul.f32 %v2709, %v2907
        %v2918 = vmul.f32 %v2710, %v2907
        %v2919 = vmul.f32 %v2711, %v2907
        %v2920 = vmul.f32 %v2712, %v2907
        %v2921 = vmul.f32 %v2713, %v2907
        %v2922 = vmul.f32 %v2714, %v2907
        %v2923 = vmul.f32 %v2715, %v2907
        %v2924 = vadd.f32 %v2887, %v2908
        %v2925 = vadd.f32 %v2888, %v2909
        %v2926 = vadd.f32 %v2889, %v2910
        %v2927 = vadd.f32 %v2890, %v2911
        %v2928 = vadd.f32 %v2891, %v2912
        %v2929 = vadd.f32 %v2892, %v2913
        %v2930 = vadd.f32 %v2893, %v2914
        %v2931 = vadd.f32 %v2894, %v2915
        %v2932 = vadd.f32 %v2895, %v2916
        %v2933 = vadd.f32 %v2896, %v2917
        %v2934 = vadd.f32 %v2897, %v2918
        %v2935 = vadd.f32 %v2898, %v2919
        %v2936 = vadd.f32 %v2899, %v2920
        %v2937 = vadd.f32 %v2900, %v2921
        %v2938 = vadd.f32 %v2901, %v2922
        %v2939 = vadd.f32 %v2902, %v2923
        %v2940 = vld [vmem:[%s626 + $0x1] sm:$0x1]
        %v2941 = vlaneseq
        %v2942 = vshrl.u32 %v2941, 7
        %v2943 = vsub.s32 0, %v2942
        %v2944 = vrot.slane %v2940, %v2943
        %v2945 = vmul.f32 %v2702, %v2944
        %v2946 = vmul.f32 %v2703, %v2944
        %v2947 = vmul.f32 %v2704, %v2944
        %v2948 = vmul.f32 %v2705, %v2944
        %v2949 = vmul.f32 %v2706, %v2944
        %v2950 = vmul.f32 %v2707, %v2944
        %v2951 = vmul.f32 %v2708, %v2944
        %v2952 = vmul.f32 %v2709, %v2944
        %v2953 = vmul.f32 %v2710, %v2944
        %v2954 = vmul.f32 %v2711, %v2944
        %v2955 = vmul.f32 %v2712, %v2944
        %v2956 = vmul.f32 %v2713, %v2944
        %v2957 = vmul.f32 %v2714, %v2944
        %v2958 = vmul.f32 %v2715, %v2944
        %v2959 = vmul.f32 %v2716, %v2944
        %v2960 = vmul.f32 %v2717, %v2944
        %v2961 = vadd.f32 %v2924, %v2945
        %v2962 = vadd.f32 %v2925, %v2946
        %v2963 = vadd.f32 %v2926, %v2947
        %v2964 = vadd.f32 %v2927, %v2948
        %v2965 = vadd.f32 %v2928, %v2949
        %v2966 = vadd.f32 %v2929, %v2950
        %v2967 = vadd.f32 %v2930, %v2951
        %v2968 = vadd.f32 %v2931, %v2952
        %v2969 = vadd.f32 %v2932, %v2953
        %v2970 = vadd.f32 %v2933, %v2954
        %v2971 = vadd.f32 %v2934, %v2955
        %v2972 = vadd.f32 %v2935, %v2956
        %v2973 = vadd.f32 %v2936, %v2957
        %v2974 = vadd.f32 %v2937, %v2958
        %v2975 = vadd.f32 %v2938, %v2959
        %v2976 = vadd.f32 %v2939, %v2960
        %v2977 = vld [vmem:[%s2402 + $0x7] sm:$0xff]
        %v2978 = vld [vmem:[%s2402 + $0xf] sm:$0xff]
        %v2979 = vld [vmem:[%s2402 + $0x27] sm:$0xff]
        %v2980 = vld [vmem:[%s2402 + $0x2f] sm:$0xff]
        %v2981 = vld [vmem:[%s2402 + $0x47] sm:$0xff]
        %v2982 = vld [vmem:[%s2402 + $0x4f] sm:$0xff]
        %v2983 = vld [vmem:[%s2402 + $0x67] sm:$0xff]
        %v2984 = vld [vmem:[%s2402 + $0x6f] sm:$0xff]
        %v2985 = vld [vmem:[%s2402 + $0x87] sm:$0xff]
        %v2986 = vld [vmem:[%s2402 + $0x8f] sm:$0xff]
        %v2987 = vld [vmem:[%s2402 + $0xa7] sm:$0xff]
        %v2988 = vld [vmem:[%s2402 + $0xaf] sm:$0xff]
        %v2989 = vld [vmem:[%s2402 + $0xc7] sm:$0xff]
        %v2990 = vld [vmem:[%s2402 + $0xcf] sm:$0xff]
        %v2991 = vld [vmem:[%s2402 + $0xe7] sm:$0xff]
        %v2992 = vld [vmem:[%s2402 + $0xef] sm:$0xff]
        %v2993 = vld [vmem:[%s2402 + $0x107] sm:$0xff]
        %v2994 = vld [vmem:[%s2402 + $0x10f] sm:$0xff]
        %v2995 = vld [vmem:[%s2402 + $0x127] sm:$0xff]
        %v2996 = vld [vmem:[%s2402 + $0x12f] sm:$0xff]
        %v2997 = vld [vmem:[%s2402 + $0x147] sm:$0xff]
        %v2998 = vld [vmem:[%s2402 + $0x14f] sm:$0xff]
        %v2999 = vld [vmem:[%s2402 + $0x167] sm:$0xff]
        %v3000 = vld [vmem:[%s2402 + $0x16f] sm:$0xff]
        %v3001 = vld [vmem:[%s2402 + $0x187] sm:$0xff]
        %v3002 = vld [vmem:[%s2402 + $0x18f] sm:$0xff]
        %v3003 = vld [vmem:[%s2402 + $0x1a7] sm:$0xff]
        %v3004 = vld [vmem:[%s2402 + $0x1af] sm:$0xff]
        %v3005 = vld [vmem:[#allocation6 + $0x2] sm:$0x1]
        %v3006 = vlaneseq
        %v3007 = vshrl.u32 %v3006, 7
        %v3008 = vsub.s32 0, %v3007
        %v3009 = vrot.slane %v3005, %v3008
        %v3010 = vmul.f32 %v2977, %v3009
        %v3011 = vmul.f32 %v2978, %v3009
        %v3012 = vmul.f32 %v2979, %v3009
        %v3013 = vmul.f32 %v2980, %v3009
        %v3014 = vmul.f32 %v2981, %v3009
        %v3015 = vmul.f32 %v2982, %v3009
        %v3016 = vmul.f32 %v2983, %v3009
        %v3017 = vmul.f32 %v2984, %v3009
        %v3018 = vmul.f32 %v2985, %v3009
        %v3019 = vmul.f32 %v2986, %v3009
        %v3020 = vmul.f32 %v2987, %v3009
        %v3021 = vmul.f32 %v2988, %v3009
        %v3022 = vmul.f32 %v2989, %v3009
        %v3023 = vmul.f32 %v2990, %v3009
        %v3024 = vmul.f32 %v2991, %v3009
        %v3025 = vmul.f32 %v2992, %v3009
        %v3026 = vadd.f32 %v2961, %v3010
        %v3027 = vadd.f32 %v2962, %v3011
        %v3028 = vadd.f32 %v2963, %v3012
        %v3029 = vadd.f32 %v2964, %v3013
        %v3030 = vadd.f32 %v2965, %v3014
        %v3031 = vadd.f32 %v2966, %v3015
        %v3032 = vadd.f32 %v2967, %v3016
        %v3033 = vadd.f32 %v2968, %v3017
        %v3034 = vadd.f32 %v2969, %v3018
        %v3035 = vadd.f32 %v2970, %v3019
        %v3036 = vadd.f32 %v2971, %v3020
        %v3037 = vadd.f32 %v2972, %v3021
        %v3038 = vadd.f32 %v2973, %v3022
        %v3039 = vadd.f32 %v2974, %v3023
        %v3040 = vadd.f32 %v2975, %v3024
        %v3041 = vadd.f32 %v2976, %v3025
        %v3042 = vld [vmem:[%s436 + $0x2] sm:$0x1]
        %v3043 = vlaneseq
        %v3044 = vshrl.u32 %v3043, 7
        %v3045 = vsub.s32 0, %v3044
        %v3046 = vrot.slane %v3042, %v3045
        %v3047 = vmul.f32 %v2979, %v3046
        %v3048 = vmul.f32 %v2980, %v3046
        %v3049 = vmul.f32 %v2981, %v3046
        %v3050 = vmul.f32 %v2982, %v3046
        %v3051 = vmul.f32 %v2983, %v3046
        %v3052 = vmul.f32 %v2984, %v3046
        %v3053 = vmul.f32 %v2985, %v3046
        %v3054 = vmul.f32 %v2986, %v3046
        %v3055 = vmul.f32 %v2987, %v3046
        %v3056 = vmul.f32 %v2988, %v3046
        %v3057 = vmul.f32 %v2989, %v3046
        %v3058 = vmul.f32 %v2990, %v3046
        %v3059 = vmul.f32 %v2991, %v3046
        %v3060 = vmul.f32 %v2992, %v3046
        %v3061 = vmul.f32 %v2993, %v3046
        %v3062 = vmul.f32 %v2994, %v3046
        %v3063 = vadd.f32 %v3026, %v3047
        %v3064 = vadd.f32 %v3027, %v3048
        %v3065 = vadd.f32 %v3028, %v3049
        %v3066 = vadd.f32 %v3029, %v3050
        %v3067 = vadd.f32 %v3030, %v3051
        %v3068 = vadd.f32 %v3031, %v3052
        %v3069 = vadd.f32 %v3032, %v3053
        %v3070 = vadd.f32 %v3033, %v3054
        %v3071 = vadd.f32 %v3034, %v3055
        %v3072 = vadd.f32 %v3035, %v3056
        %v3073 = vadd.f32 %v3036, %v3057
        %v3074 = vadd.f32 %v3037, %v3058
        %v3075 = vadd.f32 %v3038, %v3059
        %v3076 = vadd.f32 %v3039, %v3060
        %v3077 = vadd.f32 %v3040, %v3061
        %v3078 = vadd.f32 %v3041, %v3062
        %v3079 = vld [vmem:[%s474 + $0x2] sm:$0x1]
        %v3080 = vlaneseq
        %v3081 = vshrl.u32 %v3080, 7
        %v3082 = vsub.s32 0, %v3081
        %v3083 = vrot.slane %v3079, %v3082
        %v3084 = vmul.f32 %v2981, %v3083
        %v3085 = vmul.f32 %v2982, %v3083
        %v3086 = vmul.f32 %v2983, %v3083
        %v3087 = vmul.f32 %v2984, %v3083
        %v3088 = vmul.f32 %v2985, %v3083
        %v3089 = vmul.f32 %v2986, %v3083
        %v3090 = vmul.f32 %v2987, %v3083
        %v3091 = vmul.f32 %v2988, %v3083
        %v3092 = vmul.f32 %v2989, %v3083
        %v3093 = vmul.f32 %v2990, %v3083
        %v3094 = vmul.f32 %v2991, %v3083
        %v3095 = vmul.f32 %v2992, %v3083
        %v3096 = vmul.f32 %v2993, %v3083
        %v3097 = vmul.f32 %v2994, %v3083
        %v3098 = vmul.f32 %v2995, %v3083
        %v3099 = vmul.f32 %v2996, %v3083
        %v3100 = vadd.f32 %v3063, %v3084
        %v3101 = vadd.f32 %v3064, %v3085
        %v3102 = vadd.f32 %v3065, %v3086
        %v3103 = vadd.f32 %v3066, %v3087
        %v3104 = vadd.f32 %v3067, %v3088
        %v3105 = vadd.f32 %v3068, %v3089
        %v3106 = vadd.f32 %v3069, %v3090
        %v3107 = vadd.f32 %v3070, %v3091
        %v3108 = vadd.f32 %v3071, %v3092
        %v3109 = vadd.f32 %v3072, %v3093
        %v3110 = vadd.f32 %v3073, %v3094
        %v3111 = vadd.f32 %v3074, %v3095
        %v3112 = vadd.f32 %v3075, %v3096
        %v3113 = vadd.f32 %v3076, %v3097
        %v3114 = vadd.f32 %v3077, %v3098
        %v3115 = vadd.f32 %v3078, %v3099
        %v3116 = vld [vmem:[%s512 + $0x2] sm:$0x1]
        %v3117 = vlaneseq
        %v3118 = vshrl.u32 %v3117, 7
        %v3119 = vsub.s32 0, %v3118
        %v3120 = vrot.slane %v3116, %v3119
        %v3121 = vmul.f32 %v2983, %v3120
        %v3122 = vmul.f32 %v2984, %v3120
        %v3123 = vmul.f32 %v2985, %v3120
        %v3124 = vmul.f32 %v2986, %v3120
        %v3125 = vmul.f32 %v2987, %v3120
        %v3126 = vmul.f32 %v2988, %v3120
        %v3127 = vmul.f32 %v2989, %v3120
        %v3128 = vmul.f32 %v2990, %v3120
        %v3129 = vmul.f32 %v2991, %v3120
        %v3130 = vmul.f32 %v2992, %v3120
        %v3131 = vmul.f32 %v2993, %v3120
        %v3132 = vmul.f32 %v2994, %v3120
        %v3133 = vmul.f32 %v2995, %v3120
        %v3134 = vmul.f32 %v2996, %v3120
        %v3135 = vmul.f32 %v2997, %v3120
        %v3136 = vmul.f32 %v2998, %v3120
        %v3137 = vadd.f32 %v3100, %v3121
        %v3138 = vadd.f32 %v3101, %v3122
        %v3139 = vadd.f32 %v3102, %v3123
        %v3140 = vadd.f32 %v3103, %v3124
        %v3141 = vadd.f32 %v3104, %v3125
        %v3142 = vadd.f32 %v3105, %v3126
        %v3143 = vadd.f32 %v3106, %v3127
        %v3144 = vadd.f32 %v3107, %v3128
        %v3145 = vadd.f32 %v3108, %v3129
        %v3146 = vadd.f32 %v3109, %v3130
        %v3147 = vadd.f32 %v3110, %v3131
        %v3148 = vadd.f32 %v3111, %v3132
        %v3149 = vadd.f32 %v3112, %v3133
        %v3150 = vadd.f32 %v3113, %v3134
        %v3151 = vadd.f32 %v3114, %v3135
        %v3152 = vadd.f32 %v3115, %v3136
        %v3153 = vld [vmem:[%s550 + $0x2] sm:$0x1]
        %v3154 = vlaneseq
        %v3155 = vshrl.u32 %v3154, 7
        %v3156 = vsub.s32 0, %v3155
        %v3157 = vrot.slane %v3153, %v3156
        %v3158 = vmul.f32 %v2985, %v3157
        %v3159 = vmul.f32 %v2986, %v3157
        %v3160 = vmul.f32 %v2987, %v3157
        %v3161 = vmul.f32 %v2988, %v3157
        %v3162 = vmul.f32 %v2989, %v3157
        %v3163 = vmul.f32 %v2990, %v3157
        %v3164 = vmul.f32 %v2991, %v3157
        %v3165 = vmul.f32 %v2992, %v3157
        %v3166 = vmul.f32 %v2993, %v3157
        %v3167 = vmul.f32 %v2994, %v3157
        %v3168 = vmul.f32 %v2995, %v3157
        %v3169 = vmul.f32 %v2996, %v3157
        %v3170 = vmul.f32 %v2997, %v3157
        %v3171 = vmul.f32 %v2998, %v3157
        %v3172 = vmul.f32 %v2999, %v3157
        %v3173 = vmul.f32 %v3000, %v3157
        %v3174 = vadd.f32 %v3137, %v3158
        %v3175 = vadd.f32 %v3138, %v3159
        %v3176 = vadd.f32 %v3139, %v3160
        %v3177 = vadd.f32 %v3140, %v3161
        %v3178 = vadd.f32 %v3141, %v3162
        %v3179 = vadd.f32 %v3142, %v3163
        %v3180 = vadd.f32 %v3143, %v3164
        %v3181 = vadd.f32 %v3144, %v3165
        %v3182 = vadd.f32 %v3145, %v3166
        %v3183 = vadd.f32 %v3146, %v3167
        %v3184 = vadd.f32 %v3147, %v3168
        %v3185 = vadd.f32 %v3148, %v3169
        %v3186 = vadd.f32 %v3149, %v3170
        %v3187 = vadd.f32 %v3150, %v3171
        %v3188 = vadd.f32 %v3151, %v3172
        %v3189 = vadd.f32 %v3152, %v3173
        %v3190 = vld [vmem:[%s588 + $0x2] sm:$0x1]
        %v3191 = vlaneseq
        %v3192 = vshrl.u32 %v3191, 7
        %v3193 = vsub.s32 0, %v3192
        %v3194 = vrot.slane %v3190, %v3193
        %v3195 = vmul.f32 %v2987, %v3194
        %v3196 = vmul.f32 %v2988, %v3194
        %v3197 = vmul.f32 %v2989, %v3194
        %v3198 = vmul.f32 %v2990, %v3194
        %v3199 = vmul.f32 %v2991, %v3194
        %v3200 = vmul.f32 %v2992, %v3194
        %v3201 = vmul.f32 %v2993, %v3194
        %v3202 = vmul.f32 %v2994, %v3194
        %v3203 = vmul.f32 %v2995, %v3194
        %v3204 = vmul.f32 %v2996, %v3194
        %v3205 = vmul.f32 %v2997, %v3194
        %v3206 = vmul.f32 %v2998, %v3194
        %v3207 = vmul.f32 %v2999, %v3194
        %v3208 = vmul.f32 %v3000, %v3194
        %v3209 = vmul.f32 %v3001, %v3194
        %v3210 = vmul.f32 %v3002, %v3194
        %v3211 = vadd.f32 %v3174, %v3195
        %v3212 = vadd.f32 %v3175, %v3196
        %v3213 = vadd.f32 %v3176, %v3197
        %v3214 = vadd.f32 %v3177, %v3198
        %v3215 = vadd.f32 %v3178, %v3199
        %v3216 = vadd.f32 %v3179, %v3200
        %v3217 = vadd.f32 %v3180, %v3201
        %v3218 = vadd.f32 %v3181, %v3202
        %v3219 = vadd.f32 %v3182, %v3203
        %v3220 = vadd.f32 %v3183, %v3204
        %v3221 = vadd.f32 %v3184, %v3205
        %v3222 = vadd.f32 %v3185, %v3206
        %v3223 = vadd.f32 %v3186, %v3207
        %v3224 = vadd.f32 %v3187, %v3208
        %v3225 = vadd.f32 %v3188, %v3209
        %v3226 = vadd.f32 %v3189, %v3210
        %v3227 = vld [vmem:[%s626 + $0x2] sm:$0x1]
        %v3228 = vlaneseq
        %v3229 = vshrl.u32 %v3228, 7
        %v3230 = vsub.s32 0, %v3229
        %v3231 = vrot.slane %v3227, %v3230
        %v3232 = vmul.f32 %v2989, %v3231
        %v3233 = vmul.f32 %v2990, %v3231
        %v3234 = vmul.f32 %v2991, %v3231
        %v3235 = vmul.f32 %v2992, %v3231
        %v3236 = vmul.f32 %v2993, %v3231
        %v3237 = vmul.f32 %v2994, %v3231
        %v3238 = vmul.f32 %v2995, %v3231
        %v3239 = vmul.f32 %v2996, %v3231
        %v3240 = vmul.f32 %v2997, %v3231
        %v3241 = vmul.f32 %v2998, %v3231
        %v3242 = vmul.f32 %v2999, %v3231
        %v3243 = vmul.f32 %v3000, %v3231
        %v3244 = vmul.f32 %v3001, %v3231
        %v3245 = vmul.f32 %v3002, %v3231
        %v3246 = vmul.f32 %v3003, %v3231
        %v3247 = vmul.f32 %v3004, %v3231
        %v3248 = vadd.f32 %v3211, %v3232
        %v3249 = vadd.f32 %v3212, %v3233
        %v3250 = vadd.f32 %v3213, %v3234
        %v3251 = vadd.f32 %v3214, %v3235
        %v3252 = vadd.f32 %v3215, %v3236
        %v3253 = vadd.f32 %v3216, %v3237
        %v3254 = vadd.f32 %v3217, %v3238
        %v3255 = vadd.f32 %v3218, %v3239
        %v3256 = vadd.f32 %v3219, %v3240
        %v3257 = vadd.f32 %v3220, %v3241
        %v3258 = vadd.f32 %v3221, %v3242
        %v3259 = vadd.f32 %v3222, %v3243
        %v3260 = vadd.f32 %v3223, %v3244
        %v3261 = vadd.f32 %v3224, %v3245
        %v3262 = vadd.f32 %v3225, %v3246
        %v3263 = vadd.f32 %v3226, %v3247
        %v3264 = vld [vmem:[%s2402 + $0x8] sm:$0xff]
        %v3265 = vld [vmem:[%s2402 + $0x10] sm:$0xff]
        %v3266 = vld [vmem:[%s2402 + $0x28] sm:$0xff]
        %v3267 = vld [vmem:[%s2402 + $0x30] sm:$0xff]
        %v3268 = vld [vmem:[%s2402 + $0x48] sm:$0xff]
        %v3269 = vld [vmem:[%s2402 + $0x50] sm:$0xff]
        %v3270 = vld [vmem:[%s2402 + $0x68] sm:$0xff]
        %v3271 = vld [vmem:[%s2402 + $0x70] sm:$0xff]
        %v3272 = vld [vmem:[%s2402 + $0x88] sm:$0xff]
        %v3273 = vld [vmem:[%s2402 + $0x90] sm:$0xff]
        %v3274 = vld [vmem:[%s2402 + $0xa8] sm:$0xff]
        %v3275 = vld [vmem:[%s2402 + $0xb0] sm:$0xff]
        %v3276 = vld [vmem:[%s2402 + $0xc8] sm:$0xff]
        %v3277 = vld [vmem:[%s2402 + $0xd0] sm:$0xff]
        %v3278 = vld [vmem:[%s2402 + $0xe8] sm:$0xff]
        %v3279 = vld [vmem:[%s2402 + $0xf0] sm:$0xff]
        %v3280 = vld [vmem:[%s2402 + $0x108] sm:$0xff]
        %v3281 = vld [vmem:[%s2402 + $0x110] sm:$0xff]
        %v3282 = vld [vmem:[%s2402 + $0x128] sm:$0xff]
        %v3283 = vld [vmem:[%s2402 + $0x130] sm:$0xff]
        %v3284 = vld [vmem:[%s2402 + $0x148] sm:$0xff]
        %v3285 = vld [vmem:[%s2402 + $0x150] sm:$0xff]
        %v3286 = vld [vmem:[%s2402 + $0x168] sm:$0xff]
        %v3287 = vld [vmem:[%s2402 + $0x170] sm:$0xff]
        %v3288 = vld [vmem:[%s2402 + $0x188] sm:$0xff]
        %v3289 = vld [vmem:[%s2402 + $0x190] sm:$0xff]
        %v3290 = vld [vmem:[%s2402 + $0x1a8] sm:$0xff]
        %v3291 = vld [vmem:[%s2402 + $0x1b0] sm:$0xff]
        %v3292 = vld [vmem:[#allocation6 + $0x3] sm:$0x1]
        %v3293 = vlaneseq
        %v3294 = vshrl.u32 %v3293, 7
        %v3295 = vsub.s32 0, %v3294
        %v3296 = vrot.slane %v3292, %v3295
        %v3297 = vmul.f32 %v3264, %v3296
        %v3298 = vmul.f32 %v3265, %v3296
        %v3299 = vmul.f32 %v3266, %v3296
        %v3300 = vmul.f32 %v3267, %v3296
        %v3301 = vmul.f32 %v3268, %v3296
        %v3302 = vmul.f32 %v3269, %v3296
        %v3303 = vmul.f32 %v3270, %v3296
        %v3304 = vmul.f32 %v3271, %v3296
        %v3305 = vmul.f32 %v3272, %v3296
        %v3306 = vmul.f32 %v3273, %v3296
        %v3307 = vmul.f32 %v3274, %v3296
        %v3308 = vmul.f32 %v3275, %v3296
        %v3309 = vmul.f32 %v3276, %v3296
        %v3310 = vmul.f32 %v3277, %v3296
        %v3311 = vmul.f32 %v3278, %v3296
        %v3312 = vmul.f32 %v3279, %v3296
        %v3313 = vadd.f32 %v3248, %v3297
        %v3314 = vadd.f32 %v3249, %v3298
        %v3315 = vadd.f32 %v3250, %v3299
        %v3316 = vadd.f32 %v3251, %v3300
        %v3317 = vadd.f32 %v3252, %v3301
        %v3318 = vadd.f32 %v3253, %v3302
        %v3319 = vadd.f32 %v3254, %v3303
        %v3320 = vadd.f32 %v3255, %v3304
        %v3321 = vadd.f32 %v3256, %v3305
        %v3322 = vadd.f32 %v3257, %v3306
        %v3323 = vadd.f32 %v3258, %v3307
        %v3324 = vadd.f32 %v3259, %v3308
        %v3325 = vadd.f32 %v3260, %v3309
        %v3326 = vadd.f32 %v3261, %v3310
        %v3327 = vadd.f32 %v3262, %v3311
        %v3328 = vadd.f32 %v3263, %v3312
        %v3329 = vld [vmem:[%s436 + $0x3] sm:$0x1]
        %v3330 = vlaneseq
        %v3331 = vshrl.u32 %v3330, 7
        %v3332 = vsub.s32 0, %v3331
        %v3333 = vrot.slane %v3329, %v3332
        %v3334 = vmul.f32 %v3266, %v3333
        %v3335 = vmul.f32 %v3267, %v3333
        %v3336 = vmul.f32 %v3268, %v3333
        %v3337 = vmul.f32 %v3269, %v3333
        %v3338 = vmul.f32 %v3270, %v3333
        %v3339 = vmul.f32 %v3271, %v3333
        %v3340 = vmul.f32 %v3272, %v3333
        %v3341 = vmul.f32 %v3273, %v3333
        %v3342 = vmul.f32 %v3274, %v3333
        %v3343 = vmul.f32 %v3275, %v3333
        %v3344 = vmul.f32 %v3276, %v3333
        %v3345 = vmul.f32 %v3277, %v3333
        %v3346 = vmul.f32 %v3278, %v3333
        %v3347 = vmul.f32 %v3279, %v3333
        %v3348 = vmul.f32 %v3280, %v3333
        %v3349 = vmul.f32 %v3281, %v3333
        %v3350 = vadd.f32 %v3313, %v3334
        %v3351 = vadd.f32 %v3314, %v3335
        %v3352 = vadd.f32 %v3315, %v3336
        %v3353 = vadd.f32 %v3316, %v3337
        %v3354 = vadd.f32 %v3317, %v3338
        %v3355 = vadd.f32 %v3318, %v3339
        %v3356 = vadd.f32 %v3319, %v3340
        %v3357 = vadd.f32 %v3320, %v3341
        %v3358 = vadd.f32 %v3321, %v3342
        %v3359 = vadd.f32 %v3322, %v3343
        %v3360 = vadd.f32 %v3323, %v3344
        %v3361 = vadd.f32 %v3324, %v3345
        %v3362 = vadd.f32 %v3325, %v3346
        %v3363 = vadd.f32 %v3326, %v3347
        %v3364 = vadd.f32 %v3327, %v3348
        %v3365 = vadd.f32 %v3328, %v3349
        %v3366 = vld [vmem:[%s474 + $0x3] sm:$0x1]
        %v3367 = vlaneseq
        %v3368 = vshrl.u32 %v3367, 7
        %v3369 = vsub.s32 0, %v3368
        %v3370 = vrot.slane %v3366, %v3369
        %v3371 = vmul.f32 %v3268, %v3370
        %v3372 = vmul.f32 %v3269, %v3370
        %v3373 = vmul.f32 %v3270, %v3370
        %v3374 = vmul.f32 %v3271, %v3370
        %v3375 = vmul.f32 %v3272, %v3370
        %v3376 = vmul.f32 %v3273, %v3370
        %v3377 = vmul.f32 %v3274, %v3370
        %v3378 = vmul.f32 %v3275, %v3370
        %v3379 = vmul.f32 %v3276, %v3370
        %v3380 = vmul.f32 %v3277, %v3370
        %v3381 = vmul.f32 %v3278, %v3370
        %v3382 = vmul.f32 %v3279, %v3370
        %v3383 = vmul.f32 %v3280, %v3370
        %v3384 = vmul.f32 %v3281, %v3370
        %v3385 = vmul.f32 %v3282, %v3370
        %v3386 = vmul.f32 %v3283, %v3370
        %v3387 = vadd.f32 %v3350, %v3371
        %v3388 = vadd.f32 %v3351, %v3372
        %v3389 = vadd.f32 %v3352, %v3373
        %v3390 = vadd.f32 %v3353, %v3374
        %v3391 = vadd.f32 %v3354, %v3375
        %v3392 = vadd.f32 %v3355, %v3376
        %v3393 = vadd.f32 %v3356, %v3377
        %v3394 = vadd.f32 %v3357, %v3378
        %v3395 = vadd.f32 %v3358, %v3379
        %v3396 = vadd.f32 %v3359, %v3380
        %v3397 = vadd.f32 %v3360, %v3381
        %v3398 = vadd.f32 %v3361, %v3382
        %v3399 = vadd.f32 %v3362, %v3383
        %v3400 = vadd.f32 %v3363, %v3384
        %v3401 = vadd.f32 %v3364, %v3385
        %v3402 = vadd.f32 %v3365, %v3386
        %v3403 = vld [vmem:[%s512 + $0x3] sm:$0x1]
        %v3404 = vlaneseq
        %v3405 = vshrl.u32 %v3404, 7
        %v3406 = vsub.s32 0, %v3405
        %v3407 = vrot.slane %v3403, %v3406
        %v3408 = vmul.f32 %v3270, %v3407
        %v3409 = vmul.f32 %v3271, %v3407
        %v3410 = vmul.f32 %v3272, %v3407
        %v3411 = vmul.f32 %v3273, %v3407
        %v3412 = vmul.f32 %v3274, %v3407
        %v3413 = vmul.f32 %v3275, %v3407
        %v3414 = vmul.f32 %v3276, %v3407
        %v3415 = vmul.f32 %v3277, %v3407
        %v3416 = vmul.f32 %v3278, %v3407
        %v3417 = vmul.f32 %v3279, %v3407
        %v3418 = vmul.f32 %v3280, %v3407
        %v3419 = vmul.f32 %v3281, %v3407
        %v3420 = vmul.f32 %v3282, %v3407
        %v3421 = vmul.f32 %v3283, %v3407
        %v3422 = vmul.f32 %v3284, %v3407
        %v3423 = vmul.f32 %v3285, %v3407
        %v3424 = vadd.f32 %v3387, %v3408
        %v3425 = vadd.f32 %v3388, %v3409
        %v3426 = vadd.f32 %v3389, %v3410
        %v3427 = vadd.f32 %v3390, %v3411
        %v3428 = vadd.f32 %v3391, %v3412
        %v3429 = vadd.f32 %v3392, %v3413
        %v3430 = vadd.f32 %v3393, %v3414
        %v3431 = vadd.f32 %v3394, %v3415
        %v3432 = vadd.f32 %v3395, %v3416
        %v3433 = vadd.f32 %v3396, %v3417
        %v3434 = vadd.f32 %v3397, %v3418
        %v3435 = vadd.f32 %v3398, %v3419
        %v3436 = vadd.f32 %v3399, %v3420
        %v3437 = vadd.f32 %v3400, %v3421
        %v3438 = vadd.f32 %v3401, %v3422
        %v3439 = vadd.f32 %v3402, %v3423
        %v3440 = vld [vmem:[%s550 + $0x3] sm:$0x1]
        %v3441 = vlaneseq
        %v3442 = vshrl.u32 %v3441, 7
        %v3443 = vsub.s32 0, %v3442
        %v3444 = vrot.slane %v3440, %v3443
        %v3445 = vmul.f32 %v3272, %v3444
        %v3446 = vmul.f32 %v3273, %v3444
        %v3447 = vmul.f32 %v3274, %v3444
        %v3448 = vmul.f32 %v3275, %v3444
        %v3449 = vmul.f32 %v3276, %v3444
        %v3450 = vmul.f32 %v3277, %v3444
        %v3451 = vmul.f32 %v3278, %v3444
        %v3452 = vmul.f32 %v3279, %v3444
        %v3453 = vmul.f32 %v3280, %v3444
        %v3454 = vmul.f32 %v3281, %v3444
        %v3455 = vmul.f32 %v3282, %v3444
        %v3456 = vmul.f32 %v3283, %v3444
        %v3457 = vmul.f32 %v3284, %v3444
        %v3458 = vmul.f32 %v3285, %v3444
        %v3459 = vmul.f32 %v3286, %v3444
        %v3460 = vmul.f32 %v3287, %v3444
        %v3461 = vadd.f32 %v3424, %v3445
        %v3462 = vadd.f32 %v3425, %v3446
        %v3463 = vadd.f32 %v3426, %v3447
        %v3464 = vadd.f32 %v3427, %v3448
        %v3465 = vadd.f32 %v3428, %v3449
        %v3466 = vadd.f32 %v3429, %v3450
        %v3467 = vadd.f32 %v3430, %v3451
        %v3468 = vadd.f32 %v3431, %v3452
        %v3469 = vadd.f32 %v3432, %v3453
        %v3470 = vadd.f32 %v3433, %v3454
        %v3471 = vadd.f32 %v3434, %v3455
        %v3472 = vadd.f32 %v3435, %v3456
        %v3473 = vadd.f32 %v3436, %v3457
        %v3474 = vadd.f32 %v3437, %v3458
        %v3475 = vadd.f32 %v3438, %v3459
        %v3476 = vadd.f32 %v3439, %v3460
        %v3477 = vld [vmem:[%s588 + $0x3] sm:$0x1]
        %v3478 = vlaneseq
        %v3479 = vshrl.u32 %v3478, 7
        %v3480 = vsub.s32 0, %v3479
        %v3481 = vrot.slane %v3477, %v3480
        %v3482 = vmul.f32 %v3274, %v3481
        %v3483 = vmul.f32 %v3275, %v3481
        %v3484 = vmul.f32 %v3276, %v3481
        %v3485 = vmul.f32 %v3277, %v3481
        %v3486 = vmul.f32 %v3278, %v3481
        %v3487 = vmul.f32 %v3279, %v3481
        %v3488 = vmul.f32 %v3280, %v3481
        %v3489 = vmul.f32 %v3281, %v3481
        %v3490 = vmul.f32 %v3282, %v3481
        %v3491 = vmul.f32 %v3283, %v3481
        %v3492 = vmul.f32 %v3284, %v3481
        %v3493 = vmul.f32 %v3285, %v3481
        %v3494 = vmul.f32 %v3286, %v3481
        %v3495 = vmul.f32 %v3287, %v3481
        %v3496 = vmul.f32 %v3288, %v3481
        %v3497 = vmul.f32 %v3289, %v3481
        %v3498 = vadd.f32 %v3461, %v3482
        %v3499 = vadd.f32 %v3462, %v3483
        %v3500 = vadd.f32 %v3463, %v3484
        %v3501 = vadd.f32 %v3464, %v3485
        %v3502 = vadd.f32 %v3465, %v3486
        %v3503 = vadd.f32 %v3466, %v3487
        %v3504 = vadd.f32 %v3467, %v3488
        %v3505 = vadd.f32 %v3468, %v3489
        %v3506 = vadd.f32 %v3469, %v3490
        %v3507 = vadd.f32 %v3470, %v3491
        %v3508 = vadd.f32 %v3471, %v3492
        %v3509 = vadd.f32 %v3472, %v3493
        %v3510 = vadd.f32 %v3473, %v3494
        %v3511 = vadd.f32 %v3474, %v3495
        %v3512 = vadd.f32 %v3475, %v3496
        %v3513 = vadd.f32 %v3476, %v3497
        %v3514 = vld [vmem:[%s626 + $0x3] sm:$0x1]
        %v3515 = vlaneseq
        %v3516 = vshrl.u32 %v3515, 7
        %v3517 = vsub.s32 0, %v3516
        %v3518 = vrot.slane %v3514, %v3517
        %v3519 = vmul.f32 %v3276, %v3518
        %v3520 = vmul.f32 %v3277, %v3518
        %v3521 = vmul.f32 %v3278, %v3518
        %v3522 = vmul.f32 %v3279, %v3518
        %v3523 = vmul.f32 %v3280, %v3518
        %v3524 = vmul.f32 %v3281, %v3518
        %v3525 = vmul.f32 %v3282, %v3518
        %v3526 = vmul.f32 %v3283, %v3518
        %v3527 = vmul.f32 %v3284, %v3518
        %v3528 = vmul.f32 %v3285, %v3518
        %v3529 = vmul.f32 %v3286, %v3518
        %v3530 = vmul.f32 %v3287, %v3518
        %v3531 = vmul.f32 %v3288, %v3518
        %v3532 = vmul.f32 %v3289, %v3518
        %v3533 = vmul.f32 %v3290, %v3518
        %v3534 = vmul.f32 %v3291, %v3518
        %v3535 = vadd.f32 %v3498, %v3519
        %v3536 = vadd.f32 %v3499, %v3520
        %v3537 = vadd.f32 %v3500, %v3521
        %v3538 = vadd.f32 %v3501, %v3522
        %v3539 = vadd.f32 %v3502, %v3523
        %v3540 = vadd.f32 %v3503, %v3524
        %v3541 = vadd.f32 %v3504, %v3525
        %v3542 = vadd.f32 %v3505, %v3526
        %v3543 = vadd.f32 %v3506, %v3527
        %v3544 = vadd.f32 %v3507, %v3528
        %v3545 = vadd.f32 %v3508, %v3529
        %v3546 = vadd.f32 %v3509, %v3530
        %v3547 = vadd.f32 %v3510, %v3531
        %v3548 = vadd.f32 %v3511, %v3532
        %v3549 = vadd.f32 %v3512, %v3533
        %v3550 = vadd.f32 %v3513, %v3534
        %v3551 = vld [vmem:[%s2402 + $0x9] sm:$0xff]
        %v3552 = vld [vmem:[%s2402 + $0x11] sm:$0xff]
        %v3553 = vld [vmem:[%s2402 + $0x29] sm:$0xff]
        %v3554 = vld [vmem:[%s2402 + $0x31] sm:$0xff]
        %v3555 = vld [vmem:[%s2402 + $0x49] sm:$0xff]
        %v3556 = vld [vmem:[%s2402 + $0x51] sm:$0xff]
        %v3557 = vld [vmem:[%s2402 + $0x69] sm:$0xff]
        %v3558 = vld [vmem:[%s2402 + $0x71] sm:$0xff]
        %v3559 = vld [vmem:[%s2402 + $0x89] sm:$0xff]
        %v3560 = vld [vmem:[%s2402 + $0x91] sm:$0xff]
        %v3561 = vld [vmem:[%s2402 + $0xa9] sm:$0xff]
        %v3562 = vld [vmem:[%s2402 + $0xb1] sm:$0xff]
        %v3563 = vld [vmem:[%s2402 + $0xc9] sm:$0xff]
        %v3564 = vld [vmem:[%s2402 + $0xd1] sm:$0xff]
        %v3565 = vld [vmem:[%s2402 + $0xe9] sm:$0xff]
        %v3566 = vld [vmem:[%s2402 + $0xf1] sm:$0xff]
        %v3567 = vld [vmem:[%s2402 + $0x109] sm:$0xff]
        %v3568 = vld [vmem:[%s2402 + $0x111] sm:$0xff]
        %v3569 = vld [vmem:[%s2402 + $0x129] sm:$0xff]
        %v3570 = vld [vmem:[%s2402 + $0x131] sm:$0xff]
        %v3571 = vld [vmem:[%s2402 + $0x149] sm:$0xff]
        %v3572 = vld [vmem:[%s2402 + $0x151] sm:$0xff]
        %v3573 = vld [vmem:[%s2402 + $0x169] sm:$0xff]
        %v3574 = vld [vmem:[%s2402 + $0x171] sm:$0xff]
        %v3575 = vld [vmem:[%s2402 + $0x189] sm:$0xff]
        %v3576 = vld [vmem:[%s2402 + $0x191] sm:$0xff]
        %v3577 = vld [vmem:[%s2402 + $0x1a9] sm:$0xff]
        %v3578 = vld [vmem:[%s2402 + $0x1b1] sm:$0xff]
        %v3579 = vld [vmem:[#allocation6 + $0x4] sm:$0x1]
        %v3580 = vlaneseq
        %v3581 = vshrl.u32 %v3580, 7
        %v3582 = vsub.s32 0, %v3581
        %v3583 = vrot.slane %v3579, %v3582
        %v3584 = vmul.f32 %v3551, %v3583
        %v3585 = vmul.f32 %v3552, %v3583
        %v3586 = vmul.f32 %v3553, %v3583
        %v3587 = vmul.f32 %v3554, %v3583
        %v3588 = vmul.f32 %v3555, %v3583
        %v3589 = vmul.f32 %v3556, %v3583
        %v3590 = vmul.f32 %v3557, %v3583
        %v3591 = vmul.f32 %v3558, %v3583
        %v3592 = vmul.f32 %v3559, %v3583
        %v3593 = vmul.f32 %v3560, %v3583
        %v3594 = vmul.f32 %v3561, %v3583
        %v3595 = vmul.f32 %v3562, %v3583
        %v3596 = vmul.f32 %v3563, %v3583
        %v3597 = vmul.f32 %v3564, %v3583
        %v3598 = vmul.f32 %v3565, %v3583
        %v3599 = vmul.f32 %v3566, %v3583
        %v3600 = vadd.f32 %v3535, %v3584
        %v3601 = vadd.f32 %v3536, %v3585
        %v3602 = vadd.f32 %v3537, %v3586
        %v3603 = vadd.f32 %v3538, %v3587
        %v3604 = vadd.f32 %v3539, %v3588
        %v3605 = vadd.f32 %v3540, %v3589
        %v3606 = vadd.f32 %v3541, %v3590
        %v3607 = vadd.f32 %v3542, %v3591
        %v3608 = vadd.f32 %v3543, %v3592
        %v3609 = vadd.f32 %v3544, %v3593
        %v3610 = vadd.f32 %v3545, %v3594
        %v3611 = vadd.f32 %v3546, %v3595
        %v3612 = vadd.f32 %v3547, %v3596
        %v3613 = vadd.f32 %v3548, %v3597
        %v3614 = vadd.f32 %v3549, %v3598
        %v3615 = vadd.f32 %v3550, %v3599
        %v3616 = vld [vmem:[%s436 + $0x4] sm:$0x1]
        %v3617 = vlaneseq
        %v3618 = vshrl.u32 %v3617, 7
        %v3619 = vsub.s32 0, %v3618
        %v3620 = vrot.slane %v3616, %v3619
        %v3621 = vmul.f32 %v3553, %v3620
        %v3622 = vmul.f32 %v3554, %v3620
        %v3623 = vmul.f32 %v3555, %v3620
        %v3624 = vmul.f32 %v3556, %v3620
        %v3625 = vmul.f32 %v3557, %v3620
        %v3626 = vmul.f32 %v3558, %v3620
        %v3627 = vmul.f32 %v3559, %v3620
        %v3628 = vmul.f32 %v3560, %v3620
        %v3629 = vmul.f32 %v3561, %v3620
        %v3630 = vmul.f32 %v3562, %v3620
        %v3631 = vmul.f32 %v3563, %v3620
        %v3632 = vmul.f32 %v3564, %v3620
        %v3633 = vmul.f32 %v3565, %v3620
        %v3634 = vmul.f32 %v3566, %v3620
        %v3635 = vmul.f32 %v3567, %v3620
        %v3636 = vmul.f32 %v3568, %v3620
        %v3637 = vadd.f32 %v3600, %v3621
        %v3638 = vadd.f32 %v3601, %v3622
        %v3639 = vadd.f32 %v3602, %v3623
        %v3640 = vadd.f32 %v3603, %v3624
        %v3641 = vadd.f32 %v3604, %v3625
        %v3642 = vadd.f32 %v3605, %v3626
        %v3643 = vadd.f32 %v3606, %v3627
        %v3644 = vadd.f32 %v3607, %v3628
        %v3645 = vadd.f32 %v3608, %v3629
        %v3646 = vadd.f32 %v3609, %v3630
        %v3647 = vadd.f32 %v3610, %v3631
        %v3648 = vadd.f32 %v3611, %v3632
        %v3649 = vadd.f32 %v3612, %v3633
        %v3650 = vadd.f32 %v3613, %v3634
        %v3651 = vadd.f32 %v3614, %v3635
        %v3652 = vadd.f32 %v3615, %v3636
        %v3653 = vld [vmem:[%s474 + $0x4] sm:$0x1]
        %v3654 = vlaneseq
        %v3655 = vshrl.u32 %v3654, 7
        %v3656 = vsub.s32 0, %v3655
        %v3657 = vrot.slane %v3653, %v3656
        %v3658 = vmul.f32 %v3555, %v3657
        %v3659 = vmul.f32 %v3556, %v3657
        %v3660 = vmul.f32 %v3557, %v3657
        %v3661 = vmul.f32 %v3558, %v3657
        %v3662 = vmul.f32 %v3559, %v3657
        %v3663 = vmul.f32 %v3560, %v3657
        %v3664 = vmul.f32 %v3561, %v3657
        %v3665 = vmul.f32 %v3562, %v3657
        %v3666 = vmul.f32 %v3563, %v3657
        %v3667 = vmul.f32 %v3564, %v3657
        %v3668 = vmul.f32 %v3565, %v3657
        %v3669 = vmul.f32 %v3566, %v3657
        %v3670 = vmul.f32 %v3567, %v3657
        %v3671 = vmul.f32 %v3568, %v3657
        %v3672 = vmul.f32 %v3569, %v3657
        %v3673 = vmul.f32 %v3570, %v3657
        %v3674 = vadd.f32 %v3637, %v3658
        %v3675 = vadd.f32 %v3638, %v3659
        %v3676 = vadd.f32 %v3639, %v3660
        %v3677 = vadd.f32 %v3640, %v3661
        %v3678 = vadd.f32 %v3641, %v3662
        %v3679 = vadd.f32 %v3642, %v3663
        %v3680 = vadd.f32 %v3643, %v3664
        %v3681 = vadd.f32 %v3644, %v3665
        %v3682 = vadd.f32 %v3645, %v3666
        %v3683 = vadd.f32 %v3646, %v3667
        %v3684 = vadd.f32 %v3647, %v3668
        %v3685 = vadd.f32 %v3648, %v3669
        %v3686 = vadd.f32 %v3649, %v3670
        %v3687 = vadd.f32 %v3650, %v3671
        %v3688 = vadd.f32 %v3651, %v3672
        %v3689 = vadd.f32 %v3652, %v3673
        %v3690 = vld [vmem:[%s512 + $0x4] sm:$0x1]
        %v3691 = vlaneseq
        %v3692 = vshrl.u32 %v3691, 7
        %v3693 = vsub.s32 0, %v3692
        %v3694 = vrot.slane %v3690, %v3693
        %v3695 = vmul.f32 %v3557, %v3694
        %v3696 = vmul.f32 %v3558, %v3694
        %v3697 = vmul.f32 %v3559, %v3694
        %v3698 = vmul.f32 %v3560, %v3694
        %v3699 = vmul.f32 %v3561, %v3694
        %v3700 = vmul.f32 %v3562, %v3694
        %v3701 = vmul.f32 %v3563, %v3694
        %v3702 = vmul.f32 %v3564, %v3694
        %v3703 = vmul.f32 %v3565, %v3694
        %v3704 = vmul.f32 %v3566, %v3694
        %v3705 = vmul.f32 %v3567, %v3694
        %v3706 = vmul.f32 %v3568, %v3694
        %v3707 = vmul.f32 %v3569, %v3694
        %v3708 = vmul.f32 %v3570, %v3694
        %v3709 = vmul.f32 %v3571, %v3694
        %v3710 = vmul.f32 %v3572, %v3694
        %v3711 = vadd.f32 %v3674, %v3695
        %v3712 = vadd.f32 %v3675, %v3696
        %v3713 = vadd.f32 %v3676, %v3697
        %v3714 = vadd.f32 %v3677, %v3698
        %v3715 = vadd.f32 %v3678, %v3699
        %v3716 = vadd.f32 %v3679, %v3700
        %v3717 = vadd.f32 %v3680, %v3701
        %v3718 = vadd.f32 %v3681, %v3702
        %v3719 = vadd.f32 %v3682, %v3703
        %v3720 = vadd.f32 %v3683, %v3704
        %v3721 = vadd.f32 %v3684, %v3705
        %v3722 = vadd.f32 %v3685, %v3706
        %v3723 = vadd.f32 %v3686, %v3707
        %v3724 = vadd.f32 %v3687, %v3708
        %v3725 = vadd.f32 %v3688, %v3709
        %v3726 = vadd.f32 %v3689, %v3710
        %v3727 = vld [vmem:[%s550 + $0x4] sm:$0x1]
        %v3728 = vlaneseq
        %v3729 = vshrl.u32 %v3728, 7
        %v3730 = vsub.s32 0, %v3729
        %v3731 = vrot.slane %v3727, %v3730
        %v3732 = vmul.f32 %v3559, %v3731
        %v3733 = vmul.f32 %v3560, %v3731
        %v3734 = vmul.f32 %v3561, %v3731
        %v3735 = vmul.f32 %v3562, %v3731
        %v3736 = vmul.f32 %v3563, %v3731
        %v3737 = vmul.f32 %v3564, %v3731
        %v3738 = vmul.f32 %v3565, %v3731
        %v3739 = vmul.f32 %v3566, %v3731
        %v3740 = vmul.f32 %v3567, %v3731
        %v3741 = vmul.f32 %v3568, %v3731
        %v3742 = vmul.f32 %v3569, %v3731
        %v3743 = vmul.f32 %v3570, %v3731
        %v3744 = vmul.f32 %v3571, %v3731
        %v3745 = vmul.f32 %v3572, %v3731
        %v3746 = vmul.f32 %v3573, %v3731
        %v3747 = vmul.f32 %v3574, %v3731
        %v3748 = vadd.f32 %v3711, %v3732
        %v3749 = vadd.f32 %v3712, %v3733
        %v3750 = vadd.f32 %v3713, %v3734
        %v3751 = vadd.f32 %v3714, %v3735
        %v3752 = vadd.f32 %v3715, %v3736
        %v3753 = vadd.f32 %v3716, %v3737
        %v3754 = vadd.f32 %v3717, %v3738
        %v3755 = vadd.f32 %v3718, %v3739
        %v3756 = vadd.f32 %v3719, %v3740
        %v3757 = vadd.f32 %v3720, %v3741
        %v3758 = vadd.f32 %v3721, %v3742
        %v3759 = vadd.f32 %v3722, %v3743
        %v3760 = vadd.f32 %v3723, %v3744
        %v3761 = vadd.f32 %v3724, %v3745
        %v3762 = vadd.f32 %v3725, %v3746
        %v3763 = vadd.f32 %v3726, %v3747
        %v3764 = vld [vmem:[%s588 + $0x4] sm:$0x1]
        %v3765 = vlaneseq
        %v3766 = vshrl.u32 %v3765, 7
        %v3767 = vsub.s32 0, %v3766
        %v3768 = vrot.slane %v3764, %v3767
        %v3769 = vmul.f32 %v3561, %v3768
        %v3770 = vmul.f32 %v3562, %v3768
        %v3771 = vmul.f32 %v3563, %v3768
        %v3772 = vmul.f32 %v3564, %v3768
        %v3773 = vmul.f32 %v3565, %v3768
        %v3774 = vmul.f32 %v3566, %v3768
        %v3775 = vmul.f32 %v3567, %v3768
        %v3776 = vmul.f32 %v3568, %v3768
        %v3777 = vmul.f32 %v3569, %v3768
        %v3778 = vmul.f32 %v3570, %v3768
        %v3779 = vmul.f32 %v3571, %v3768
        %v3780 = vmul.f32 %v3572, %v3768
        %v3781 = vmul.f32 %v3573, %v3768
        %v3782 = vmul.f32 %v3574, %v3768
        %v3783 = vmul.f32 %v3575, %v3768
        %v3784 = vmul.f32 %v3576, %v3768
        %v3785 = vadd.f32 %v3748, %v3769
        %v3786 = vadd.f32 %v3749, %v3770
        %v3787 = vadd.f32 %v3750, %v3771
        %v3788 = vadd.f32 %v3751, %v3772
        %v3789 = vadd.f32 %v3752, %v3773
        %v3790 = vadd.f32 %v3753, %v3774
        %v3791 = vadd.f32 %v3754, %v3775
        %v3792 = vadd.f32 %v3755, %v3776
        %v3793 = vadd.f32 %v3756, %v3777
        %v3794 = vadd.f32 %v3757, %v3778
        %v3795 = vadd.f32 %v3758, %v3779
        %v3796 = vadd.f32 %v3759, %v3780
        %v3797 = vadd.f32 %v3760, %v3781
        %v3798 = vadd.f32 %v3761, %v3782
        %v3799 = vadd.f32 %v3762, %v3783
        %v3800 = vadd.f32 %v3763, %v3784
        %v3801 = vld [vmem:[%s626 + $0x4] sm:$0x1]
        %v3802 = vlaneseq
        %v3803 = vshrl.u32 %v3802, 7
        %v3804 = vsub.s32 0, %v3803
        %v3805 = vrot.slane %v3801, %v3804
        %v3806 = vmul.f32 %v3563, %v3805
        %v3807 = vmul.f32 %v3564, %v3805
        %v3808 = vmul.f32 %v3565, %v3805
        %v3809 = vmul.f32 %v3566, %v3805
        %v3810 = vmul.f32 %v3567, %v3805
        %v3811 = vmul.f32 %v3568, %v3805
        %v3812 = vmul.f32 %v3569, %v3805
        %v3813 = vmul.f32 %v3570, %v3805
        %v3814 = vmul.f32 %v3571, %v3805
        %v3815 = vmul.f32 %v3572, %v3805
        %v3816 = vmul.f32 %v3573, %v3805
        %v3817 = vmul.f32 %v3574, %v3805
        %v3818 = vmul.f32 %v3575, %v3805
        %v3819 = vmul.f32 %v3576, %v3805
        %v3820 = vmul.f32 %v3577, %v3805
        %v3821 = vmul.f32 %v3578, %v3805
        %v3822 = vadd.f32 %v3785, %v3806
        %v3823 = vadd.f32 %v3786, %v3807
        %v3824 = vadd.f32 %v3787, %v3808
        %v3825 = vadd.f32 %v3788, %v3809
        %v3826 = vadd.f32 %v3789, %v3810
        %v3827 = vadd.f32 %v3790, %v3811
        %v3828 = vadd.f32 %v3791, %v3812
        %v3829 = vadd.f32 %v3792, %v3813
        %v3830 = vadd.f32 %v3793, %v3814
        %v3831 = vadd.f32 %v3794, %v3815
        %v3832 = vadd.f32 %v3795, %v3816
        %v3833 = vadd.f32 %v3796, %v3817
        %v3834 = vadd.f32 %v3797, %v3818
        %v3835 = vadd.f32 %v3798, %v3819
        %v3836 = vadd.f32 %v3799, %v3820
        %v3837 = vadd.f32 %v3800, %v3821
        %v3838 = vld [vmem:[%s2402 + $0xa] sm:$0xff]
        %v3839 = vld [vmem:[%s2402 + $0x12] sm:$0xff]
        %v3840 = vld [vmem:[%s2402 + $0x2a] sm:$0xff]
        %v3841 = vld [vmem:[%s2402 + $0x32] sm:$0xff]
        %v3842 = vld [vmem:[%s2402 + $0x4a] sm:$0xff]
        %v3843 = vld [vmem:[%s2402 + $0x52] sm:$0xff]
        %v3844 = vld [vmem:[%s2402 + $0x6a] sm:$0xff]
        %v3845 = vld [vmem:[%s2402 + $0x72] sm:$0xff]
        %v3846 = vld [vmem:[%s2402 + $0x8a] sm:$0xff]
        %v3847 = vld [vmem:[%s2402 + $0x92] sm:$0xff]
        %v3848 = vld [vmem:[%s2402 + $0xaa] sm:$0xff]
        %v3849 = vld [vmem:[%s2402 + $0xb2] sm:$0xff]
        %v3850 = vld [vmem:[%s2402 + $0xca] sm:$0xff]
        %v3851 = vld [vmem:[%s2402 + $0xd2] sm:$0xff]
        %v3852 = vld [vmem:[%s2402 + $0xea] sm:$0xff]
        %v3853 = vld [vmem:[%s2402 + $0xf2] sm:$0xff]
        %v3854 = vld [vmem:[%s2402 + $0x10a] sm:$0xff]
        %v3855 = vld [vmem:[%s2402 + $0x112] sm:$0xff]
        %v3856 = vld [vmem:[%s2402 + $0x12a] sm:$0xff]
        %v3857 = vld [vmem:[%s2402 + $0x132] sm:$0xff]
        %v3858 = vld [vmem:[%s2402 + $0x14a] sm:$0xff]
        %v3859 = vld [vmem:[%s2402 + $0x152] sm:$0xff]
        %v3860 = vld [vmem:[%s2402 + $0x16a] sm:$0xff]
        %v3861 = vld [vmem:[%s2402 + $0x172] sm:$0xff]
        %v3862 = vld [vmem:[%s2402 + $0x18a] sm:$0xff]
        %v3863 = vld [vmem:[%s2402 + $0x192] sm:$0xff]
        %v3864 = vld [vmem:[%s2402 + $0x1aa] sm:$0xff]
        %v3865 = vld [vmem:[%s2402 + $0x1b2] sm:$0xff]
        %v3866 = vld [vmem:[#allocation6 + $0x5] sm:$0x1]
        %v3867 = vlaneseq
        %v3868 = vshrl.u32 %v3867, 7
        %v3869 = vsub.s32 0, %v3868
        %v3870 = vrot.slane %v3866, %v3869
        %v3871 = vmul.f32 %v3838, %v3870
        %v3872 = vmul.f32 %v3839, %v3870
        %v3873 = vmul.f32 %v3840, %v3870
        %v3874 = vmul.f32 %v3841, %v3870
        %v3875 = vmul.f32 %v3842, %v3870
        %v3876 = vmul.f32 %v3843, %v3870
        %v3877 = vmul.f32 %v3844, %v3870
        %v3878 = vmul.f32 %v3845, %v3870
        %v3879 = vmul.f32 %v3846, %v3870
        %v3880 = vmul.f32 %v3847, %v3870
        %v3881 = vmul.f32 %v3848, %v3870
        %v3882 = vmul.f32 %v3849, %v3870
        %v3883 = vmul.f32 %v3850, %v3870
        %v3884 = vmul.f32 %v3851, %v3870
        %v3885 = vmul.f32 %v3852, %v3870
        %v3886 = vmul.f32 %v3853, %v3870
        %v3887 = vadd.f32 %v3822, %v3871
        %v3888 = vadd.f32 %v3823, %v3872
        %v3889 = vadd.f32 %v3824, %v3873
        %v3890 = vadd.f32 %v3825, %v3874
        %v3891 = vadd.f32 %v3826, %v3875
        %v3892 = vadd.f32 %v3827, %v3876
        %v3893 = vadd.f32 %v3828, %v3877
        %v3894 = vadd.f32 %v3829, %v3878
        %v3895 = vadd.f32 %v3830, %v3879
        %v3896 = vadd.f32 %v3831, %v3880
        %v3897 = vadd.f32 %v3832, %v3881
        %v3898 = vadd.f32 %v3833, %v3882
        %v3899 = vadd.f32 %v3834, %v3883
        %v3900 = vadd.f32 %v3835, %v3884
        %v3901 = vadd.f32 %v3836, %v3885
        %v3902 = vadd.f32 %v3837, %v3886
        %v3903 = vld [vmem:[%s436 + $0x5] sm:$0x1]
        %v3904 = vlaneseq
        %v3905 = vshrl.u32 %v3904, 7
        %v3906 = vsub.s32 0, %v3905
        %v3907 = vrot.slane %v3903, %v3906
        %v3908 = vmul.f32 %v3840, %v3907
        %v3909 = vmul.f32 %v3841, %v3907
        %v3910 = vmul.f32 %v3842, %v3907
        %v3911 = vmul.f32 %v3843, %v3907
        %v3912 = vmul.f32 %v3844, %v3907
        %v3913 = vmul.f32 %v3845, %v3907
        %v3914 = vmul.f32 %v3846, %v3907
        %v3915 = vmul.f32 %v3847, %v3907
        %v3916 = vmul.f32 %v3848, %v3907
        %v3917 = vmul.f32 %v3849, %v3907
        %v3918 = vmul.f32 %v3850, %v3907
        %v3919 = vmul.f32 %v3851, %v3907
        %v3920 = vmul.f32 %v3852, %v3907
        %v3921 = vmul.f32 %v3853, %v3907
        %v3922 = vmul.f32 %v3854, %v3907
        %v3923 = vmul.f32 %v3855, %v3907
        %v3924 = vadd.f32 %v3887, %v3908
        %v3925 = vadd.f32 %v3888, %v3909
        %v3926 = vadd.f32 %v3889, %v3910
        %v3927 = vadd.f32 %v3890, %v3911
        %v3928 = vadd.f32 %v3891, %v3912
        %v3929 = vadd.f32 %v3892, %v3913
        %v3930 = vadd.f32 %v3893, %v3914
        %v3931 = vadd.f32 %v3894, %v3915
        %v3932 = vadd.f32 %v3895, %v3916
        %v3933 = vadd.f32 %v3896, %v3917
        %v3934 = vadd.f32 %v3897, %v3918
        %v3935 = vadd.f32 %v3898, %v3919
        %v3936 = vadd.f32 %v3899, %v3920
        %v3937 = vadd.f32 %v3900, %v3921
        %v3938 = vadd.f32 %v3901, %v3922
        %v3939 = vadd.f32 %v3902, %v3923
        %v3940 = vld [vmem:[%s474 + $0x5] sm:$0x1]
        %v3941 = vlaneseq
        %v3942 = vshrl.u32 %v3941, 7
        %v3943 = vsub.s32 0, %v3942
        %v3944 = vrot.slane %v3940, %v3943
        %v3945 = vmul.f32 %v3842, %v3944
        %v3946 = vmul.f32 %v3843, %v3944
        %v3947 = vmul.f32 %v3844, %v3944
        %v3948 = vmul.f32 %v3845, %v3944
        %v3949 = vmul.f32 %v3846, %v3944
        %v3950 = vmul.f32 %v3847, %v3944
        %v3951 = vmul.f32 %v3848, %v3944
        %v3952 = vmul.f32 %v3849, %v3944
        %v3953 = vmul.f32 %v3850, %v3944
        %v3954 = vmul.f32 %v3851, %v3944
        %v3955 = vmul.f32 %v3852, %v3944
        %v3956 = vmul.f32 %v3853, %v3944
        %v3957 = vmul.f32 %v3854, %v3944
        %v3958 = vmul.f32 %v3855, %v3944
        %v3959 = vmul.f32 %v3856, %v3944
        %v3960 = vmul.f32 %v3857, %v3944
        %v3961 = vadd.f32 %v3924, %v3945
        %v3962 = vadd.f32 %v3925, %v3946
        %v3963 = vadd.f32 %v3926, %v3947
        %v3964 = vadd.f32 %v3927, %v3948
        %v3965 = vadd.f32 %v3928, %v3949
        %v3966 = vadd.f32 %v3929, %v3950
        %v3967 = vadd.f32 %v3930, %v3951
        %v3968 = vadd.f32 %v3931, %v3952
        %v3969 = vadd.f32 %v3932, %v3953
        %v3970 = vadd.f32 %v3933, %v3954
        %v3971 = vadd.f32 %v3934, %v3955
        %v3972 = vadd.f32 %v3935, %v3956
        %v3973 = vadd.f32 %v3936, %v3957
        %v3974 = vadd.f32 %v3937, %v3958
        %v3975 = vadd.f32 %v3938, %v3959
        %v3976 = vadd.f32 %v3939, %v3960
        %v3977 = vld [vmem:[%s512 + $0x5] sm:$0x1]
        %v3978 = vlaneseq
        %v3979 = vshrl.u32 %v3978, 7
        %v3980 = vsub.s32 0, %v3979
        %v3981 = vrot.slane %v3977, %v3980
        %v3982 = vmul.f32 %v3844, %v3981
        %v3983 = vmul.f32 %v3845, %v3981
        %v3984 = vmul.f32 %v3846, %v3981
        %v3985 = vmul.f32 %v3847, %v3981
        %v3986 = vmul.f32 %v3848, %v3981
        %v3987 = vmul.f32 %v3849, %v3981
        %v3988 = vmul.f32 %v3850, %v3981
        %v3989 = vmul.f32 %v3851, %v3981
        %v3990 = vmul.f32 %v3852, %v3981
        %v3991 = vmul.f32 %v3853, %v3981
        %v3992 = vmul.f32 %v3854, %v3981
        %v3993 = vmul.f32 %v3855, %v3981
        %v3994 = vmul.f32 %v3856, %v3981
        %v3995 = vmul.f32 %v3857, %v3981
        %v3996 = vmul.f32 %v3858, %v3981
        %v3997 = vmul.f32 %v3859, %v3981
        %v3998 = vadd.f32 %v3961, %v3982
        %v3999 = vadd.f32 %v3962, %v3983
        %v4000 = vadd.f32 %v3963, %v3984
        %v4001 = vadd.f32 %v3964, %v3985
        %v4002 = vadd.f32 %v3965, %v3986
        %v4003 = vadd.f32 %v3966, %v3987
        %v4004 = vadd.f32 %v3967, %v3988
        %v4005 = vadd.f32 %v3968, %v3989
        %v4006 = vadd.f32 %v3969, %v3990
        %v4007 = vadd.f32 %v3970, %v3991
        %v4008 = vadd.f32 %v3971, %v3992
        %v4009 = vadd.f32 %v3972, %v3993
        %v4010 = vadd.f32 %v3973, %v3994
        %v4011 = vadd.f32 %v3974, %v3995
        %v4012 = vadd.f32 %v3975, %v3996
        %v4013 = vadd.f32 %v3976, %v3997
        %v4014 = vld [vmem:[%s550 + $0x5] sm:$0x1]
        %v4015 = vlaneseq
        %v4016 = vshrl.u32 %v4015, 7
        %v4017 = vsub.s32 0, %v4016
        %v4018 = vrot.slane %v4014, %v4017
        %v4019 = vmul.f32 %v3846, %v4018
        %v4020 = vmul.f32 %v3847, %v4018
        %v4021 = vmul.f32 %v3848, %v4018
        %v4022 = vmul.f32 %v3849, %v4018
        %v4023 = vmul.f32 %v3850, %v4018
        %v4024 = vmul.f32 %v3851, %v4018
        %v4025 = vmul.f32 %v3852, %v4018
        %v4026 = vmul.f32 %v3853, %v4018
        %v4027 = vmul.f32 %v3854, %v4018
        %v4028 = vmul.f32 %v3855, %v4018
        %v4029 = vmul.f32 %v3856, %v4018
        %v4030 = vmul.f32 %v3857, %v4018
        %v4031 = vmul.f32 %v3858, %v4018
        %v4032 = vmul.f32 %v3859, %v4018
        %v4033 = vmul.f32 %v3860, %v4018
        %v4034 = vmul.f32 %v3861, %v4018
        %v4035 = vadd.f32 %v3998, %v4019
        %v4036 = vadd.f32 %v3999, %v4020
        %v4037 = vadd.f32 %v4000, %v4021
        %v4038 = vadd.f32 %v4001, %v4022
        %v4039 = vadd.f32 %v4002, %v4023
        %v4040 = vadd.f32 %v4003, %v4024
        %v4041 = vadd.f32 %v4004, %v4025
        %v4042 = vadd.f32 %v4005, %v4026
        %v4043 = vadd.f32 %v4006, %v4027
        %v4044 = vadd.f32 %v4007, %v4028
        %v4045 = vadd.f32 %v4008, %v4029
        %v4046 = vadd.f32 %v4009, %v4030
        %v4047 = vadd.f32 %v4010, %v4031
        %v4048 = vadd.f32 %v4011, %v4032
        %v4049 = vadd.f32 %v4012, %v4033
        %v4050 = vadd.f32 %v4013, %v4034
        %v4051 = vld [vmem:[%s588 + $0x5] sm:$0x1]
        %v4052 = vlaneseq
        %v4053 = vshrl.u32 %v4052, 7
        %v4054 = vsub.s32 0, %v4053
        %v4055 = vrot.slane %v4051, %v4054
        %v4056 = vmul.f32 %v3848, %v4055
        %v4057 = vmul.f32 %v3849, %v4055
        %v4058 = vmul.f32 %v3850, %v4055
        %v4059 = vmul.f32 %v3851, %v4055
        %v4060 = vmul.f32 %v3852, %v4055
        %v4061 = vmul.f32 %v3853, %v4055
        %v4062 = vmul.f32 %v3854, %v4055
        %v4063 = vmul.f32 %v3855, %v4055
        %v4064 = vmul.f32 %v3856, %v4055
        %v4065 = vmul.f32 %v3857, %v4055
        %v4066 = vmul.f32 %v3858, %v4055
        %v4067 = vmul.f32 %v3859, %v4055
        %v4068 = vmul.f32 %v3860, %v4055
        %v4069 = vmul.f32 %v3861, %v4055
        %v4070 = vmul.f32 %v3862, %v4055
        %v4071 = vmul.f32 %v3863, %v4055
        %v4072 = vadd.f32 %v4035, %v4056
        %v4073 = vadd.f32 %v4036, %v4057
        %v4074 = vadd.f32 %v4037, %v4058
        %v4075 = vadd.f32 %v4038, %v4059
        %v4076 = vadd.f32 %v4039, %v4060
        %v4077 = vadd.f32 %v4040, %v4061
        %v4078 = vadd.f32 %v4041, %v4062
        %v4079 = vadd.f32 %v4042, %v4063
        %v4080 = vadd.f32 %v4043, %v4064
        %v4081 = vadd.f32 %v4044, %v4065
        %v4082 = vadd.f32 %v4045, %v4066
        %v4083 = vadd.f32 %v4046, %v4067
        %v4084 = vadd.f32 %v4047, %v4068
        %v4085 = vadd.f32 %v4048, %v4069
        %v4086 = vadd.f32 %v4049, %v4070
        %v4087 = vadd.f32 %v4050, %v4071
        %v4088 = vld [vmem:[%s626 + $0x5] sm:$0x1]
        %v4089 = vlaneseq
        %v4090 = vshrl.u32 %v4089, 7
        %v4091 = vsub.s32 0, %v4090
        %v4092 = vrot.slane %v4088, %v4091
        %v4093 = vmul.f32 %v3850, %v4092
        %v4094 = vmul.f32 %v3851, %v4092
        %v4095 = vmul.f32 %v3852, %v4092
        %v4096 = vmul.f32 %v3853, %v4092
        %v4097 = vmul.f32 %v3854, %v4092
        %v4098 = vmul.f32 %v3855, %v4092
        %v4099 = vmul.f32 %v3856, %v4092
        %v4100 = vmul.f32 %v3857, %v4092
        %v4101 = vmul.f32 %v3858, %v4092
        %v4102 = vmul.f32 %v3859, %v4092
        %v4103 = vmul.f32 %v3860, %v4092
        %v4104 = vmul.f32 %v3861, %v4092
        %v4105 = vmul.f32 %v3862, %v4092
        %v4106 = vmul.f32 %v3863, %v4092
        %v4107 = vmul.f32 %v3864, %v4092
        %v4108 = vmul.f32 %v3865, %v4092
        %v4109 = vadd.f32 %v4072, %v4093
        %v4110 = vadd.f32 %v4073, %v4094
        %v4111 = vadd.f32 %v4074, %v4095
        %v4112 = vadd.f32 %v4075, %v4096
        %v4113 = vadd.f32 %v4076, %v4097
        %v4114 = vadd.f32 %v4077, %v4098
        %v4115 = vadd.f32 %v4078, %v4099
        %v4116 = vadd.f32 %v4079, %v4100
        %v4117 = vadd.f32 %v4080, %v4101
        %v4118 = vadd.f32 %v4081, %v4102
        %v4119 = vadd.f32 %v4082, %v4103
        %v4120 = vadd.f32 %v4083, %v4104
        %v4121 = vadd.f32 %v4084, %v4105
        %v4122 = vadd.f32 %v4085, %v4106
        %v4123 = vadd.f32 %v4086, %v4107
        %v4124 = vadd.f32 %v4087, %v4108
        %v4125 = vld [vmem:[%s2402 + $0xb] sm:$0xff]
        %v4126 = vld [vmem:[%s2402 + $0x13] sm:$0xff]
        %v4127 = vld [vmem:[%s2402 + $0x2b] sm:$0xff]
        %v4128 = vld [vmem:[%s2402 + $0x33] sm:$0xff]
        %v4129 = vld [vmem:[%s2402 + $0x4b] sm:$0xff]
        %v4130 = vld [vmem:[%s2402 + $0x53] sm:$0xff]
        %v4131 = vld [vmem:[%s2402 + $0x6b] sm:$0xff]
        %v4132 = vld [vmem:[%s2402 + $0x73] sm:$0xff]
        %v4133 = vld [vmem:[%s2402 + $0x8b] sm:$0xff]
        %v4134 = vld [vmem:[%s2402 + $0x93] sm:$0xff]
        %v4135 = vld [vmem:[%s2402 + $0xab] sm:$0xff]
        %v4136 = vld [vmem:[%s2402 + $0xb3] sm:$0xff]
        %v4137 = vld [vmem:[%s2402 + $0xcb] sm:$0xff]
        %v4138 = vld [vmem:[%s2402 + $0xd3] sm:$0xff]
        %v4139 = vld [vmem:[%s2402 + $0xeb] sm:$0xff]
        %v4140 = vld [vmem:[%s2402 + $0xf3] sm:$0xff]
        %v4141 = vld [vmem:[%s2402 + $0x10b] sm:$0xff]
        %v4142 = vld [vmem:[%s2402 + $0x113] sm:$0xff]
        %v4143 = vld [vmem:[%s2402 + $0x12b] sm:$0xff]
        %v4144 = vld [vmem:[%s2402 + $0x133] sm:$0xff]
        %v4145 = vld [vmem:[%s2402 + $0x14b] sm:$0xff]
        %v4146 = vld [vmem:[%s2402 + $0x153] sm:$0xff]
        %v4147 = vld [vmem:[%s2402 + $0x16b] sm:$0xff]
        %v4148 = vld [vmem:[%s2402 + $0x173] sm:$0xff]
        %v4149 = vld [vmem:[%s2402 + $0x18b] sm:$0xff]
        %v4150 = vld [vmem:[%s2402 + $0x193] sm:$0xff]
        %v4151 = vld [vmem:[%s2402 + $0x1ab] sm:$0xff]
        %v4152 = vld [vmem:[%s2402 + $0x1b3] sm:$0xff]
        %v4153 = vld [vmem:[#allocation6 + $0x6] sm:$0x1]
        %v4154 = vlaneseq
        %v4155 = vshrl.u32 %v4154, 7
        %v4156 = vsub.s32 0, %v4155
        %v4157 = vrot.slane %v4153, %v4156
        %v4158 = vmul.f32 %v4125, %v4157
        %v4159 = vmul.f32 %v4126, %v4157
        %v4160 = vmul.f32 %v4127, %v4157
        %v4161 = vmul.f32 %v4128, %v4157
        %v4162 = vmul.f32 %v4129, %v4157
        %v4163 = vmul.f32 %v4130, %v4157
        %v4164 = vmul.f32 %v4131, %v4157
        %v4165 = vmul.f32 %v4132, %v4157
        %v4166 = vmul.f32 %v4133, %v4157
        %v4167 = vmul.f32 %v4134, %v4157
        %v4168 = vmul.f32 %v4135, %v4157
        %v4169 = vmul.f32 %v4136, %v4157
        %v4170 = vmul.f32 %v4137, %v4157
        %v4171 = vmul.f32 %v4138, %v4157
        %v4172 = vmul.f32 %v4139, %v4157
        %v4173 = vmul.f32 %v4140, %v4157
        %v4174 = vadd.f32 %v4109, %v4158
        %v4175 = vadd.f32 %v4110, %v4159
        %v4176 = vadd.f32 %v4111, %v4160
        %v4177 = vadd.f32 %v4112, %v4161
        %v4178 = vadd.f32 %v4113, %v4162
        %v4179 = vadd.f32 %v4114, %v4163
        %v4180 = vadd.f32 %v4115, %v4164
        %v4181 = vadd.f32 %v4116, %v4165
        %v4182 = vadd.f32 %v4117, %v4166
        %v4183 = vadd.f32 %v4118, %v4167
        %v4184 = vadd.f32 %v4119, %v4168
        %v4185 = vadd.f32 %v4120, %v4169
        %v4186 = vadd.f32 %v4121, %v4170
        %v4187 = vadd.f32 %v4122, %v4171
        %v4188 = vadd.f32 %v4123, %v4172
        %v4189 = vadd.f32 %v4124, %v4173
        %v4190 = vld [vmem:[%s436 + $0x6] sm:$0x1]
        %v4191 = vlaneseq
        %v4192 = vshrl.u32 %v4191, 7
        %v4193 = vsub.s32 0, %v4192
        %v4194 = vrot.slane %v4190, %v4193
        %v4195 = vmul.f32 %v4127, %v4194
        %v4196 = vmul.f32 %v4128, %v4194
        %v4197 = vmul.f32 %v4129, %v4194
        %v4198 = vmul.f32 %v4130, %v4194
        %v4199 = vmul.f32 %v4131, %v4194
        %v4200 = vmul.f32 %v4132, %v4194
        %v4201 = vmul.f32 %v4133, %v4194
        %v4202 = vmul.f32 %v4134, %v4194
        %v4203 = vmul.f32 %v4135, %v4194
        %v4204 = vmul.f32 %v4136, %v4194
        %v4205 = vmul.f32 %v4137, %v4194
        %v4206 = vmul.f32 %v4138, %v4194
        %v4207 = vmul.f32 %v4139, %v4194
        %v4208 = vmul.f32 %v4140, %v4194
        %v4209 = vmul.f32 %v4141, %v4194
        %v4210 = vmul.f32 %v4142, %v4194
        %v4211 = vadd.f32 %v4174, %v4195
        %v4212 = vadd.f32 %v4175, %v4196
        %v4213 = vadd.f32 %v4176, %v4197
        %v4214 = vadd.f32 %v4177, %v4198
        %v4215 = vadd.f32 %v4178, %v4199
        %v4216 = vadd.f32 %v4179, %v4200
        %v4217 = vadd.f32 %v4180, %v4201
        %v4218 = vadd.f32 %v4181, %v4202
        %v4219 = vadd.f32 %v4182, %v4203
        %v4220 = vadd.f32 %v4183, %v4204
        %v4221 = vadd.f32 %v4184, %v4205
        %v4222 = vadd.f32 %v4185, %v4206
        %v4223 = vadd.f32 %v4186, %v4207
        %v4224 = vadd.f32 %v4187, %v4208
        %v4225 = vadd.f32 %v4188, %v4209
        %v4226 = vadd.f32 %v4189, %v4210
        %v4227 = vld [vmem:[%s474 + $0x6] sm:$0x1]
        %v4228 = vlaneseq
        %v4229 = vshrl.u32 %v4228, 7
        %v4230 = vsub.s32 0, %v4229
        %v4231 = vrot.slane %v4227, %v4230
        %v4232 = vmul.f32 %v4129, %v4231
        %v4233 = vmul.f32 %v4130, %v4231
        %v4234 = vmul.f32 %v4131, %v4231
        %v4235 = vmul.f32 %v4132, %v4231
        %v4236 = vmul.f32 %v4133, %v4231
        %v4237 = vmul.f32 %v4134, %v4231
        %v4238 = vmul.f32 %v4135, %v4231
        %v4239 = vmul.f32 %v4136, %v4231
        %v4240 = vmul.f32 %v4137, %v4231
        %v4241 = vmul.f32 %v4138, %v4231
        %v4242 = vmul.f32 %v4139, %v4231
        %v4243 = vmul.f32 %v4140, %v4231
        %v4244 = vmul.f32 %v4141, %v4231
        %v4245 = vmul.f32 %v4142, %v4231
        %v4246 = vmul.f32 %v4143, %v4231
        %v4247 = vmul.f32 %v4144, %v4231
        %v4248 = vadd.f32 %v4211, %v4232
        %v4249 = vadd.f32 %v4212, %v4233
        %v4250 = vadd.f32 %v4213, %v4234
        %v4251 = vadd.f32 %v4214, %v4235
        %v4252 = vadd.f32 %v4215, %v4236
        %v4253 = vadd.f32 %v4216, %v4237
        %v4254 = vadd.f32 %v4217, %v4238
        %v4255 = vadd.f32 %v4218, %v4239
        %v4256 = vadd.f32 %v4219, %v4240
        %v4257 = vadd.f32 %v4220, %v4241
        %v4258 = vadd.f32 %v4221, %v4242
        %v4259 = vadd.f32 %v4222, %v4243
        %v4260 = vadd.f32 %v4223, %v4244
        %v4261 = vadd.f32 %v4224, %v4245
        %v4262 = vadd.f32 %v4225, %v4246
        %v4263 = vadd.f32 %v4226, %v4247
        %v4264 = vld [vmem:[%s512 + $0x6] sm:$0x1]
        %v4265 = vlaneseq
        %v4266 = vshrl.u32 %v4265, 7
        %v4267 = vsub.s32 0, %v4266
        %v4268 = vrot.slane %v4264, %v4267
        %v4269 = vmul.f32 %v4131, %v4268
        %v4270 = vmul.f32 %v4132, %v4268
        %v4271 = vmul.f32 %v4133, %v4268
        %v4272 = vmul.f32 %v4134, %v4268
        %v4273 = vmul.f32 %v4135, %v4268
        %v4274 = vmul.f32 %v4136, %v4268
        %v4275 = vmul.f32 %v4137, %v4268
        %v4276 = vmul.f32 %v4138, %v4268
        %v4277 = vmul.f32 %v4139, %v4268
        %v4278 = vmul.f32 %v4140, %v4268
        %v4279 = vmul.f32 %v4141, %v4268
        %v4280 = vmul.f32 %v4142, %v4268
        %v4281 = vmul.f32 %v4143, %v4268
        %v4282 = vmul.f32 %v4144, %v4268
        %v4283 = vmul.f32 %v4145, %v4268
        %v4284 = vmul.f32 %v4146, %v4268
        %v4285 = vadd.f32 %v4248, %v4269
        %v4286 = vadd.f32 %v4249, %v4270
        %v4287 = vadd.f32 %v4250, %v4271
        %v4288 = vadd.f32 %v4251, %v4272
        %v4289 = vadd.f32 %v4252, %v4273
        %v4290 = vadd.f32 %v4253, %v4274
        %v4291 = vadd.f32 %v4254, %v4275
        %v4292 = vadd.f32 %v4255, %v4276
        %v4293 = vadd.f32 %v4256, %v4277
        %v4294 = vadd.f32 %v4257, %v4278
        %v4295 = vadd.f32 %v4258, %v4279
        %v4296 = vadd.f32 %v4259, %v4280
        %v4297 = vadd.f32 %v4260, %v4281
        %v4298 = vadd.f32 %v4261, %v4282
        %v4299 = vadd.f32 %v4262, %v4283
        %v4300 = vadd.f32 %v4263, %v4284
        %v4301 = vld [vmem:[%s550 + $0x6] sm:$0x1]
        %v4302 = vlaneseq
        %v4303 = vshrl.u32 %v4302, 7
        %v4304 = vsub.s32 0, %v4303
        %v4305 = vrot.slane %v4301, %v4304
        %v4306 = vmul.f32 %v4133, %v4305
        %v4307 = vmul.f32 %v4134, %v4305
        %v4308 = vmul.f32 %v4135, %v4305
        %v4309 = vmul.f32 %v4136, %v4305
        %v4310 = vmul.f32 %v4137, %v4305
        %v4311 = vmul.f32 %v4138, %v4305
        %v4312 = vmul.f32 %v4139, %v4305
        %v4313 = vmul.f32 %v4140, %v4305
        %v4314 = vmul.f32 %v4141, %v4305
        %v4315 = vmul.f32 %v4142, %v4305
        %v4316 = vmul.f32 %v4143, %v4305
        %v4317 = vmul.f32 %v4144, %v4305
        %v4318 = vmul.f32 %v4145, %v4305
        %v4319 = vmul.f32 %v4146, %v4305
        %v4320 = vmul.f32 %v4147, %v4305
        %v4321 = vmul.f32 %v4148, %v4305
        %v4322 = vadd.f32 %v4285, %v4306
        %v4323 = vadd.f32 %v4286, %v4307
        %v4324 = vadd.f32 %v4287, %v4308
        %v4325 = vadd.f32 %v4288, %v4309
        %v4326 = vadd.f32 %v4289, %v4310
        %v4327 = vadd.f32 %v4290, %v4311
        %v4328 = vadd.f32 %v4291, %v4312
        %v4329 = vadd.f32 %v4292, %v4313
        %v4330 = vadd.f32 %v4293, %v4314
        %v4331 = vadd.f32 %v4294, %v4315
        %v4332 = vadd.f32 %v4295, %v4316
        %v4333 = vadd.f32 %v4296, %v4317
        %v4334 = vadd.f32 %v4297, %v4318
        %v4335 = vadd.f32 %v4298, %v4319
        %v4336 = vadd.f32 %v4299, %v4320
        %v4337 = vadd.f32 %v4300, %v4321
        %v4338 = vld [vmem:[%s588 + $0x6] sm:$0x1]
        %v4339 = vlaneseq
        %v4340 = vshrl.u32 %v4339, 7
        %v4341 = vsub.s32 0, %v4340
        %v4342 = vrot.slane %v4338, %v4341
        %v4343 = vmul.f32 %v4135, %v4342
        %v4344 = vmul.f32 %v4136, %v4342
        %v4345 = vmul.f32 %v4137, %v4342
        %v4346 = vmul.f32 %v4138, %v4342
        %v4347 = vmul.f32 %v4139, %v4342
        %v4348 = vmul.f32 %v4140, %v4342
        %v4349 = vmul.f32 %v4141, %v4342
        %v4350 = vmul.f32 %v4142, %v4342
        %v4351 = vmul.f32 %v4143, %v4342
        %v4352 = vmul.f32 %v4144, %v4342
        %v4353 = vmul.f32 %v4145, %v4342
        %v4354 = vmul.f32 %v4146, %v4342
        %v4355 = vmul.f32 %v4147, %v4342
        %v4356 = vmul.f32 %v4148, %v4342
        %v4357 = vmul.f32 %v4149, %v4342
        %v4358 = vmul.f32 %v4150, %v4342
        %v4359 = vadd.f32 %v4322, %v4343
        %v4360 = vadd.f32 %v4323, %v4344
        %v4361 = vadd.f32 %v4324, %v4345
        %v4362 = vadd.f32 %v4325, %v4346
        %v4363 = vadd.f32 %v4326, %v4347
        %v4364 = vadd.f32 %v4327, %v4348
        %v4365 = vadd.f32 %v4328, %v4349
        %v4366 = vadd.f32 %v4329, %v4350
        %v4367 = vadd.f32 %v4330, %v4351
        %v4368 = vadd.f32 %v4331, %v4352
        %v4369 = vadd.f32 %v4332, %v4353
        %v4370 = vadd.f32 %v4333, %v4354
        %v4371 = vadd.f32 %v4334, %v4355
        %v4372 = vadd.f32 %v4335, %v4356
        %v4373 = vadd.f32 %v4336, %v4357
        %v4374 = vadd.f32 %v4337, %v4358
        %v4375 = vld [vmem:[%s626 + $0x6] sm:$0x1]
        %v4376 = vlaneseq
        %v4377 = vshrl.u32 %v4376, 7
        %v4378 = vsub.s32 0, %v4377
        %v4379 = vrot.slane %v4375, %v4378
        %v4380 = vmul.f32 %v4137, %v4379
        %v4381 = vmul.f32 %v4138, %v4379
        %v4382 = vmul.f32 %v4139, %v4379
        %v4383 = vmul.f32 %v4140, %v4379
        %v4384 = vmul.f32 %v4141, %v4379
        %v4385 = vmul.f32 %v4142, %v4379
        %v4386 = vmul.f32 %v4143, %v4379
        %v4387 = vmul.f32 %v4144, %v4379
        %v4388 = vmul.f32 %v4145, %v4379
        %v4389 = vmul.f32 %v4146, %v4379
        %v4390 = vmul.f32 %v4147, %v4379
        %v4391 = vmul.f32 %v4148, %v4379
        %v4392 = vmul.f32 %v4149, %v4379
        %v4393 = vmul.f32 %v4150, %v4379
        %v4394 = vmul.f32 %v4151, %v4379
        %v4395 = vmul.f32 %v4152, %v4379
        %v4396 = vadd.f32 %v4359, %v4380
        %v4397 = vadd.f32 %v4360, %v4381
        %v4398 = vadd.f32 %v4361, %v4382
        %v4399 = vadd.f32 %v4362, %v4383
        %v4400 = vadd.f32 %v4363, %v4384
        %v4401 = vadd.f32 %v4364, %v4385
        %v4402 = vadd.f32 %v4365, %v4386
        %v4403 = vadd.f32 %v4366, %v4387
        %v4404 = vadd.f32 %v4367, %v4388
        %v4405 = vadd.f32 %v4368, %v4389
        %v4406 = vadd.f32 %v4369, %v4390
        %v4407 = vadd.f32 %v4370, %v4391
        %v4408 = vadd.f32 %v4371, %v4392
        %v4409 = vadd.f32 %v4372, %v4393
        %v4410 = vadd.f32 %v4373, %v4394
        %v4411 = vadd.f32 %v4374, %v4395
        %s4412 = scalar_lea.vmem %s238, 128 [#allocation8]
        %4413 = vst [vmem:[%s4412] sm:$0xff] %v4396
        %4414 = vst [vmem:[%s4412 + $0x8] sm:$0xff] %v4397
        %4415 = vst [vmem:[%s4412 + $0x10] sm:$0xff] %v4398
        %4416 = vst [vmem:[%s4412 + $0x18] sm:$0xff] %v4399
        %4417 = vst [vmem:[%s4412 + $0x20] sm:$0xff] %v4400
        %4418 = vst [vmem:[%s4412 + $0x28] sm:$0xff] %v4401
        %4419 = vst [vmem:[%s4412 + $0x30] sm:$0xff] %v4402
        %4420 = vst [vmem:[%s4412 + $0x38] sm:$0xff] %v4403
        %4421 = vst [vmem:[%s4412 + $0x40] sm:$0xff] %v4404
        %4422 = vst [vmem:[%s4412 + $0x48] sm:$0xff] %v4405
        %4423 = vst [vmem:[%s4412 + $0x50] sm:$0xff] %v4406
        %4424 = vst [vmem:[%s4412 + $0x58] sm:$0xff] %v4407
        %4425 = vst [vmem:[%s4412 + $0x60] sm:$0xff] %v4408
        %4426 = vst [vmem:[%s4412 + $0x68] sm:$0xff] %v4409
        %4427 = vst [vmem:[%s4412 + $0x70] sm:$0xff] %v4410
        %4428 = vst [vmem:[%s4412 + $0x78] sm:$0xff] %v4411
        %s4429 = sand.u32 %s123, 1
        %s4430 = scalar_lea.sflag [#allocation5], %s4429
        %s4431 = sand.u32 %s123, 1
        %s4432 = smul.addr %s4431, 256
        %s4433 = scalar_lea.vmem [#allocation8], %s4432
        // Predicated region
        $region41: #{tpu_custom_call.1} parent=31 // pred_check
          %p4434 = pneg %p133
        $region42: #{tpu_custom_call.1} parent=31 // pred_check_branch
          %4436 = sbr.rel (%p4434) target = $region44
        $region43: #{tpu_custom_call.1} parent=31 // pred_region
          %s4438 = ssub.s32 4096, 4096
          %4439 = vsyncadd %s4430, %s4438
          %s4440 = smul.addr %s25, 32
          %s4441 = sadd.s32 %s26, %s4440
          %s4442 = smul.addr %s4441, 128
          %s4443 = scalar_lea.hbm %s3, %s4442
          %s4444 = sshll.u32 %s4433, 4
          %s4445 = int_to_ptr.vmem [resolvable:$true] %s4444
          %4450 = dma.vmem_to_hbm [thread:$0]  %s4445, 4096, %s4443, %s4430, 128, 128, 8
        $region44: #{tpu_custom_call.1} parent=31 // pred_fallthru
          _
      $region32: #{tpu_custom_call.1} parent=5 // pred_fallthru
        _
      %p4451 = scmp.le.s32.totalorder 2, %s16
      // Predicated region
      $region45: #{tpu_custom_call.1} parent=5 // pred_check
        %p4452 = pneg %p4451
      $region46: #{tpu_custom_call.1} parent=5 // pred_check_branch
        %4454 = sbr.rel (%p4452) target = $region48
      $region47: #{tpu_custom_call.1} parent=5 // pred_region
        %s4455 = ssub.s32 %s16, 2
        // Predicated region
        $region49: #{tpu_custom_call.1} parent=47 // pred_check
          %p4456 = pneg %p139
        $region50: #{tpu_custom_call.1} parent=47 // pred_check_branch
          %4458 = sbr.rel (%p4456) target = $region52
        $region51: #{tpu_custom_call.1} parent=47 // pred_region
          %s4459 = sand.u32 %s124, 1
          %s4460 = scalar_lea.sflag [#allocation5], %s4459
          %s4461 = sand.u32 %s124, 1
          %s4462 = smul.addr %s4461, 256
          %s4463 = scalar_lea.vmem [#allocation8], %s4462
          %4464 = dma.done %s4460, 4096
        $region52: #{tpu_custom_call.1} parent=47 // pred_fallthru
          _
      $region48: #{tpu_custom_call.1} parent=5 // pred_fallthru
        _
    $region6: #{tpu_custom_call.1} parent=1 // loop_footer
      %s20 = sadd.s32 1, %s16
    $region7: #{tpu_custom_call.1} parent=1 // loop_footer_branch
      %15 = sbr.rel target = $region3
    $region8: #{tpu_custom_call.1} parent=1 // loop_exit
      _
    %4465 = vsyncpa [#allocation4], 1
    %s4466 = scalar_lea.sflag [#allocation4], 1
    %4467 = vsyncpa %s4466, 1
    %4468 = vsyncpa [#allocation7], 1
    %4469 = vsyncpa [#allocation5], 1
    %s4470 = scalar_lea.sflag [#allocation5], 1
    %4471 = vsyncpa %s4470, 1

</llo_original>
